<compile_context>
chip_gen: v5e
topology: v5e:2x2
jax: 0.10.0
libtpu: 0.0.40
codegen_flags: <defaults>
</compile_context>

<pallas_src>
import jax
import jax.numpy as jnp
from jax import lax
from jax.experimental import pallas as pl
from jax.experimental.pallas import tpu as pltpu

_CP = 128  # lane-padded channel width (requires in_channels <= 128)


def _make_resblock_kernel(Mp, pair_deltas):
    """Mp: per-image row count (padded to a multiple of 32).
    pair_deltas: 4 pairs of flattened tap offsets for conv2 (center tap = 0
    is handled separately, no roll needed)."""

    def kernel(im_ref, w1_ref, w2p_ref, w2c_ref, b2_ref, xr_ref, o_ref):
        # ---- conv1 + BN1 bias + ReLU: ONE K=128 bf16 matmul (f32 accum).
        # The 9 taps are pre-stacked along K by the wrapper; the bias rides in
        # the augmented "ones * interior-mask" K column, so border rows are
        # exactly 0 after ReLU (== the zero padding conv2 must see).
        h = jnp.dot(im_ref[...], w1_ref[...], preferred_element_type=jnp.float32)
        mid = jnp.maximum(h, 0.0)                                 # (Mp, 128) f32

        # ---- conv2: center tap (K=128) + 4 tap-pairs fused along K to 256.
        # Shifts are sublane rolls of the operand BEFORE the matmul (XLU slot),
        # matmuls are bf16 with f32 accumulation, and the accumulation is a
        # value-level sum -- no per-tap VMEM read-modify-write.
        acc = jnp.dot(mid.astype(jnp.bfloat16), w2c_ref[...],
                      preferred_element_type=jnp.float32)
        for k, (da, db) in enumerate(pair_deltas):
            ra = pltpu.roll(mid, (-da) % Mp, axis=0).astype(jnp.bfloat16)
            rb = pltpu.roll(mid, (-db) % Mp, axis=0).astype(jnp.bfloat16)
            acc = acc + jnp.dot(jnp.concatenate([ra, rb], axis=-1), w2p_ref[k],
                                preferred_element_type=jnp.float32)

        # ---- BN2 bias + residual: single full-width, lane-dense f32 store.
        o_ref[...] = acc + b2_ref[...] + xr_ref[...]

    return kernel


def resblock_pallas(x_nchw, w1_hwio, b1, w2_hwio, b2):
    """x_nchw: (N, C, H, W) f32.  w*: (3,3,C,C) HWIO (BN folded).  b*: (C,)."""
    N, C, H, W = x_nchw.shape
    Cp = _CP
    assert C <= Cp, "ResBlock kernel assumes in_channels <= 128"
    assert w1_hwio.shape == (3, 3, C, C) and w2_hwio.shape == (3, 3, C, C)

    Hp2, Wp2 = H + 2, W + 2
    M_img = Hp2 * Wp2                       # flattened padded-image positions
    Mp = -(-M_img // 32) * 32               # row-pad: tile-aligned for f32/bf16
    K1 = 9 * C + 1                          # 9 stacked taps + bias column
    K1p = -(-K1 // 128) * 128

    # Layout prep in XLA (cheap, fuses): NCHW -> NHWC, spatial zero-pad.
    x_nhwc = jnp.transpose(x_nchw, (0, 2, 3, 1)).astype(jnp.float32)
    x_pad1 = jnp.pad(x_nhwc, ((0, 0), (1, 1), (1, 1), (0, 0)))   # (N,Hp2,Wp2,C)

    # Residual path: lane-pad channels to 128, row-pad to Mp (added directly
    # in-kernel; replaces the old identity matmul).
    xr = jnp.pad(x_pad1.reshape(N, M_img, C),
                 ((0, 0), (0, Mp - M_img), (0, Cp - C)))          # f32

    # conv1 im2col: 9 shifted views of the double-padded image stacked along
    # K, border rows zeroed, plus a "ones" column that carries the BN1 bias.
    x_pad2 = jnp.pad(x_nhwc, ((0, 0), (2, 2), (2, 2), (0, 0)))
    patches = jnp.stack([x_pad2[:, dy:dy + Hp2, dx:dx + Wp2, :]
                         for dy in range(3) for dx in range(3)], axis=3)
    patches = patches.reshape(N, M_img, 9 * C)
    interior = jnp.pad(jnp.ones((H, W), jnp.float32),
                       ((1, 1), (1, 1))).reshape(1, M_img, 1)
    im2col = jnp.concatenate(
        [patches * interior, jnp.broadcast_to(interior, (N, M_img, 1))], axis=-1)
    im2col = jnp.pad(im2col, ((0, 0), (0, Mp - M_img), (0, K1p - K1))
                     ).astype(jnp.bfloat16)

    # conv1 weight: (tap, cin) stacked along K, folded BN1 bias as row K1-1,
    # output channels lane-padded to 128.
    w1_aug = jnp.concatenate([w1_hwio.reshape(9 * C, C), b1.reshape(1, C)],
                             axis=0)
    w1_aug = jnp.pad(w1_aug, ((0, K1p - K1), (0, Cp - C))).astype(jnp.bfloat16)

    # conv2 weights: per-tap 128x128, taps paired along K (=256) for the
    # 256-deep MXU; tap 4 (center) stays alone (no roll needed).
    w2_taps = jnp.pad(w2_hwio.reshape(9, C, C),
                      ((0, 0), (0, Cp - C), (0, Cp - C))).astype(jnp.bfloat16)
    pairs = ((0, 1), (2, 3), (5, 6), (7, 8))
    w2_pairs = jnp.stack([jnp.concatenate([w2_taps[a], w2_taps[b]], axis=0)
                          for a, b in pairs])                     # (4, 256, 128)
    w2_center = w2_taps[4]                                        # (128, 128)
    b2p = jnp.pad(b2, (0, Cp - C)).reshape(1, Cp).astype(jnp.float32)

    deltas = [(t // 3 - 1) * Wp2 + (t % 3 - 1) for t in range(9)]
    pair_deltas = tuple((deltas[a], deltas[b]) for a, b in pairs)

    kernel = _make_resblock_kernel(Mp, pair_deltas)
    out = pl.pallas_call(
        kernel,
        out_shape=jax.ShapeDtypeStruct((N, Mp, Cp), jnp.float32),
        grid_spec=pltpu.PrefetchScalarGridSpec(
            num_scalar_prefetch=0,
            grid=(N,),                            # one padded image per step
            in_specs=[
                pl.BlockSpec((None, Mp, K1p), lambda n: (n, 0, 0)),  # im2col
                pl.BlockSpec((K1p, Cp), lambda n: (0, 0)),           # w1 (+b1)
                pl.BlockSpec((4, 2 * Cp, Cp), lambda n: (0, 0, 0)),  # w2 pairs
                pl.BlockSpec((Cp, Cp), lambda n: (0, 0)),            # w2 center
                pl.BlockSpec((1, Cp), lambda n: (0, 0)),             # b2
                pl.BlockSpec((None, Mp, Cp), lambda n: (n, 0, 0)),   # residual x
            ],
            out_specs=pl.BlockSpec((None, Mp, Cp), lambda n: (n, 0, 0)),
        ),
        compiler_params=pltpu.CompilerParams(
            dimension_semantics=("parallel",),    # shard batch across cores
            vmem_limit_bytes=40 * 1024 * 1024),   # explicit, fits v7x's 64 MiB
    )(im2col, w1_aug, w2_pairs, w2_center, b2p, xr)

    # Strip row padding, spatial border and channel padding; back to NCHW.
    out = out[:, :M_img, :C].reshape(N, Hp2, Wp2, C)[:, 1:H + 1, 1:W + 1, :]
    return jnp.transpose(out, (0, 3, 1, 2))


def fold_bn(w_hwio, b, gamma, beta, mean, var, eps=1e-5):
    """Fold inference-mode BatchNorm into conv weight (HWIO) and bias."""
    scale = gamma / jnp.sqrt(var + eps)           # (C_out,)
    w_f = w_hwio * scale[None, None, None, :]     # scale output channels
    b_f = (b - mean) * scale + beta
    return w_f, b_f


def reference_resblock(x_nchw, w1, b1, w2, b2):
    """Pure-JAX reference with the same folded params and matching numerics
    (bf16 convs with f32 accumulation, bf16 bias on conv1, f32 residual)."""
    x = jnp.transpose(x_nchw, (0, 2, 3, 1)).astype(jnp.float32)
    dn = lax.conv_dimension_numbers(x.shape, w1.shape, ("NHWC", "HWIO", "NHWC"))
    y = lax.conv_general_dilated(x.astype(jnp.bfloat16), w1.astype(jnp.bfloat16),
                                 (1, 1), "SAME", dimension_numbers=dn,
                                 preferred_element_type=jnp.float32)
    b1q = b1.astype(jnp.bfloat16).astype(jnp.float32)
    y = jnp.maximum(y + b1q[None, None, None, :], 0.0)
    y2 = lax.conv_general_dilated(y.astype(jnp.bfloat16), w2.astype(jnp.bfloat16),
                                  (1, 1), "SAME", dimension_numbers=dn,
                                  preferred_element_type=jnp.float32)
    out = y2 + b2[None, None, None, :] + x
    return jnp.transpose(out, (0, 3, 1, 2))


if __name__ == "__main__":
    N, C, H, W = 2, 8, 16, 16
    key = jax.random.PRNGKey(0)
    ks = jax.random.split(key, 11)

    x = jax.random.normal(ks[0], (N, C, H, W), jnp.float32)

    # Conv weights (PyTorch: (C_out, C_in, 3, 3)) -> HWIO (3, 3, C_in, C_out)
    w1_oihw = jax.random.normal(ks[1], (C, C, 3, 3), jnp.float32) * 0.1
    b1 = jax.random.normal(ks[2], (C,), jnp.float32) * 0.1
    w2_oihw = jax.random.normal(ks[3], (C, C, 3, 3), jnp.float32) * 0.1
    b2 = jax.random.normal(ks[4], (C,), jnp.float32) * 0.1
    w1 = jnp.transpose(w1_oihw, (2, 3, 1, 0))
    w2 = jnp.transpose(w2_oihw, (2, 3, 1, 0))

    # BatchNorm params (inference mode / running stats).
    g1 = 1.0 + 0.1 * jax.random.normal(ks[5], (C,), jnp.float32)
    be1 = 0.1 * jax.random.normal(ks[6], (C,), jnp.float32)
    m1 = 0.1 * jax.random.normal(ks[7], (C,), jnp.float32)
    v1 = jax.random.uniform(ks[8], (C,), jnp.float32, 0.5, 1.5)
    g2 = 1.0 + 0.1 * jax.random.normal(ks[9], (C,), jnp.float32)
    be2 = 0.1 * jax.random.normal(ks[10], (C,), jnp.float32)
    m2 = jnp.zeros((C,), jnp.float32)
    v2 = jnp.ones((C,), jnp.float32)

    w1f, b1f = fold_bn(w1, b1, g1, be1, m1, v1)
    w2f, b2f = fold_bn(w2, b2, g2, be2, m2, v2)

    out = resblock_pallas(x, w1f, b1f, w2f, b2f)
    out = jax.block_until_ready(out)

    ref = reference_resblock(x, w1f, b1f, w2f, b2f)
    assert out.shape == (N, C, H, W)
    # bf16 convs in both kernel and reference -> compare at bf16 tolerance.
    assert jnp.allclose(out, ref, atol=1e-2, rtol=1e-2), float(
        jnp.max(jnp.abs(out - ref)))

    print("KERNEL_OK")
</pallas_src>

<mosaic_0001>
module attributes {stable_mosaic.version = 11 : i64} {
  func.func @kernel(%arg0: i32, %arg1: memref<1x352x128xbf16, #tpu.memory_space<vmem>>, %arg2: memref<128x128xbf16, #tpu.memory_space<vmem>>, %arg3: memref<4x256x128xbf16, #tpu.memory_space<vmem>>, %arg4: memref<128x128xbf16, #tpu.memory_space<vmem>>, %arg5: memref<1x128xf32, #tpu.memory_space<vmem>>, %arg6: memref<1x352x128xf32, #tpu.memory_space<vmem>>, %arg7: memref<1x352x128xf32, #tpu.memory_space<vmem>>) attributes {dimension_semantics = [#tpu.dimension_semantics<parallel>], iteration_bounds = array<i64: 2>, scalar_prefetch = 0 : i64, scratch_operands = 0 : i64, tpu.core_type = #tpu.core_type<tc>, window_params = [{transform_indices = @transform_0, window_bounds = array<i64: 1, 352, 128>}, {pipeline_mode = #tpu.pipeline_mode<synchronous>, transform_indices = @transform_1, window_bounds = array<i64: 128, 128>}, {pipeline_mode = #tpu.pipeline_mode<synchronous>, transform_indices = @transform_2, window_bounds = array<i64: 4, 256, 128>}, {pipeline_mode = #tpu.pipeline_mode<synchronous>, transform_indices = @transform_3, window_bounds = array<i64: 128, 128>}, {pipeline_mode = #tpu.pipeline_mode<synchronous>, transform_indices = @transform_4, window_bounds = array<i64: 1, 128>}, {transform_indices = @transform_5, window_bounds = array<i64: 1, 352, 128>}, {transform_indices = @transform_6, window_bounds = array<i64: 1, 352, 128>}]} {
    %c0 = arith.constant 0 : index
    %c0_0 = arith.constant 0 : index
    %c0_1 = arith.constant 0 : index
    %0 = vector.load %arg1[%c0, %c0_0, %c0_1] : memref<1x352x128xbf16, #tpu.memory_space<vmem>>, vector<1x352x128xbf16>
    %1 = vector.shape_cast %0 : vector<1x352x128xbf16> to vector<352x128xbf16>
    %c0_2 = arith.constant 0 : index
    %c0_3 = arith.constant 0 : index
    %2 = vector.load %arg2[%c0_2, %c0_3] : memref<128x128xbf16, #tpu.memory_space<vmem>>, vector<128x128xbf16>
    %cst = arith.constant dense<0.000000e+00> : vector<352x128xf32>
    %3 = tpu.matmul %1, %2, %cst {dimension_numbers = #tpu.dot_dimension_numbers<[1], [0], [0], [1], [0, 0, 1, 1], [], []>} : vector<352x128xbf16>, vector<128x128xbf16>, vector<352x128xf32> -> vector<352x128xf32>
    %cst_4 = arith.constant 0.000000e+00 : f32
    %4 = vector.broadcast %cst_4 : f32 to vector<352x128xf32>
    %5 = arith.maximumf %3, %4 : vector<352x128xf32>
    %6 = arith.truncf %5 : vector<352x128xf32> to vector<352x128xbf16>
    %c0_5 = arith.constant 0 : index
    %c0_6 = arith.constant 0 : index
    %7 = vector.load %arg4[%c0_5, %c0_6] : memref<128x128xbf16, #tpu.memory_space<vmem>>, vector<128x128xbf16>
    %cst_7 = arith.constant dense<0.000000e+00> : vector<352x128xf32>
    %8 = tpu.matmul %6, %7, %cst_7 {dimension_numbers = #tpu.dot_dimension_numbers<[1], [0], [0], [1], [0, 0, 1, 1], [], []>} : vector<352x128xbf16>, vector<128x128xbf16>, vector<352x128xf32> -> vector<352x128xf32>
    %c19_i32 = arith.constant 19 : i32
    %9 = tpu.dynamic_rotate %5 by %c19_i32 dim 0 : vector<352x128xf32>, i32 -> vector<352x128xf32>
    %10 = arith.truncf %9 : vector<352x128xf32> to vector<352x128xbf16>
    %c18_i32 = arith.constant 18 : i32
    %11 = tpu.dynamic_rotate %5 by %c18_i32 dim 0 : vector<352x128xf32>, i32 -> vector<352x128xf32>
    %12 = arith.truncf %11 : vector<352x128xf32> to vector<352x128xbf16>
    %13 = tpu.concatenate %10, %12 in 1 : vector<352x128xbf16>, vector<352x128xbf16> -> vector<352x256xbf16>
    %c0_8 = arith.constant 0 : index
    %c0_9 = arith.constant 0 : index
    %c0_10 = arith.constant 0 : index
    %14 = vector.load %arg3[%c0_8, %c0_9, %c0_10] : memref<4x256x128xbf16, #tpu.memory_space<vmem>>, vector<1x256x128xbf16>
    %15 = vector.shape_cast %14 : vector<1x256x128xbf16> to vector<256x128xbf16>
    %cst_11 = arith.constant dense<0.000000e+00> : vector<352x128xf32>
    %16 = tpu.matmul %13, %15, %cst_11 {dimension_numbers = #tpu.dot_dimension_numbers<[1], [0], [0], [1], [0, 0, 1, 1], [], []>} : vector<352x256xbf16>, vector<256x128xbf16>, vector<352x128xf32> -> vector<352x128xf32>
    %17 = arith.addf %8, %16 : vector<352x128xf32>
    %c17_i32 = arith.constant 17 : i32
    %18 = tpu.dynamic_rotate %5 by %c17_i32 dim 0 : vector<352x128xf32>, i32 -> vector<352x128xf32>
    %19 = arith.truncf %18 : vector<352x128xf32> to vector<352x128xbf16>
    %c1_i32 = arith.constant 1 : i32
    %20 = tpu.dynamic_rotate %5 by %c1_i32 dim 0 : vector<352x128xf32>, i32 -> vector<352x128xf32>
    %21 = arith.truncf %20 : vector<352x128xf32> to vector<352x128xbf16>
    %22 = tpu.concatenate %19, %21 in 1 : vector<352x128xbf16>, vector<352x128xbf16> -> vector<352x256xbf16>
    %c1 = arith.constant 1 : index
    %c0_12 = arith.constant 0 : index
    %c0_13 = arith.constant 0 : index
    %23 = vector.load %arg3[%c1, %c0_12, %c0_13] : memref<4x256x128xbf16, #tpu.memory_space<vmem>>, vector<1x256x128xbf16>
    %24 = vector.shape_cast %23 : vector<1x256x128xbf16> to vector<256x128xbf16>
    %cst_14 = arith.constant dense<0.000000e+00> : vector<352x128xf32>
    %25 = tpu.matmul %22, %24, %cst_14 {dimension_numbers = #tpu.dot_dimension_numbers<[1], [0], [0], [1], [0, 0, 1, 1], [], []>} : vector<352x256xbf16>, vector<256x128xbf16>, vector<352x128xf32> -> vector<352x128xf32>
    %26 = arith.addf %17, %25 : vector<352x128xf32>
    %c351_i32 = arith.constant 351 : i32
    %27 = tpu.dynamic_rotate %5 by %c351_i32 dim 0 : vector<352x128xf32>, i32 -> vector<352x128xf32>
    %28 = arith.truncf %27 : vector<352x128xf32> to vector<352x128xbf16>
    %c335_i32 = arith.constant 335 : i32
    %29 = tpu.dynamic_rotate %5 by %c335_i32 dim 0 : vector<352x128xf32>, i32 -> vector<352x128xf32>
    %30 = arith.truncf %29 : vector<352x128xf32> to vector<352x128xbf16>
    %31 = tpu.concatenate %28, %30 in 1 : vector<352x128xbf16>, vector<352x128xbf16> -> vector<352x256xbf16>
    %c2 = arith.constant 2 : index
    %c0_15 = arith.constant 0 : index
    %c0_16 = arith.constant 0 : index
    %32 = vector.load %arg3[%c2, %c0_15, %c0_16] : memref<4x256x128xbf16, #tpu.memory_space<vmem>>, vector<1x256x128xbf16>
    %33 = vector.shape_cast %32 : vector<1x256x128xbf16> to vector<256x128xbf16>
    %cst_17 = arith.constant dense<0.000000e+00> : vector<352x128xf32>
    %34 = tpu.matmul %31, %33, %cst_17 {dimension_numbers = #tpu.dot_dimension_numbers<[1], [0], [0], [1], [0, 0, 1, 1], [], []>} : vector<352x256xbf16>, vector<256x128xbf16>, vector<352x128xf32> -> vector<352x128xf32>
    %35 = arith.addf %26, %34 : vector<352x128xf32>
    %c334_i32 = arith.constant 334 : i32
    %36 = tpu.dynamic_rotate %5 by %c334_i32 dim 0 : vector<352x128xf32>, i32 -> vector<352x128xf32>
    %37 = arith.truncf %36 : vector<352x128xf32> to vector<352x128xbf16>
    %c333_i32 = arith.constant 333 : i32
    %38 = tpu.dynamic_rotate %5 by %c333_i32 dim 0 : vector<352x128xf32>, i32 -> vector<352x128xf32>
    %39 = arith.truncf %38 : vector<352x128xf32> to vector<352x128xbf16>
    %40 = tpu.concatenate %37, %39 in 1 : vector<352x128xbf16>, vector<352x128xbf16> -> vector<352x256xbf16>
    %c3 = arith.constant 3 : index
    %c0_18 = arith.constant 0 : index
    %c0_19 = arith.constant 0 : index
    %41 = vector.load %arg3[%c3, %c0_18, %c0_19] : memref<4x256x128xbf16, #tpu.memory_space<vmem>>, vector<1x256x128xbf16>
    %42 = vector.shape_cast %41 : vector<1x256x128xbf16> to vector<256x128xbf16>
    %cst_20 = arith.constant dense<0.000000e+00> : vector<352x128xf32>
    %43 = tpu.matmul %40, %42, %cst_20 {dimension_numbers = #tpu.dot_dimension_numbers<[1], [0], [0], [1], [0, 0, 1, 1], [], []>} : vector<352x256xbf16>, vector<256x128xbf16>, vector<352x128xf32> -> vector<352x128xf32>
    %44 = arith.addf %35, %43 : vector<352x128xf32>
    %c0_21 = arith.constant 0 : index
    %c0_22 = arith.constant 0 : index
    %45 = vector.load %arg5[%c0_21, %c0_22] : memref<1x128xf32, #tpu.memory_space<vmem>>, vector<1x128xf32>
    %46 = vector.broadcast %45 : vector<1x128xf32> to vector<352x128xf32>
    %47 = arith.addf %44, %46 : vector<352x128xf32>
    %c0_23 = arith.constant 0 : index
    %c0_24 = arith.constant 0 : index
    %c0_25 = arith.constant 0 : index
    %48 = vector.load %arg6[%c0_23, %c0_24, %c0_25] : memref<1x352x128xf32, #tpu.memory_space<vmem>>, vector<1x352x128xf32>
    %49 = vector.shape_cast %48 : vector<1x352x128xf32> to vector<352x128xf32>
    %50 = arith.addf %47, %49 : vector<352x128xf32>
    %c0_26 = arith.constant 0 : index
    %c0_27 = arith.constant 0 : index
    %c0_28 = arith.constant 0 : index
    %51 = vector.load %arg7[%c0_26, %c0_27, %c0_28] : memref<1x352x128xf32, #tpu.memory_space<vmem>>, vector<1x352x128xf32>
    %52 = vector.shape_cast %51 : vector<1x352x128xf32> to vector<352x128xf32>
    %53 = vector.shape_cast %50 : vector<352x128xf32> to vector<1x352x128xf32>
    tpu.vector_store %arg7[%c0_26, %c0_27, %c0_28], %53 {strides = array<i32>} : memref<1x352x128xf32, #tpu.memory_space<vmem>>, vector<1x352x128xf32>,
    return
  }
  func.func @transform_0(%arg0: i32) -> (i32, i32, i32) {
    %c0_i32 = arith.constant 0 : i32
    %c0_i32_0 = arith.constant 0 : i32
    %c0_i32_1 = arith.constant 0 : i32
    return %arg0, %c0_i32, %c0_i32_0 : i32, i32, i32
  }
  func.func @transform_1(%arg0: i32) -> (i32, i32) {
    %c0_i32 = arith.constant 0 : i32
    %c0_i32_0 = arith.constant 0 : i32
    %c0_i32_1 = arith.constant 0 : i32
    return %c0_i32, %c0_i32_0 : i32, i32
  }
  func.func @transform_2(%arg0: i32) -> (i32, i32, i32) {
    %c0_i32 = arith.constant 0 : i32
    %c0_i32_0 = arith.constant 0 : i32
    %c0_i32_1 = arith.constant 0 : i32
    %c0_i32_2 = arith.constant 0 : i32
    return %c0_i32, %c0_i32_0, %c0_i32_1 : i32, i32, i32
  }
  func.func @transform_3(%arg0: i32) -> (i32, i32) {
    %c0_i32 = arith.constant 0 : i32
    %c0_i32_0 = arith.constant 0 : i32
    %c0_i32_1 = arith.constant 0 : i32
    return %c0_i32, %c0_i32_0 : i32, i32
  }
  func.func @transform_4(%arg0: i32) -> (i32, i32) {
    %c0_i32 = arith.constant 0 : i32
    %c0_i32_0 = arith.constant 0 : i32
    %c0_i32_1 = arith.constant 0 : i32
    return %c0_i32, %c0_i32_0 : i32, i32
  }
  func.func @transform_5(%arg0: i32) -> (i32, i32, i32) {
    %c0_i32 = arith.constant 0 : i32
    %c0_i32_0 = arith.constant 0 : i32
    %c0_i32_1 = arith.constant 0 : i32
    return %arg0, %c0_i32, %c0_i32_0 : i32, i32, i32
  }
  func.func @transform_6(%arg0: i32) -> (i32, i32, i32) {
    %c0_i32 = arith.constant 0 : i32
    %c0_i32_0 = arith.constant 0 : i32
    %c0_i32_1 = arith.constant 0 : i32
    return %arg0, %c0_i32, %c0_i32_0 : i32, i32, i32
  }
}

</mosaic_0001>

<llo_original>
// kernel: tpu_custom_call.1
$region0: #{tpu_custom_call.1}
  #allocation0 [shape = 'u32[]', space=smem, size = 0x4, offset = 0x4, fixed_abs, tag = 'smem constant byte address 0x4 - core index']
  #allocation1 [shape = 'u32[72,128]{1,0:T(1,128)}', space=vmem, size = 0x9000, scoped, tag = 'internal scratch']
  %s0 = inlined_call_operand.hbm [shape: bf16[2,352,128], index: 0, kind: input, shape index: {}]
  %s1 = inlined_call_operand.hbm [shape: bf16[128,128], index: 1, kind: input, shape index: {}]
  %s2 = inlined_call_operand.hbm [shape: bf16[4,256,128], index: 2, kind: input, shape index: {}]
  %s3 = inlined_call_operand.hbm [shape: bf16[128,128], index: 3, kind: input, shape index: {}]
  %s4 = inlined_call_operand.vmem [shape: f32[1,128], index: 4, kind: input, shape index: {}]
  %s5 = inlined_call_operand.hbm [shape: f32[2,352,128], index: 5, kind: input, shape index: {}]
  %s6 = inlined_call_operand.hbm [shape: f32[2,352,128], index: 6, kind: output, shape index: {}]
  %s7 = sld [smem:[#allocation0]]
  $region77: #{tpu_custom_call.1} parent=0
    _
  %s9 = ssub.s32 1, %s7
  %s10 = scalar_select 0, %s9, %s7
  $region1: #{tpu_custom_call.1} parent=0
    #allocation2 [shape = 'u8[180224]{0}', space=vmem, size = 0x2c000, scoped, tag = 'input window, operand 0']
    #allocation3 [shape = 's32[2]{0}', space=sflag, size = 0x8, scoped, tag = 'scoped memory for tpu_custom_call.1']
    #allocation4 [shape = 's32[2]{0}', space=sflag, size = 0x8, scoped, tag = 'scoped memory for tpu_custom_call.1']
    #allocation5 [shape = 'u8[32768]{0}', space=vmem, size = 0x8000, scoped, tag = 'input window, operand 1, single buffered']
    #allocation6 [shape = 's32[1]{0}', space=sflag, size = 0x4, scoped, tag = 'scoped memory for tpu_custom_call.1']
    #allocation7 [shape = 'u8[262144]{0}', space=vmem, size = 0x40000, scoped, tag = 'input window, operand 2, single buffered']
    #allocation8 [shape = 'u8[32768]{0}', space=vmem, size = 0x8000, scoped, tag = 'input window, operand 3, single buffered']
    #allocation9 [shape = 's32[1]{0}', space=sflag, size = 0x4, scoped, tag = 'scoped memory for tpu_custom_call.1']
    #allocation10 [shape = 'u8[360448]{0}', space=vmem, size = 0x58000, scoped, tag = 'input window, operand 5']
    #allocation11 [shape = 'u8[360448]{0}', space=vmem, size = 0x58000, scoped, tag = 'output window, operand 0']
    %11 = vsyncpa [#allocation3], 0
    %s12 = scalar_lea.sflag [#allocation3], 1
    %13 = vsyncpa %s12, 0
    %14 = vsyncpa [#allocation6], 0
    %15 = vsyncpa [#allocation9], 0
    %16 = vsyncpa [#allocation4], 0
    %s17 = scalar_lea.sflag [#allocation4], 1
    %18 = vsyncpa %s17, 0
    loop: start=0, step=1, limit=4
    $region2: #{tpu_custom_call.1} parent=1 // loop_pre_header
      _
    $region3: #{tpu_custom_call.1} parent=1 // loop_header
      %s20 = sphi 0, %s24
      %p21 = scmp.ge.s32.totalorder %s20, 4
      %s30 = sphi 0, %s32
      %s33 = sphi 0, %s30
      %s34 = sphi 0, %s33
      %s50 = sphi 0, %s34
      %s54 = sphi 0, %s54
      %s56 = sphi 0, %s54
      %s57 = sphi 0, %s56
      %s71 = sphi 0, %s57
      %s75 = sphi 0, %s75
      %s77 = sphi 0, %s75
      %s78 = sphi 0, %s77
      %s92 = sphi 0, %s78
      %s96 = sphi 0, %s96
      %s98 = sphi 0, %s96
      %s99 = sphi 0, %s98
      %s113 = sphi 0, %s99
      %s117 = sphi 0, %s117
      %s119 = sphi 0, %s117
      %s120 = sphi 0, %s119
      %s134 = sphi 0, %s120
      %s140 = sphi 0, %s142
      %s143 = sphi 0, %s140
      %s144 = sphi 0, %s143
      %s160 = sphi 0, %s144
      %s166 = sphi 0, %s168
      %s169 = sphi 0, %s166
      %s170 = sphi 0, %s169
      %s186 = sphi 0, %s170
    $region4: #{tpu_custom_call.1} parent=1 // loop_header_branch
      %23 = sbr.rel (%p21) target = $region8
    $region5: #{tpu_custom_call.1} parent=1 // loop_body
      %s25 = ssub.s32 %s20, 1
      %s26 = ssub.s32 %s20, 2
      %s27 = sadd.s32 %s20, 1
      %s28 = ssub.s32 %s20, %s27
      %p29 = scmp.eq.s32.totalorder %s28, 0
      %s31 = sadd.s32 %s30, 1
      %s32 = scalar_select %p29, %s30, %s31
      %p35 = pneg %p29
      %p36 = scmp.eq.s32.totalorder %s20, 1
      %p37 = por %p35, %p36
      %p38 = scmp.ne.s32.totalorder %s30, %s33
      %p39 = scmp.eq.s32.totalorder %s20, 0
      %p40 = por %p38, %p39
      %p41 = scmp.ne.s32.totalorder %s30, %s33
      %p42 = scmp.eq.s32.totalorder %s25, 1
      %p43 = por %p41, %p42
      %p44 = scmp.ne.s32.totalorder %s33, %s34
      %p45 = scmp.eq.s32.totalorder %s25, 0
      %p46 = por %p44, %p45
      %p47 = scmp.ne.s32.totalorder %s33, %s34
      %p48 = scmp.eq.s32.totalorder %s26, 1
      %p49 = por %p47, %p48
      %p51 = scmp.ne.s32.totalorder %s34, %s50
      %p52 = scmp.eq.s32.totalorder %s26, 0
      %p53 = por %p51, %p52
      %s55 = sadd.s32 %s54, 1
      %p58 = scmp.eq.s32.totalorder %s20, 1
      %p59 = scmp.ne.s32.totalorder %s54, %s56
      %p60 = scmp.eq.s32.totalorder %s20, 0
      %p61 = por %p59, %p60
      %p62 = scmp.ne.s32.totalorder %s54, %s56
      %p63 = scmp.eq.s32.totalorder %s25, 1
      %p64 = por %p62, %p63
      %p65 = scmp.ne.s32.totalorder %s56, %s57
      %p66 = scmp.eq.s32.totalorder %s25, 0
      %p67 = por %p65, %p66
      %p68 = scmp.ne.s32.totalorder %s56, %s57
      %p69 = scmp.eq.s32.totalorder %s26, 1
      %p70 = por %p68, %p69
      %p72 = scmp.ne.s32.totalorder %s57, %s71
      %p73 = scmp.eq.s32.totalorder %s26, 0
      %p74 = por %p72, %p73
      %s76 = sadd.s32 %s75, 1
      %p79 = scmp.eq.s32.totalorder %s20, 1
      %p80 = scmp.ne.s32.totalorder %s75, %s77
      %p81 = scmp.eq.s32.totalorder %s20, 0
      %p82 = por %p80, %p81
      %p83 = scmp.ne.s32.totalorder %s75, %s77
      %p84 = scmp.eq.s32.totalorder %s25, 1
      %p85 = por %p83, %p84
      %p86 = scmp.ne.s32.totalorder %s77, %s78
      %p87 = scmp.eq.s32.totalorder %s25, 0
      %p88 = por %p86, %p87
      %p89 = scmp.ne.s32.totalorder %s77, %s78
      %p90 = scmp.eq.s32.totalorder %s26, 1
      %p91 = por %p89, %p90
      %p93 = scmp.ne.s32.totalorder %s78, %s92
      %p94 = scmp.eq.s32.totalorder %s26, 0
      %p95 = por %p93, %p94
      %s97 = sadd.s32 %s96, 1
      %p100 = scmp.eq.s32.totalorder %s20, 1
      %p101 = scmp.ne.s32.totalorder %s96, %s98
      %p102 = scmp.eq.s32.totalorder %s20, 0
      %p103 = por %p101, %p102
      %p104 = scmp.ne.s32.totalorder %s96, %s98
      %p105 = scmp.eq.s32.totalorder %s25, 1
      %p106 = por %p104, %p105
      %p107 = scmp.ne.s32.totalorder %s98, %s99
      %p108 = scmp.eq.s32.totalorder %s25, 0
      %p109 = por %p107, %p108
      %p110 = scmp.ne.s32.totalorder %s98, %s99
      %p111 = scmp.eq.s32.totalorder %s26, 1
      %p112 = por %p110, %p111
      %p114 = scmp.ne.s32.totalorder %s99, %s113
      %p115 = scmp.eq.s32.totalorder %s26, 0
      %p116 = por %p114, %p115
      %s118 = sadd.s32 %s117, 1
      %p121 = scmp.eq.s32.totalorder %s20, 1
      %p122 = scmp.ne.s32.totalorder %s117, %s119
      %p123 = scmp.eq.s32.totalorder %s20, 0
      %p124 = por %p122, %p123
      %p125 = scmp.ne.s32.totalorder %s117, %s119
      %p126 = scmp.eq.s32.totalorder %s25, 1
      %p127 = por %p125, %p126
      %p128 = scmp.ne.s32.totalorder %s119, %s120
      %p129 = scmp.eq.s32.totalorder %s25, 0
      %p130 = por %p128, %p129
      %p131 = scmp.ne.s32.totalorder %s119, %s120
      %p132 = scmp.eq.s32.totalorder %s26, 1
      %p133 = por %p131, %p132
      %p135 = scmp.ne.s32.totalorder %s120, %s134
      %p136 = scmp.eq.s32.totalorder %s26, 0
      %p137 = por %p135, %p136
      %s138 = ssub.s32 %s20, %s27
      %p139 = scmp.eq.s32.totalorder %s138, 0
      %s141 = sadd.s32 %s140, 1
      %s142 = scalar_select %p139, %s140, %s141
      %p145 = pneg %p139
      %p146 = scmp.eq.s32.totalorder %s20, 1
      %p147 = por %p145, %p146
      %p148 = scmp.ne.s32.totalorder %s140, %s143
      %p149 = scmp.eq.s32.totalorder %s20, 0
      %p150 = por %p148, %p149
      %p151 = scmp.ne.s32.totalorder %s140, %s143
      %p152 = scmp.eq.s32.totalorder %s25, 1
      %p153 = por %p151, %p152
      %p154 = scmp.ne.s32.totalorder %s143, %s144
      %p155 = scmp.eq.s32.totalorder %s25, 0
      %p156 = por %p154, %p155
      %p157 = scmp.ne.s32.totalorder %s143, %s144
      %p158 = scmp.eq.s32.totalorder %s26, 1
      %p159 = por %p157, %p158
      %p161 = scmp.ne.s32.totalorder %s144, %s160
      %p162 = scmp.eq.s32.totalorder %s26, 0
      %p163 = por %p161, %p162
      %s164 = ssub.s32 %s20, %s27
      %p165 = scmp.eq.s32.totalorder %s164, 0
      %s167 = sadd.s32 %s166, 1
      %s168 = scalar_select %p165, %s166, %s167
      %p171 = pneg %p165
      %p172 = scmp.eq.s32.totalorder %s20, 1
      %p173 = por %p171, %p172
      %p174 = scmp.ne.s32.totalorder %s166, %s169
      %p175 = scmp.eq.s32.totalorder %s20, 0
      %p176 = por %p174, %p175
      %p177 = scmp.ne.s32.totalorder %s166, %s169
      %p178 = scmp.eq.s32.totalorder %s25, 1
      %p179 = por %p177, %p178
      %p180 = scmp.ne.s32.totalorder %s169, %s170
      %p181 = scmp.eq.s32.totalorder %s25, 0
      %p182 = por %p180, %p181
      %p183 = scmp.ne.s32.totalorder %s169, %s170
      %p184 = scmp.eq.s32.totalorder %s26, 1
      %p185 = por %p183, %p184
      %p187 = scmp.ne.s32.totalorder %s170, %s186
      %p188 = scmp.eq.s32.totalorder %s26, 0
      %p189 = por %p187, %p188
      %p190 = scmp.le.s32.totalorder 1, %s20
      %p191 = scmp.lt.s32.totalorder %s20, 3
      %p192 = pnand %p190, %p191
      %p193 = pneg %p192
      // Predicated region
      $region9: #{tpu_custom_call.1} parent=5 // pred_check
        _
      $region10: #{tpu_custom_call.1} parent=5 // pred_check_branch
        %195 = sbr.rel (%p192) target = $region12
      $region11: #{tpu_custom_call.1} parent=5 // pred_region
        %s196 = ssub.s32 %s20, 1
        // Predicated region
        $region13: #{tpu_custom_call.1} parent=11 // pred_check
          %p197 = pneg %p67
        $region14: #{tpu_custom_call.1} parent=11 // pred_check_branch
          %199 = sbr.rel (%p197) target = $region16
        $region15: #{tpu_custom_call.1} parent=11 // pred_region
          %201 = vsyncadd [#allocation6], 0
          %s202 = sshll.u32 %s1, 4
          %s203 = int_to_ptr.hbm [resolvable:$true] %s202
          %s204 = sshll.u32 [#allocation5], 4
          %s205 = int_to_ptr.vmem [resolvable:$true] %s204
          %210 = dma.hbm_to_vmem [thread:$0]  %s203, 1024, %s205, [#allocation6], 64, 64, 4
        $region16: #{tpu_custom_call.1} parent=11 // pred_fallthru
          _
        // Predicated region
        $region17: #{tpu_custom_call.1} parent=11 // pred_check
          %p211 = pneg %p88
        $region18: #{tpu_custom_call.1} parent=11 // pred_check_branch
          %213 = sbr.rel (%p211) target = $region20
        $region19: #{tpu_custom_call.1} parent=11 // pred_region
          %215 = vsyncadd [#allocation6], 0
          %s216 = sshll.u32 %s2, 4
          %s217 = int_to_ptr.hbm [resolvable:$true] %s216
          %s218 = sshll.u32 [#allocation7], 4
          %s219 = int_to_ptr.vmem [resolvable:$true] %s218
          %224 = dma.hbm_to_vmem [thread:$0]  %s217, 8192, %s219, [#allocation6], 64, 64, 4
        $region20: #{tpu_custom_call.1} parent=11 // pred_fallthru
          _
        // Predicated region
        $region21: #{tpu_custom_call.1} parent=11 // pred_check
          %p225 = pneg %p109
        $region22: #{tpu_custom_call.1} parent=11 // pred_check_branch
          %227 = sbr.rel (%p225) target = $region24
        $region23: #{tpu_custom_call.1} parent=11 // pred_region
          %229 = vsyncadd [#allocation9], 0
          %s230 = sshll.u32 %s3, 4
          %s231 = int_to_ptr.hbm [resolvable:$true] %s230
          %s232 = sshll.u32 [#allocation8], 4
          %s233 = int_to_ptr.vmem [resolvable:$true] %s232
          %238 = dma.hbm_to_vmem [thread:$0]  %s231, 1024, %s233, [#allocation9], 64, 64, 4
        $region24: #{tpu_custom_call.1} parent=11 // pred_fallthru
          _
        // Predicated region
        $region25: #{tpu_custom_call.1} parent=11 // pred_check
          %p239 = pneg %p130
        $region26: #{tpu_custom_call.1} parent=11 // pred_check_branch
          %241 = sbr.rel (%p239) target = $region28
        $region27: #{tpu_custom_call.1} parent=11 // pred_region
          _
        $region28: #{tpu_custom_call.1} parent=11 // pred_fallthru
          _
      $region12: #{tpu_custom_call.1} parent=5 // pred_fallthru
        _
      %p242 = scmp.lt.s32.totalorder %s20, 2
      // Predicated region
      $region29: #{tpu_custom_call.1} parent=5 // pred_check
        %p243 = pneg %p242
      $region30: #{tpu_custom_call.1} parent=5 // pred_check_branch
        %245 = sbr.rel (%p243) target = $region32
      $region31: #{tpu_custom_call.1} parent=5 // pred_region
        // Predicated region
        $region33: #{tpu_custom_call.1} parent=31 // pred_check
          %p246 = pneg %p40
        $region34: #{tpu_custom_call.1} parent=31 // pred_check_branch
          %248 = sbr.rel (%p246) target = $region36
        $region35: #{tpu_custom_call.1} parent=31 // pred_region
          %s249 = sand.u32 %s20, 1
          %s250 = scalar_lea.sflag [#allocation3], %s249
          %s251 = sand.u32 %s30, 1
          %s252 = smul.addr %s251, 176
          %s253 = scalar_lea.vmem [#allocation2], %s252
          %255 = vsyncadd %s250, 0
          %s256 = smul.addr %s20, 44
          %s257 = smul.addr %s256, 4
          %s258 = scalar_lea.hbm %s0, %s257
          %s259 = sshll.u32 %s258, 4
          %s260 = int_to_ptr.hbm [resolvable:$true] %s259
          %s261 = sshll.u32 %s253, 4
          %s262 = int_to_ptr.vmem [resolvable:$true] %s261
          %267 = dma.hbm_to_vmem [thread:$0]  %s260, 2816, %s262, %s250, 64, 64, 4
        $region36: #{tpu_custom_call.1} parent=31 // pred_fallthru
          _
        // Predicated region
        $region37: #{tpu_custom_call.1} parent=31 // pred_check
          %p268 = pneg %p150
        $region38: #{tpu_custom_call.1} parent=31 // pred_check_branch
          %270 = sbr.rel (%p268) target = $region40
        $region39: #{tpu_custom_call.1} parent=31 // pred_region
          %s271 = sand.u32 %s20, 1
          %s272 = scalar_lea.sflag [#allocation3], %s271
          %s273 = sand.u32 %s140, 1
          %s274 = smul.addr %s273, 352
          %s275 = scalar_lea.vmem [#allocation10], %s274
          %277 = vsyncadd %s272, 0
          %s278 = smul.addr %s20, 44
          %s279 = smul.addr %s278, 8
          %s280 = scalar_lea.hbm %s5, %s279
          %s281 = sshll.u32 %s280, 4
          %s282 = int_to_ptr.hbm [resolvable:$true] %s281
          %s283 = sshll.u32 %s275, 4
          %s284 = int_to_ptr.vmem [resolvable:$true] %s283
          %289 = dma.hbm_to_vmem [thread:$0]  %s282, 5632, %s284, %s272, 128, 128, 8
        $region40: #{tpu_custom_call.1} parent=31 // pred_fallthru
          _
      $region32: #{tpu_custom_call.1} parent=5 // pred_fallthru
        _
      %p290 = scmp.le.s32.totalorder 1, %s20
      %p291 = scmp.lt.s32.totalorder %s20, 3
      %p292 = pnand %p290, %p291
      %p293 = pneg %p292
      // Predicated region
      $region41: #{tpu_custom_call.1} parent=5 // pred_check
        _
      $region42: #{tpu_custom_call.1} parent=5 // pred_check_branch
        %295 = sbr.rel (%p292) target = $region44
      $region43: #{tpu_custom_call.1} parent=5 // pred_region
        %s296 = ssub.s32 %s20, 1
        %s297 = sand.u32 %s25, 1
        %s298 = scalar_lea.sflag [#allocation3], %s297
        %s299 = sand.u32 %s33, 1
        %s300 = smul.addr %s299, 176
        %s301 = scalar_lea.vmem [#allocation2], %s300
        // Predicated region
        $region45: #{tpu_custom_call.1} parent=43 // pred_check
          %p302 = pneg %p46
        $region46: #{tpu_custom_call.1} parent=43 // pred_check_branch
          %304 = sbr.rel (%p302) target = $region48
        $region47: #{tpu_custom_call.1} parent=43 // pred_region
          %306 = dma.done %s298, 2816
        $region48: #{tpu_custom_call.1} parent=43 // pred_fallthru
          _
        // Predicated region
        $region49: #{tpu_custom_call.1} parent=43 // pred_check
          %p307 = pneg %p67
        $region50: #{tpu_custom_call.1} parent=43 // pred_check_branch
          %309 = sbr.rel (%p307) target = $region52
        $region51: #{tpu_custom_call.1} parent=43 // pred_region
          %311 = dma.done [#allocation6], 1024
        $region52: #{tpu_custom_call.1} parent=43 // pred_fallthru
          _
        // Predicated region
        $region53: #{tpu_custom_call.1} parent=43 // pred_check
          %p312 = pneg %p88
        $region54: #{tpu_custom_call.1} parent=43 // pred_check_branch
          %314 = sbr.rel (%p312) target = $region56
        $region55: #{tpu_custom_call.1} parent=43 // pred_region
          %316 = dma.done [#allocation6], 8192
        $region56: #{tpu_custom_call.1} parent=43 // pred_fallthru
          _
        // Predicated region
        $region57: #{tpu_custom_call.1} parent=43 // pred_check
          %p317 = pneg %p109
        $region58: #{tpu_custom_call.1} parent=43 // pred_check_branch
          %319 = sbr.rel (%p317) target = $region60
        $region59: #{tpu_custom_call.1} parent=43 // pred_region
          %321 = dma.done [#allocation9], 1024
        $region60: #{tpu_custom_call.1} parent=43 // pred_fallthru
          _
        %s322 = sand.u32 %s25, 1
        %s323 = scalar_lea.sflag [#allocation3], %s322
        %s324 = sand.u32 %s143, 1
        %s325 = smul.addr %s324, 352
        %s326 = scalar_lea.vmem [#allocation10], %s325
        // Predicated region
        $region61: #{tpu_custom_call.1} parent=43 // pred_check
          %p327 = pneg %p156
        $region62: #{tpu_custom_call.1} parent=43 // pred_check_branch
          %329 = sbr.rel (%p327) target = $region64
        $region63: #{tpu_custom_call.1} parent=43 // pred_region
          %331 = dma.done %s323, 5632
        $region64: #{tpu_custom_call.1} parent=43 // pred_fallthru
          _
        %s332 = sand.u32 %s25, 1
        %s333 = scalar_lea.sflag [#allocation3], %s332
        %s334 = sand.u32 %s33, 1
        %s335 = smul.addr %s334, 176
        %s336 = scalar_lea.vmem [#allocation2], %s335
        %p337 = pneg %p46
        %p338 = pneg %p43
        %p339 = pneg %p67
        %p340 = pneg %p64
        %p341 = pneg %p88
        %p342 = pneg %p85
        %p343 = pneg %p109
        %p344 = pneg %p106
        %p345 = pneg %p130
        %p346 = pneg %p127
        %s347 = sand.u32 %s25, 1
        %s348 = scalar_lea.sflag [#allocation3], %s347
        %s349 = sand.u32 %s143, 1
        %s350 = smul.addr %s349, 352
        %s351 = scalar_lea.vmem [#allocation10], %s350
        %p352 = pneg %p156
        %p353 = pneg %p153
        %p354 = pneg %p182
        %p355 = pneg %p179
        %s356 = sand.u32 %s169, 1
        %s357 = scalar_lea.sflag [#allocation4], %s356
        %s358 = sand.u32 %s169, 1
        %s359 = smul.addr %s358, 352
        %s360 = scalar_lea.vmem [#allocation11], %s359
        %v361 = vld [vmem:[%s301] sm:$0xf]
        %v362 = vld [vmem:[%s301 + $0x4] sm:$0xf]
        %v363 = vld [vmem:[%s301 + $0x8] sm:$0xf]
        %v364 = vld [vmem:[%s301 + $0xc] sm:$0xf]
        %v365 = vld [vmem:[%s301 + $0x10] sm:$0xf]
        %v366 = vld [vmem:[%s301 + $0x14] sm:$0xf]
        %v367 = vld [vmem:[%s301 + $0x18] sm:$0xf]
        %v368 = vld [vmem:[%s301 + $0x1c] sm:$0xf]
        %v369 = vld [vmem:[%s301 + $0x20] sm:$0xf]
        %v370 = vld [vmem:[%s301 + $0x24] sm:$0xf]
        %v371 = vld [vmem:[%s301 + $0x28] sm:$0xf]
        %v372 = vld [vmem:[%s301 + $0x2c] sm:$0xf]
        %v373 = vld [vmem:[%s301 + $0x30] sm:$0xf]
        %v374 = vld [vmem:[%s301 + $0x34] sm:$0xf]
        %v375 = vld [vmem:[%s301 + $0x38] sm:$0xf]
        %v376 = vld [vmem:[%s301 + $0x3c] sm:$0xf]
        %v377 = vld [vmem:[%s301 + $0x40] sm:$0xf]
        %v378 = vld [vmem:[%s301 + $0x44] sm:$0xf]
        %v379 = vld [vmem:[%s301 + $0x48] sm:$0xf]
        %v380 = vld [vmem:[%s301 + $0x4c] sm:$0xf]
        %v381 = vld [vmem:[%s301 + $0x50] sm:$0xf]
        %v382 = vld [vmem:[%s301 + $0x54] sm:$0xf]
        %v383 = vld [vmem:[%s301 + $0x58] sm:$0xf]
        %v384 = vld [vmem:[%s301 + $0x5c] sm:$0xf]
        %v385 = vld [vmem:[%s301 + $0x60] sm:$0xf]
        %v386 = vld [vmem:[%s301 + $0x64] sm:$0xf]
        %v387 = vld [vmem:[%s301 + $0x68] sm:$0xf]
        %v388 = vld [vmem:[%s301 + $0x6c] sm:$0xf]
        %v389 = vld [vmem:[%s301 + $0x70] sm:$0xf]
        %v390 = vld [vmem:[%s301 + $0x74] sm:$0xf]
        %v391 = vld [vmem:[%s301 + $0x78] sm:$0xf]
        %v392 = vld [vmem:[%s301 + $0x7c] sm:$0xf]
        %v393 = vld [vmem:[%s301 + $0x80] sm:$0xf]
        %v394 = vld [vmem:[%s301 + $0x84] sm:$0xf]
        %v395 = vld [vmem:[%s301 + $0x88] sm:$0xf]
        %v396 = vld [vmem:[%s301 + $0x8c] sm:$0xf]
        %v397 = vld [vmem:[%s301 + $0x90] sm:$0xf]
        %v398 = vld [vmem:[%s301 + $0x94] sm:$0xf]
        %v399 = vld [vmem:[%s301 + $0x98] sm:$0xf]
        %v400 = vld [vmem:[%s301 + $0x9c] sm:$0xf]
        %v401 = vld [vmem:[%s301 + $0xa0] sm:$0xf]
        %v402 = vld [vmem:[%s301 + $0xa4] sm:$0xf]
        %v403 = vld [vmem:[%s301 + $0xa8] sm:$0xf]
        %v404 = vld [vmem:[%s301 + $0xac] sm:$0xf]
        %v405 = vld [vmem:[#allocation5] sm:$0xf]
        %v406 = vld [vmem:[#allocation5 + $0x4] sm:$0xf]
        %v407 = vld [vmem:[#allocation5 + $0x8] sm:$0xf]
        %v408 = vld [vmem:[#allocation5 + $0xc] sm:$0xf]
        %v409 = vld [vmem:[#allocation5 + $0x10] sm:$0xf]
        %v410 = vld [vmem:[#allocation5 + $0x14] sm:$0xf]
        %v411 = vld [vmem:[#allocation5 + $0x18] sm:$0xf]
        %v412 = vld [vmem:[#allocation5 + $0x1c] sm:$0xf]
        %v413 = vld [vmem:[#allocation5 + $0x20] sm:$0xf]
        %v414 = vld [vmem:[#allocation5 + $0x24] sm:$0xf]
        %v415 = vld [vmem:[#allocation5 + $0x28] sm:$0xf]
        %v416 = vld [vmem:[#allocation5 + $0x2c] sm:$0xf]
        %v417 = vld [vmem:[#allocation5 + $0x30] sm:$0xf]
        %v418 = vld [vmem:[#allocation5 + $0x34] sm:$0xf]
        %v419 = vld [vmem:[#allocation5 + $0x38] sm:$0xf]
        %v420 = vld [vmem:[#allocation5 + $0x3c] sm:$0xf]
        %v465 = vunpack.c.l.b16 %v361
        %v466 = vunpack.c.l.b16 %v362
        %v467 = vunpack.c.l.b16 %v363
        %v468 = vunpack.c.l.b16 %v364
        %v469 = vunpack.c.l.b16 %v365
        %v470 = vunpack.c.l.b16 %v366
        %v471 = vunpack.c.l.b16 %v367
        %v472 = vunpack.c.l.b16 %v368
        %v473 = vunpack.c.l.b16 %v369
        %v474 = vunpack.c.l.b16 %v370
        %v475 = vunpack.c.l.b16 %v371
        %v476 = vunpack.c.l.b16 %v372
        %v477 = vunpack.c.l.b16 %v373
        %v478 = vunpack.c.l.b16 %v374
        %v479 = vunpack.c.l.b16 %v375
        %v480 = vunpack.c.l.b16 %v376
        %v481 = vunpack.c.l.b16 %v377
        %v482 = vunpack.c.l.b16 %v378
        %v483 = vunpack.c.l.b16 %v379
        %v484 = vunpack.c.l.b16 %v380
        %v485 = vunpack.c.l.b16 %v381
        %v486 = vunpack.c.l.b16 %v382
        %v487 = vunpack.c.l.b16 %v383
        %v488 = vunpack.c.l.b16 %v384
        %v489 = vunpack.c.l.b16 %v385
        %v490 = vunpack.c.l.b16 %v386
        %v491 = vunpack.c.l.b16 %v387
        %v492 = vunpack.c.l.b16 %v388
        %v493 = vunpack.c.l.b16 %v389
        %v494 = vunpack.c.l.b16 %v390
        %v495 = vunpack.c.l.b16 %v391
        %v496 = vunpack.c.l.b16 %v392
        %v497 = vunpack.c.l.b16 %v393
        %v498 = vunpack.c.l.b16 %v394
        %v499 = vunpack.c.l.b16 %v395
        %v500 = vunpack.c.l.b16 %v396
        %v501 = vunpack.c.l.b16 %v397
        %v502 = vunpack.c.l.b16 %v398
        %v503 = vunpack.c.l.b16 %v399
        %v504 = vunpack.c.l.b16 %v400
        %v505 = vunpack.c.l.b16 %v401
        %v506 = vunpack.c.l.b16 %v402
        %v507 = vunpack.c.l.b16 %v403
        %v508 = vunpack.c.l.b16 %v404
        %v509 = vpack.c.b16 %v466, %v465
        %v510 = vpack.c.b16 %v468, %v467
        %v511 = vpack.c.b16 %v470, %v469
        %v512 = vpack.c.b16 %v472, %v471
        %v513 = vpack.c.b16 %v474, %v473
        %v514 = vpack.c.b16 %v476, %v475
        %v515 = vpack.c.b16 %v478, %v477
        %v516 = vpack.c.b16 %v480, %v479
        %v517 = vpack.c.b16 %v482, %v481
        %v518 = vpack.c.b16 %v484, %v483
        %v519 = vpack.c.b16 %v486, %v485
        %v520 = vpack.c.b16 %v488, %v487
        %v521 = vpack.c.b16 %v490, %v489
        %v522 = vpack.c.b16 %v492, %v491
        %v523 = vpack.c.b16 %v494, %v493
        %v524 = vpack.c.b16 %v496, %v495
        %v525 = vpack.c.b16 %v498, %v497
        %v526 = vpack.c.b16 %v500, %v499
        %v527 = vpack.c.b16 %v502, %v501
        %v528 = vpack.c.b16 %v504, %v503
        %v529 = vpack.c.b16 %v506, %v505
        %v530 = vpack.c.b16 %v508, %v507
        %v569 = vunpack.c.l.b16 %v405
        %v570 = vunpack.c.l.b16 %v406
        %v571 = vunpack.c.l.b16 %v407
        %v572 = vunpack.c.l.b16 %v408
        %v573 = vunpack.c.l.b16 %v409
        %v574 = vunpack.c.l.b16 %v410
        %v575 = vunpack.c.l.b16 %v411
        %v576 = vunpack.c.l.b16 %v412
        %v577 = vunpack.c.l.b16 %v413
        %v578 = vunpack.c.l.b16 %v414
        %v579 = vunpack.c.l.b16 %v415
        %v580 = vunpack.c.l.b16 %v416
        %v581 = vunpack.c.l.b16 %v417
        %v582 = vunpack.c.l.b16 %v418
        %v583 = vunpack.c.l.b16 %v419
        %v584 = vunpack.c.l.b16 %v420
        %v585 = vpack.c.b16 %v570, %v569
        %v586 = vpack.c.b16 %v572, %v571
        %v587 = vpack.c.b16 %v574, %v573
        %v588 = vpack.c.b16 %v576, %v575
        %v589 = vpack.c.b16 %v578, %v577
        %v590 = vpack.c.b16 %v580, %v579
        %v591 = vpack.c.b16 %v582, %v581
        %v592 = vpack.c.b16 %v584, %v583
        %601 = vmatpush.bf16.msra.mxu0 %v592
        %602 = vmatpush.bf16.msra.mxu0 %v591
        %603 = vmatpush.bf16.msra.mxu0 %v590
        %604 = vmatpush.bf16.msra.mxu0 %v589
        %605 = vmatpush.bf16.msra.mxu0 %v588
        %606 = vmatpush.bf16.msra.mxu0 %v587
        %607 = vmatpush.bf16.msra.mxu0 %v586
        %608 = vmatpush.bf16.msra.mxu0 %v585
        %609 = vmatmul.bf16.gmra.mxu0 %v509
        %v610 = vpop.f32.mrf.mxu0
        %v611 = vadd.f32 0.0, %v610
        %v612 = vpop.f32.mrf.mxu0
        %v613 = vadd.f32 0.0, %v612
        %614 = vmatmul.bf16.gmra.mxu0 %v510
        %v615 = vpop.f32.mrf.mxu0
        %v616 = vadd.f32 0.0, %v615
        %v617 = vpop.f32.mrf.mxu0
        %v618 = vadd.f32 0.0, %v617
        %619 = vmatmul.bf16.gmra.mxu0 %v511
        %v620 = vpop.f32.mrf.mxu0
        %v621 = vadd.f32 0.0, %v620
        %v622 = vpop.f32.mrf.mxu0
        %v623 = vadd.f32 0.0, %v622
        %624 = vmatmul.bf16.gmra.mxu0 %v512
        %v625 = vpop.f32.mrf.mxu0
        %v626 = vadd.f32 0.0, %v625
        %v627 = vpop.f32.mrf.mxu0
        %v628 = vadd.f32 0.0, %v627
        %629 = vmatmul.bf16.gmra.mxu0 %v513
        %v630 = vpop.f32.mrf.mxu0
        %v631 = vadd.f32 0.0, %v630
        %v632 = vpop.f32.mrf.mxu0
        %v633 = vadd.f32 0.0, %v632
        %634 = vmatmul.bf16.gmra.mxu0 %v514
        %v635 = vpop.f32.mrf.mxu0
        %v636 = vadd.f32 0.0, %v635
        %v637 = vpop.f32.mrf.mxu0
        %v638 = vadd.f32 0.0, %v637
        %639 = vmatmul.bf16.gmra.mxu0 %v515
        %v640 = vpop.f32.mrf.mxu0
        %v641 = vadd.f32 0.0, %v640
        %v642 = vpop.f32.mrf.mxu0
        %v643 = vadd.f32 0.0, %v642
        %644 = vmatmul.bf16.gmra.mxu0 %v516
        %v645 = vpop.f32.mrf.mxu0
        %v646 = vadd.f32 0.0, %v645
        %v647 = vpop.f32.mrf.mxu0
        %v648 = vadd.f32 0.0, %v647
        %649 = vmatmul.bf16.gmra.mxu0 %v517
        %v650 = vpop.f32.mrf.mxu0
        %v651 = vadd.f32 0.0, %v650
        %v652 = vpop.f32.mrf.mxu0
        %v653 = vadd.f32 0.0, %v652
        %654 = vmatmul.bf16.gmra.mxu0 %v518
        %v655 = vpop.f32.mrf.mxu0
        %v656 = vadd.f32 0.0, %v655
        %v657 = vpop.f32.mrf.mxu0
        %v658 = vadd.f32 0.0, %v657
        %659 = vmatmul.bf16.gmra.mxu0 %v519
        %v660 = vpop.f32.mrf.mxu0
        %v661 = vadd.f32 0.0, %v660
        %v662 = vpop.f32.mrf.mxu0
        %v663 = vadd.f32 0.0, %v662
        %664 = vmatmul.bf16.gmra.mxu0 %v520
        %v665 = vpop.f32.mrf.mxu0
        %v666 = vadd.f32 0.0, %v665
        %v667 = vpop.f32.mrf.mxu0
        %v668 = vadd.f32 0.0, %v667
        %669 = vmatmul.bf16.gmra.mxu0 %v521
        %v670 = vpop.f32.mrf.mxu0
        %v671 = vadd.f32 0.0, %v670
        %v672 = vpop.f32.mrf.mxu0
        %v673 = vadd.f32 0.0, %v672
        %674 = vmatmul.bf16.gmra.mxu0 %v522
        %v675 = vpop.f32.mrf.mxu0
        %v676 = vadd.f32 0.0, %v675
        %v677 = vpop.f32.mrf.mxu0
        %v678 = vadd.f32 0.0, %v677
        %679 = vmatmul.bf16.gmra.mxu0 %v523
        %v680 = vpop.f32.mrf.mxu0
        %v681 = vadd.f32 0.0, %v680
        %v682 = vpop.f32.mrf.mxu0
        %v683 = vadd.f32 0.0, %v682
        %684 = vmatmul.bf16.gmra.mxu0 %v524
        %v685 = vpop.f32.mrf.mxu0
        %v686 = vadd.f32 0.0, %v685
        %v687 = vpop.f32.mrf.mxu0
        %v688 = vadd.f32 0.0, %v687
        %689 = vmatmul.bf16.gmra.mxu0 %v525
        %v690 = vpop.f32.mrf.mxu0
        %v691 = vadd.f32 0.0, %v690
        %v692 = vpop.f32.mrf.mxu0
        %v693 = vadd.f32 0.0, %v692
        %694 = vmatmul.bf16.gmra.mxu0 %v526
        %v695 = vpop.f32.mrf.mxu0
        %v696 = vadd.f32 0.0, %v695
        %v697 = vpop.f32.mrf.mxu0
        %v698 = vadd.f32 0.0, %v697
        %699 = vmatmul.bf16.gmra.mxu0 %v527
        %v700 = vpop.f32.mrf.mxu0
        %v701 = vadd.f32 0.0, %v700
        %v702 = vpop.f32.mrf.mxu0
        %v703 = vadd.f32 0.0, %v702
        %704 = vmatmul.bf16.gmra.mxu0 %v528
        %v705 = vpop.f32.mrf.mxu0
        %v706 = vadd.f32 0.0, %v705
        %v707 = vpop.f32.mrf.mxu0
        %v708 = vadd.f32 0.0, %v707
        %709 = vmatmul.bf16.gmra.mxu0 %v529
        %v710 = vpop.f32.mrf.mxu0
        %v711 = vadd.f32 0.0, %v710
        %v712 = vpop.f32.mrf.mxu0
        %v713 = vadd.f32 0.0, %v712
        %714 = vmatmul.bf16.gmra.mxu0 %v530
        %v715 = vpop.f32.mrf.mxu0
        %v716 = vadd.f32 0.0, %v715
        %v717 = vpop.f32.mrf.mxu0
        %v718 = vadd.f32 0.0, %v717
        %719 = vdwg.mxu0
        %v720 = vmax.f32 %v611, 0.0
        %v721 = vmax.f32 %v613, 0.0
        %v722 = vmax.f32 %v616, 0.0
        %v723 = vmax.f32 %v618, 0.0
        %v724 = vmax.f32 %v621, 0.0
        %v725 = vmax.f32 %v623, 0.0
        %v726 = vmax.f32 %v626, 0.0
        %v727 = vmax.f32 %v628, 0.0
        %v728 = vmax.f32 %v631, 0.0
        %v729 = vmax.f32 %v633, 0.0
        %v730 = vmax.f32 %v636, 0.0
        %v731 = vmax.f32 %v638, 0.0
        %v732 = vmax.f32 %v641, 0.0
        %v733 = vmax.f32 %v643, 0.0
        %v734 = vmax.f32 %v646, 0.0
        %v735 = vmax.f32 %v648, 0.0
        %v736 = vmax.f32 %v651, 0.0
        %v737 = vmax.f32 %v653, 0.0
        %v738 = vmax.f32 %v656, 0.0
        %v739 = vmax.f32 %v658, 0.0
        %v740 = vmax.f32 %v661, 0.0
        %v741 = vmax.f32 %v663, 0.0
        %v742 = vmax.f32 %v666, 0.0
        %v743 = vmax.f32 %v668, 0.0
        %v744 = vmax.f32 %v671, 0.0
        %v745 = vmax.f32 %v673, 0.0
        %v746 = vmax.f32 %v676, 0.0
        %v747 = vmax.f32 %v678, 0.0
        %v748 = vmax.f32 %v681, 0.0
        %v749 = vmax.f32 %v683, 0.0
        %v750 = vmax.f32 %v686, 0.0
        %v751 = vmax.f32 %v688, 0.0
        %v752 = vmax.f32 %v691, 0.0
        %v753 = vmax.f32 %v693, 0.0
        %v754 = vmax.f32 %v696, 0.0
        %v755 = vmax.f32 %v698, 0.0
        %v756 = vmax.f32 %v701, 0.0
        %v757 = vmax.f32 %v703, 0.0
        %v758 = vmax.f32 %v706, 0.0
        %v759 = vmax.f32 %v708, 0.0
        %v760 = vmax.f32 %v711, 0.0
        %v761 = vmax.f32 %v713, 0.0
        %v762 = vmax.f32 %v716, 0.0
        %v763 = vmax.f32 %v718, 0.0
        %v764 = vpack.c.bf16 %v721, %v720
        %v765 = vpack.c.bf16 %v723, %v722
        %v766 = vpack.c.bf16 %v725, %v724
        %v767 = vpack.c.bf16 %v727, %v726
        %v768 = vpack.c.bf16 %v729, %v728
        %v769 = vpack.c.bf16 %v731, %v730
        %v770 = vpack.c.bf16 %v733, %v732
        %v771 = vpack.c.bf16 %v735, %v734
        %v772 = vpack.c.bf16 %v737, %v736
        %v773 = vpack.c.bf16 %v739, %v738
        %v774 = vpack.c.bf16 %v741, %v740
        %v775 = vpack.c.bf16 %v743, %v742
        %v776 = vpack.c.bf16 %v745, %v744
        %v777 = vpack.c.bf16 %v747, %v746
        %v778 = vpack.c.bf16 %v749, %v748
        %v779 = vpack.c.bf16 %v751, %v750
        %v780 = vpack.c.bf16 %v753, %v752
        %v781 = vpack.c.bf16 %v755, %v754
        %v782 = vpack.c.bf16 %v757, %v756
        %v783 = vpack.c.bf16 %v759, %v758
        %v784 = vpack.c.bf16 %v761, %v760
        %v785 = vpack.c.bf16 %v763, %v762
        %v786 = vld [vmem:[#allocation8] sm:$0xf]
        %v787 = vld [vmem:[#allocation8 + $0x4] sm:$0xf]
        %v788 = vld [vmem:[#allocation8 + $0x8] sm:$0xf]
        %v789 = vld [vmem:[#allocation8 + $0xc] sm:$0xf]
        %v790 = vld [vmem:[#allocation8 + $0x10] sm:$0xf]
        %v791 = vld [vmem:[#allocation8 + $0x14] sm:$0xf]
        %v792 = vld [vmem:[#allocation8 + $0x18] sm:$0xf]
        %v793 = vld [vmem:[#allocation8 + $0x1c] sm:$0xf]
        %v794 = vld [vmem:[#allocation8 + $0x20] sm:$0xf]
        %v795 = vld [vmem:[#allocation8 + $0x24] sm:$0xf]
        %v796 = vld [vmem:[#allocation8 + $0x28] sm:$0xf]
        %v797 = vld [vmem:[#allocation8 + $0x2c] sm:$0xf]
        %v798 = vld [vmem:[#allocation8 + $0x30] sm:$0xf]
        %v799 = vld [vmem:[#allocation8 + $0x34] sm:$0xf]
        %v800 = vld [vmem:[#allocation8 + $0x38] sm:$0xf]
        %v801 = vld [vmem:[#allocation8 + $0x3c] sm:$0xf]
        %v802 = vrot.slane %v720, 5
        %v803 = vrot.slane %v721, 5
        %v804 = vrot.slane %v722, 5
        %v805 = vrot.slane %v723, 5
        %v806 = vrot.slane %v724, 5
        %v807 = vrot.slane %v725, 5
        %v808 = vrot.slane %v726, 5
        %v809 = vrot.slane %v727, 5
        %v810 = vrot.slane %v728, 5
        %v811 = vrot.slane %v729, 5
        %v812 = vrot.slane %v730, 5
        %v813 = vrot.slane %v731, 5
        %v814 = vrot.slane %v732, 5
        %v815 = vrot.slane %v733, 5
        %v816 = vrot.slane %v734, 5
        %v817 = vrot.slane %v735, 5
        %v818 = vrot.slane %v736, 5
        %v819 = vrot.slane %v737, 5
        %v820 = vrot.slane %v738, 5
        %v821 = vrot.slane %v739, 5
        %v822 = vrot.slane %v740, 5
        %v823 = vrot.slane %v741, 5
        %v824 = vrot.slane %v742, 5
        %v825 = vrot.slane %v743, 5
        %v826 = vrot.slane %v744, 5
        %v827 = vrot.slane %v745, 5
        %v828 = vrot.slane %v746, 5
        %v829 = vrot.slane %v747, 5
        %v830 = vrot.slane %v748, 5
        %v831 = vrot.slane %v749, 5
        %v832 = vrot.slane %v750, 5
        %v833 = vrot.slane %v751, 5
        %v834 = vrot.slane %v752, 5
        %v835 = vrot.slane %v753, 5
        %v836 = vrot.slane %v754, 5
        %v837 = vrot.slane %v755, 5
        %v838 = vrot.slane %v756, 5
        %v839 = vrot.slane %v757, 5
        %v840 = vrot.slane %v758, 5
        %v841 = vrot.slane %v759, 5
        %v842 = vrot.slane %v760, 5
        %v843 = vrot.slane %v761, 5
        %v844 = vrot.slane %v762, 5
        %v845 = vrot.slane %v763, 5
        %v846 = vlaneseq
        %v847 = vshrl.u32 %v846, 7
        %vm848 = vcmp.lt.s32.totalorder %v847, 3
        %v849 = vsel %vm848, %v844, %v845
        %v850 = vsel %vm848, %v843, %v844
        %v851 = vsel %vm848, %v842, %v843
        %v852 = vsel %vm848, %v841, %v842
        %v853 = vsel %vm848, %v840, %v841
        %v854 = vsel %vm848, %v839, %v840
        %v855 = vsel %vm848, %v838, %v839
        %v856 = vsel %vm848, %v837, %v838
        %v857 = vsel %vm848, %v836, %v837
        %v858 = vsel %vm848, %v835, %v836
        %v859 = vsel %vm848, %v834, %v835
        %v860 = vsel %vm848, %v833, %v834
        %v861 = vsel %vm848, %v832, %v833
        %v862 = vsel %vm848, %v831, %v832
        %v863 = vsel %vm848, %v830, %v831
        %v864 = vsel %vm848, %v829, %v830
        %v865 = vsel %vm848, %v828, %v829
        %v866 = vsel %vm848, %v827, %v828
        %v867 = vsel %vm848, %v826, %v827
        %v868 = vsel %vm848, %v825, %v826
        %v869 = vsel %vm848, %v824, %v825
        %v870 = vsel %vm848, %v823, %v824
        %v871 = vsel %vm848, %v822, %v823
        %v872 = vsel %vm848, %v821, %v822
        %v873 = vsel %vm848, %v820, %v821
        %v874 = vsel %vm848, %v819, %v820
        %v875 = vsel %vm848, %v818, %v819
        %v876 = vsel %vm848, %v817, %v818
        %v877 = vsel %vm848, %v816, %v817
        %v878 = vsel %vm848, %v815, %v816
        %v879 = vsel %vm848, %v814, %v815
        %v880 = vsel %vm848, %v813, %v814
        %v881 = vsel %vm848, %v812, %v813
        %v882 = vsel %vm848, %v811, %v812
        %v883 = vsel %vm848, %v810, %v811
        %v884 = vsel %vm848, %v809, %v810
        %v885 = vsel %vm848, %v808, %v809
        %v886 = vsel %vm848, %v807, %v808
        %v887 = vsel %vm848, %v806, %v807
        %v888 = vsel %vm848, %v805, %v806
        %v889 = vsel %vm848, %v804, %v805
        %v890 = vsel %vm848, %v803, %v804
        %v891 = vsel %vm848, %v802, %v803
        %v892 = vsel %vm848, %v845, %v802
        %v893 = vpack.c.bf16 %v850, %v850
        %v894 = vpack.c.bf16 %v849, %v849
        %v895 = vpack.c.bf16 %v892, %v892
        %v896 = vpack.c.bf16 %v891, %v891
        %v897 = vpack.c.bf16 %v890, %v890
        %v898 = vpack.c.bf16 %v889, %v889
        %v899 = vpack.c.bf16 %v888, %v888
        %v900 = vpack.c.bf16 %v887, %v887
        %v901 = vpack.c.bf16 %v886, %v886
        %v902 = vpack.c.bf16 %v885, %v885
        %v903 = vpack.c.bf16 %v884, %v884
        %v904 = vpack.c.bf16 %v883, %v883
        %v905 = vpack.c.bf16 %v882, %v882
        %v906 = vpack.c.bf16 %v881, %v881
        %v907 = vpack.c.bf16 %v880, %v880
        %v908 = vpack.c.bf16 %v879, %v879
        %v909 = vpack.c.bf16 %v878, %v878
        %v910 = vpack.c.bf16 %v877, %v877
        %v911 = vpack.c.bf16 %v876, %v876
        %v912 = vpack.c.bf16 %v875, %v875
        %v913 = vpack.c.bf16 %v874, %v874
        %v914 = vpack.c.bf16 %v873, %v873
        %v915 = vpack.c.bf16 %v872, %v872
        %v916 = vpack.c.bf16 %v871, %v871
        %v917 = vpack.c.bf16 %v870, %v870
        %v918 = vpack.c.bf16 %v869, %v869
        %v919 = vpack.c.bf16 %v868, %v868
        %v920 = vpack.c.bf16 %v867, %v867
        %v921 = vpack.c.bf16 %v866, %v866
        %v922 = vpack.c.bf16 %v865, %v865
        %v923 = vpack.c.bf16 %v864, %v864
        %v924 = vpack.c.bf16 %v863, %v863
        %v925 = vpack.c.bf16 %v862, %v862
        %v926 = vpack.c.bf16 %v861, %v861
        %v927 = vpack.c.bf16 %v860, %v860
        %v928 = vpack.c.bf16 %v859, %v859
        %v929 = vpack.c.bf16 %v858, %v858
        %v930 = vpack.c.bf16 %v857, %v857
        %v931 = vpack.c.bf16 %v856, %v856
        %v932 = vpack.c.bf16 %v855, %v855
        %v933 = vpack.c.bf16 %v854, %v854
        %v934 = vpack.c.bf16 %v853, %v853
        %v935 = vpack.c.bf16 %v852, %v852
        %v936 = vpack.c.bf16 %v851, %v851
        %v937 = vrot.slane %v720, 6
        %v938 = vrot.slane %v721, 6
        %v939 = vrot.slane %v722, 6
        %v940 = vrot.slane %v723, 6
        %v941 = vrot.slane %v724, 6
        %v942 = vrot.slane %v725, 6
        %v943 = vrot.slane %v726, 6
        %v944 = vrot.slane %v727, 6
        %v945 = vrot.slane %v728, 6
        %v946 = vrot.slane %v729, 6
        %v947 = vrot.slane %v730, 6
        %v948 = vrot.slane %v731, 6
        %v949 = vrot.slane %v732, 6
        %v950 = vrot.slane %v733, 6
        %v951 = vrot.slane %v734, 6
        %v952 = vrot.slane %v735, 6
        %v953 = vrot.slane %v736, 6
        %v954 = vrot.slane %v737, 6
        %v955 = vrot.slane %v738, 6
        %v956 = vrot.slane %v739, 6
        %v957 = vrot.slane %v740, 6
        %v958 = vrot.slane %v741, 6
        %v959 = vrot.slane %v742, 6
        %v960 = vrot.slane %v743, 6
        %v961 = vrot.slane %v744, 6
        %v962 = vrot.slane %v745, 6
        %v963 = vrot.slane %v746, 6
        %v964 = vrot.slane %v747, 6
        %v965 = vrot.slane %v748, 6
        %v966 = vrot.slane %v749, 6
        %v967 = vrot.slane %v750, 6
        %v968 = vrot.slane %v751, 6
        %v969 = vrot.slane %v752, 6
        %v970 = vrot.slane %v753, 6
        %v971 = vrot.slane %v754, 6
        %v972 = vrot.slane %v755, 6
        %v973 = vrot.slane %v756, 6
        %v974 = vrot.slane %v757, 6
        %v975 = vrot.slane %v758, 6
        %v976 = vrot.slane %v759, 6
        %v977 = vrot.slane %v760, 6
        %v978 = vrot.slane %v761, 6
        %v979 = vrot.slane %v762, 6
        %v980 = vrot.slane %v763, 6
        %vm981 = vcmp.lt.s32.totalorder %v847, 2
        %v982 = vsel %vm981, %v979, %v980
        %v983 = vsel %vm981, %v978, %v979
        %v984 = vsel %vm981, %v977, %v978
        %v985 = vsel %vm981, %v976, %v977
        %v986 = vsel %vm981, %v975, %v976
        %v987 = vsel %vm981, %v974, %v975
        %v988 = vsel %vm981, %v973, %v974
        %v989 = vsel %vm981, %v972, %v973
        %v990 = vsel %vm981, %v971, %v972
        %v991 = vsel %vm981, %v970, %v971
        %v992 = vsel %vm981, %v969, %v970
        %v993 = vsel %vm981, %v968, %v969
        %v994 = vsel %vm981, %v967, %v968
        %v995 = vsel %vm981, %v966, %v967
        %v996 = vsel %vm981, %v965, %v966
        %v997 = vsel %vm981, %v964, %v965
        %v998 = vsel %vm981, %v963, %v964
        %v999 = vsel %vm981, %v962, %v963
        %v1000 = vsel %vm981, %v961, %v962
        %v1001 = vsel %vm981, %v960, %v961
        %v1002 = vsel %vm981, %v959, %v960
        %v1003 = vsel %vm981, %v958, %v959
        %v1004 = vsel %vm981, %v957, %v958
        %v1005 = vsel %vm981, %v956, %v957
        %v1006 = vsel %vm981, %v955, %v956
        %v1007 = vsel %vm981, %v954, %v955
        %v1008 = vsel %vm981, %v953, %v954
        %v1009 = vsel %vm981, %v952, %v953
        %v1010 = vsel %vm981, %v951, %v952
        %v1011 = vsel %vm981, %v950, %v951
        %v1012 = vsel %vm981, %v949, %v950
        %v1013 = vsel %vm981, %v948, %v949
        %v1014 = vsel %vm981, %v947, %v948
        %v1015 = vsel %vm981, %v946, %v947
        %v1016 = vsel %vm981, %v945, %v946
        %v1017 = vsel %vm981, %v944, %v945
        %v1018 = vsel %vm981, %v943, %v944
        %v1019 = vsel %vm981, %v942, %v943
        %v1020 = vsel %vm981, %v941, %v942
        %v1021 = vsel %vm981, %v940, %v941
        %v1022 = vsel %vm981, %v939, %v940
        %v1023 = vsel %vm981, %v938, %v939
        %v1024 = vsel %vm981, %v937, %v938
        %v1025 = vsel %vm981, %v980, %v937
        %v1026 = vpack.c.bf16 %v983, %v983
        %v1027 = vpack.c.bf16 %v982, %v982
        %v1028 = vpack.c.bf16 %v1025, %v1025
        %v1029 = vpack.c.bf16 %v1024, %v1024
        %v1030 = vpack.c.bf16 %v1023, %v1023
        %v1031 = vpack.c.bf16 %v1022, %v1022
        %v1032 = vpack.c.bf16 %v1021, %v1021
        %v1033 = vpack.c.bf16 %v1020, %v1020
        %v1034 = vpack.c.bf16 %v1019, %v1019
        %v1035 = vpack.c.bf16 %v1018, %v1018
        %v1036 = vpack.c.bf16 %v1017, %v1017
        %v1037 = vpack.c.bf16 %v1016, %v1016
        %v1038 = vpack.c.bf16 %v1015, %v1015
        %v1039 = vpack.c.bf16 %v1014, %v1014
        %v1040 = vpack.c.bf16 %v1013, %v1013
        %v1041 = vpack.c.bf16 %v1012, %v1012
        %v1042 = vpack.c.bf16 %v1011, %v1011
        %v1043 = vpack.c.bf16 %v1010, %v1010
        %v1044 = vpack.c.bf16 %v1009, %v1009
        %v1045 = vpack.c.bf16 %v1008, %v1008
        %v1046 = vpack.c.bf16 %v1007, %v1007
        %v1047 = vpack.c.bf16 %v1006, %v1006
        %v1048 = vpack.c.bf16 %v1005, %v1005
        %v1049 = vpack.c.bf16 %v1004, %v1004
        %v1050 = vpack.c.bf16 %v1003, %v1003
        %v1051 = vpack.c.bf16 %v1002, %v1002
        %v1052 = vpack.c.bf16 %v1001, %v1001
        %v1053 = vpack.c.bf16 %v1000, %v1000
        %v1054 = vpack.c.bf16 %v999, %v999
        %v1055 = vpack.c.bf16 %v998, %v998
        %v1056 = vpack.c.bf16 %v997, %v997
        %v1057 = vpack.c.bf16 %v996, %v996
        %v1058 = vpack.c.bf16 %v995, %v995
        %v1059 = vpack.c.bf16 %v994, %v994
        %v1060 = vpack.c.bf16 %v993, %v993
        %v1061 = vpack.c.bf16 %v992, %v992
        %v1062 = vpack.c.bf16 %v991, %v991
        %v1063 = vpack.c.bf16 %v990, %v990
        %v1064 = vpack.c.bf16 %v989, %v989
        %v1065 = vpack.c.bf16 %v988, %v988
        %v1066 = vpack.c.bf16 %v987, %v987
        %v1067 = vpack.c.bf16 %v986, %v986
        %v1068 = vpack.c.bf16 %v985, %v985
        %v1069 = vpack.c.bf16 %v984, %v984
        %v1114 = vunpack.c.l.b16 %v893
        %v1115 = vunpack.c.l.b16 %v894
        %v1116 = vunpack.c.l.b16 %v895
        %v1117 = vunpack.c.l.b16 %v896
        %v1118 = vunpack.c.l.b16 %v897
        %v1119 = vunpack.c.l.b16 %v898
        %v1120 = vunpack.c.l.b16 %v899
        %v1121 = vunpack.c.l.b16 %v900
        %v1122 = vunpack.c.l.b16 %v901
        %v1123 = vunpack.c.l.b16 %v902
        %v1124 = vunpack.c.l.b16 %v903
        %v1125 = vunpack.c.l.b16 %v904
        %v1126 = vunpack.c.l.b16 %v905
        %v1127 = vunpack.c.l.b16 %v906
        %v1128 = vunpack.c.l.b16 %v907
        %v1129 = vunpack.c.l.b16 %v908
        %v1130 = vunpack.c.l.b16 %v909
        %v1131 = vunpack.c.l.b16 %v910
        %v1132 = vunpack.c.l.b16 %v911
        %v1133 = vunpack.c.l.b16 %v912
        %v1134 = vunpack.c.l.b16 %v913
        %v1135 = vunpack.c.l.b16 %v914
        %v1136 = vunpack.c.l.b16 %v915
        %v1137 = vunpack.c.l.b16 %v916
        %v1138 = vunpack.c.l.b16 %v917
        %v1139 = vunpack.c.l.b16 %v918
        %v1140 = vunpack.c.l.b16 %v919
        %v1141 = vunpack.c.l.b16 %v920
        %v1142 = vunpack.c.l.b16 %v921
        %v1143 = vunpack.c.l.b16 %v922
        %v1144 = vunpack.c.l.b16 %v923
        %v1145 = vunpack.c.l.b16 %v924
        %v1146 = vunpack.c.l.b16 %v925
        %v1147 = vunpack.c.l.b16 %v926
        %v1148 = vunpack.c.l.b16 %v927
        %v1149 = vunpack.c.l.b16 %v928
        %v1150 = vunpack.c.l.b16 %v929
        %v1151 = vunpack.c.l.b16 %v930
        %v1152 = vunpack.c.l.b16 %v931
        %v1153 = vunpack.c.l.b16 %v932
        %v1154 = vunpack.c.l.b16 %v933
        %v1155 = vunpack.c.l.b16 %v934
        %v1156 = vunpack.c.l.b16 %v935
        %v1157 = vunpack.c.l.b16 %v936
        %v1158 = vpack.c.b16 %v1115, %v1114
        %v1159 = vpack.c.b16 %v1117, %v1116
        %v1160 = vpack.c.b16 %v1119, %v1118
        %v1161 = vpack.c.b16 %v1121, %v1120
        %v1162 = vpack.c.b16 %v1123, %v1122
        %v1163 = vpack.c.b16 %v1125, %v1124
        %v1164 = vpack.c.b16 %v1127, %v1126
        %v1165 = vpack.c.b16 %v1129, %v1128
        %v1166 = vpack.c.b16 %v1131, %v1130
        %v1167 = vpack.c.b16 %v1133, %v1132
        %v1168 = vpack.c.b16 %v1135, %v1134
        %v1169 = vpack.c.b16 %v1137, %v1136
        %v1170 = vpack.c.b16 %v1139, %v1138
        %v1171 = vpack.c.b16 %v1141, %v1140
        %v1172 = vpack.c.b16 %v1143, %v1142
        %v1173 = vpack.c.b16 %v1145, %v1144
        %v1174 = vpack.c.b16 %v1147, %v1146
        %v1175 = vpack.c.b16 %v1149, %v1148
        %v1176 = vpack.c.b16 %v1151, %v1150
        %v1177 = vpack.c.b16 %v1153, %v1152
        %v1178 = vpack.c.b16 %v1155, %v1154
        %v1179 = vpack.c.b16 %v1157, %v1156
        %v1246 = vunpack.c.l.b16 %v1026
        %v1247 = vunpack.c.l.b16 %v1027
        %v1248 = vunpack.c.l.b16 %v1028
        %v1249 = vunpack.c.l.b16 %v1029
        %v1250 = vunpack.c.l.b16 %v1030
        %v1251 = vunpack.c.l.b16 %v1031
        %v1252 = vunpack.c.l.b16 %v1032
        %v1253 = vunpack.c.l.b16 %v1033
        %v1254 = vunpack.c.l.b16 %v1034
        %v1255 = vunpack.c.l.b16 %v1035
        %v1256 = vunpack.c.l.b16 %v1036
        %v1257 = vunpack.c.l.b16 %v1037
        %v1258 = vunpack.c.l.b16 %v1038
        %v1259 = vunpack.c.l.b16 %v1039
        %v1260 = vunpack.c.l.b16 %v1040
        %v1261 = vunpack.c.l.b16 %v1041
        %v1262 = vunpack.c.l.b16 %v1042
        %v1263 = vunpack.c.l.b16 %v1043
        %v1264 = vunpack.c.l.b16 %v1044
        %v1265 = vunpack.c.l.b16 %v1045
        %v1266 = vunpack.c.l.b16 %v1046
        %v1267 = vunpack.c.l.b16 %v1047
        %v1268 = vunpack.c.l.b16 %v1048
        %v1269 = vunpack.c.l.b16 %v1049
        %v1270 = vunpack.c.l.b16 %v1050
        %v1271 = vunpack.c.l.b16 %v1051
        %v1272 = vunpack.c.l.b16 %v1052
        %v1273 = vunpack.c.l.b16 %v1053
        %v1274 = vunpack.c.l.b16 %v1054
        %v1275 = vunpack.c.l.b16 %v1055
        %v1276 = vunpack.c.l.b16 %v1056
        %v1277 = vunpack.c.l.b16 %v1057
        %v1278 = vunpack.c.l.b16 %v1058
        %v1279 = vunpack.c.l.b16 %v1059
        %v1280 = vunpack.c.l.b16 %v1060
        %v1281 = vunpack.c.l.b16 %v1061
        %v1282 = vunpack.c.l.b16 %v1062
        %v1283 = vunpack.c.l.b16 %v1063
        %v1284 = vunpack.c.l.b16 %v1064
        %v1285 = vunpack.c.l.b16 %v1065
        %v1286 = vunpack.c.l.b16 %v1066
        %v1287 = vunpack.c.l.b16 %v1067
        %v1288 = vunpack.c.l.b16 %v1068
        %v1289 = vunpack.c.l.b16 %v1069
        %v1290 = vpack.c.b16 %v1247, %v1246
        %v1291 = vpack.c.b16 %v1249, %v1248
        %v1292 = vpack.c.b16 %v1251, %v1250
        %v1293 = vpack.c.b16 %v1253, %v1252
        %v1294 = vpack.c.b16 %v1255, %v1254
        %v1295 = vpack.c.b16 %v1257, %v1256
        %v1296 = vpack.c.b16 %v1259, %v1258
        %v1297 = vpack.c.b16 %v1261, %v1260
        %v1298 = vpack.c.b16 %v1263, %v1262
        %v1299 = vpack.c.b16 %v1265, %v1264
        %v1300 = vpack.c.b16 %v1267, %v1266
        %v1301 = vpack.c.b16 %v1269, %v1268
        %v1302 = vpack.c.b16 %v1271, %v1270
        %v1303 = vpack.c.b16 %v1273, %v1272
        %v1304 = vpack.c.b16 %v1275, %v1274
        %v1305 = vpack.c.b16 %v1277, %v1276
        %v1306 = vpack.c.b16 %v1279, %v1278
        %v1307 = vpack.c.b16 %v1281, %v1280
        %v1308 = vpack.c.b16 %v1283, %v1282
        %v1309 = vpack.c.b16 %v1285, %v1284
        %v1310 = vpack.c.b16 %v1287, %v1286
        %v1311 = vpack.c.b16 %v1289, %v1288
        %v1334 = vld [vmem:[#allocation7] sm:$0xf]
        %v1335 = vld [vmem:[#allocation7 + $0x4] sm:$0xf]
        %v1336 = vld [vmem:[#allocation7 + $0x8] sm:$0xf]
        %v1337 = vld [vmem:[#allocation7 + $0xc] sm:$0xf]
        %v1338 = vld [vmem:[#allocation7 + $0x10] sm:$0xf]
        %v1339 = vld [vmem:[#allocation7 + $0x14] sm:$0xf]
        %v1340 = vld [vmem:[#allocation7 + $0x18] sm:$0xf]
        %v1341 = vld [vmem:[#allocation7 + $0x1c] sm:$0xf]
        %v1342 = vld [vmem:[#allocation7 + $0x20] sm:$0xf]
        %v1343 = vld [vmem:[#allocation7 + $0x24] sm:$0xf]
        %v1344 = vld [vmem:[#allocation7 + $0x28] sm:$0xf]
        %v1345 = vld [vmem:[#allocation7 + $0x2c] sm:$0xf]
        %v1346 = vld [vmem:[#allocation7 + $0x30] sm:$0xf]
        %v1347 = vld [vmem:[#allocation7 + $0x34] sm:$0xf]
        %v1348 = vld [vmem:[#allocation7 + $0x38] sm:$0xf]
        %v1349 = vld [vmem:[#allocation7 + $0x3c] sm:$0xf]
        %v1350 = vld [vmem:[#allocation7 + $0x40] sm:$0xf]
        %v1351 = vld [vmem:[#allocation7 + $0x44] sm:$0xf]
        %v1352 = vld [vmem:[#allocation7 + $0x48] sm:$0xf]
        %v1353 = vld [vmem:[#allocation7 + $0x4c] sm:$0xf]
        %v1354 = vld [vmem:[#allocation7 + $0x50] sm:$0xf]
        %v1355 = vld [vmem:[#allocation7 + $0x54] sm:$0xf]
        %v1356 = vld [vmem:[#allocation7 + $0x58] sm:$0xf]
        %v1357 = vld [vmem:[#allocation7 + $0x5c] sm:$0xf]
        %v1358 = vld [vmem:[#allocation7 + $0x60] sm:$0xf]
        %v1359 = vld [vmem:[#allocation7 + $0x64] sm:$0xf]
        %v1360 = vld [vmem:[#allocation7 + $0x68] sm:$0xf]
        %v1361 = vld [vmem:[#allocation7 + $0x6c] sm:$0xf]
        %v1362 = vld [vmem:[#allocation7 + $0x70] sm:$0xf]
        %v1363 = vld [vmem:[#allocation7 + $0x74] sm:$0xf]
        %v1364 = vld [vmem:[#allocation7 + $0x78] sm:$0xf]
        %v1365 = vld [vmem:[#allocation7 + $0x7c] sm:$0xf]
        %v1398 = vunpack.c.l.b16 %v1334
        %v1399 = vunpack.c.l.b16 %v1335
        %v1400 = vunpack.c.l.b16 %v1336
        %v1401 = vunpack.c.l.b16 %v1337
        %v1402 = vunpack.c.l.b16 %v1338
        %v1403 = vunpack.c.l.b16 %v1339
        %v1404 = vunpack.c.l.b16 %v1340
        %v1405 = vunpack.c.l.b16 %v1341
        %v1406 = vunpack.c.l.b16 %v1342
        %v1407 = vunpack.c.l.b16 %v1343
        %v1408 = vunpack.c.l.b16 %v1344
        %v1409 = vunpack.c.l.b16 %v1345
        %v1410 = vunpack.c.l.b16 %v1346
        %v1411 = vunpack.c.l.b16 %v1347
        %v1412 = vunpack.c.l.b16 %v1348
        %v1413 = vunpack.c.l.b16 %v1349
        %v1414 = vunpack.c.l.b16 %v1350
        %v1415 = vunpack.c.l.b16 %v1351
        %v1416 = vunpack.c.l.b16 %v1352
        %v1417 = vunpack.c.l.b16 %v1353
        %v1418 = vunpack.c.l.b16 %v1354
        %v1419 = vunpack.c.l.b16 %v1355
        %v1420 = vunpack.c.l.b16 %v1356
        %v1421 = vunpack.c.l.b16 %v1357
        %v1422 = vunpack.c.l.b16 %v1358
        %v1423 = vunpack.c.l.b16 %v1359
        %v1424 = vunpack.c.l.b16 %v1360
        %v1425 = vunpack.c.l.b16 %v1361
        %v1426 = vunpack.c.l.b16 %v1362
        %v1427 = vunpack.c.l.b16 %v1363
        %v1428 = vunpack.c.l.b16 %v1364
        %v1429 = vunpack.c.l.b16 %v1365
        %v1430 = vpack.c.b16 %v1399, %v1398
        %v1431 = vpack.c.b16 %v1401, %v1400
        %v1432 = vpack.c.b16 %v1403, %v1402
        %v1433 = vpack.c.b16 %v1405, %v1404
        %v1434 = vpack.c.b16 %v1407, %v1406
        %v1435 = vpack.c.b16 %v1409, %v1408
        %v1436 = vpack.c.b16 %v1411, %v1410
        %v1437 = vpack.c.b16 %v1413, %v1412
        %v1438 = vpack.c.b16 %v1415, %v1414
        %v1439 = vpack.c.b16 %v1417, %v1416
        %v1440 = vpack.c.b16 %v1419, %v1418
        %v1441 = vpack.c.b16 %v1421, %v1420
        %v1442 = vpack.c.b16 %v1423, %v1422
        %v1443 = vpack.c.b16 %v1425, %v1424
        %v1444 = vpack.c.b16 %v1427, %v1426
        %v1445 = vpack.c.b16 %v1429, %v1428
        %1462 = vmatpush.bf16.msra.mxu0 %v1437
        %1463 = vmatpush.bf16.msra.mxu0 %v1436
        %1464 = vmatpush.bf16.msra.mxu0 %v1435
        %1465 = vmatpush.bf16.msra.mxu0 %v1434
        %1466 = vmatpush.bf16.msra.mxu0 %v1433
        %1467 = vmatpush.bf16.msra.mxu0 %v1432
        %1468 = vmatpush.bf16.msra.mxu0 %v1431
        %1469 = vmatpush.bf16.msra.mxu0 %v1430
        %1470 = vmatmul.bf16.gmra.mxu0 %v1158
        %v1471 = vpop.f32.mrf.mxu0
        %v1472 = vadd.f32 0.0, %v1471
        %v1473 = vpop.f32.mrf.mxu0
        %v1474 = vadd.f32 0.0, %v1473
        %1475 = vmatmul.bf16.gmra.mxu0 %v1159
        %v1476 = vpop.f32.mrf.mxu0
        %v1477 = vadd.f32 0.0, %v1476
        %v1478 = vpop.f32.mrf.mxu0
        %v1479 = vadd.f32 0.0, %v1478
        %1480 = vmatmul.bf16.gmra.mxu0 %v1160
        %v1481 = vpop.f32.mrf.mxu0
        %v1482 = vadd.f32 0.0, %v1481
        %v1483 = vpop.f32.mrf.mxu0
        %v1484 = vadd.f32 0.0, %v1483
        %1485 = vmatmul.bf16.gmra.mxu0 %v1161
        %v1486 = vpop.f32.mrf.mxu0
        %v1487 = vadd.f32 0.0, %v1486
        %v1488 = vpop.f32.mrf.mxu0
        %v1489 = vadd.f32 0.0, %v1488
        %1490 = vmatmul.bf16.gmra.mxu0 %v1162
        %v1491 = vpop.f32.mrf.mxu0
        %v1492 = vadd.f32 0.0, %v1491
        %v1493 = vpop.f32.mrf.mxu0
        %v1494 = vadd.f32 0.0, %v1493
        %1495 = vmatmul.bf16.gmra.mxu0 %v1163
        %v1496 = vpop.f32.mrf.mxu0
        %v1497 = vadd.f32 0.0, %v1496
        %v1498 = vpop.f32.mrf.mxu0
        %v1499 = vadd.f32 0.0, %v1498
        %1500 = vmatmul.bf16.gmra.mxu0 %v1164
        %v1501 = vpop.f32.mrf.mxu0
        %v1502 = vadd.f32 0.0, %v1501
        %v1503 = vpop.f32.mrf.mxu0
        %v1504 = vadd.f32 0.0, %v1503
        %1505 = vmatmul.bf16.gmra.mxu0 %v1165
        %v1506 = vpop.f32.mrf.mxu0
        %v1507 = vadd.f32 0.0, %v1506
        %v1508 = vpop.f32.mrf.mxu0
        %v1509 = vadd.f32 0.0, %v1508
        %1510 = vmatmul.bf16.gmra.mxu0 %v1166
        %v1511 = vpop.f32.mrf.mxu0
        %v1512 = vadd.f32 0.0, %v1511
        %v1513 = vpop.f32.mrf.mxu0
        %v1514 = vadd.f32 0.0, %v1513
        %1515 = vmatmul.bf16.gmra.mxu0 %v1167
        %v1516 = vpop.f32.mrf.mxu0
        %v1517 = vadd.f32 0.0, %v1516
        %v1518 = vpop.f32.mrf.mxu0
        %v1519 = vadd.f32 0.0, %v1518
        %1520 = vmatmul.bf16.gmra.mxu0 %v1168
        %v1521 = vpop.f32.mrf.mxu0
        %v1522 = vadd.f32 0.0, %v1521
        %v1523 = vpop.f32.mrf.mxu0
        %v1524 = vadd.f32 0.0, %v1523
        %1525 = vmatmul.bf16.gmra.mxu0 %v1169
        %v1526 = vpop.f32.mrf.mxu0
        %v1527 = vadd.f32 0.0, %v1526
        %v1528 = vpop.f32.mrf.mxu0
        %v1529 = vadd.f32 0.0, %v1528
        %1530 = vmatmul.bf16.gmra.mxu0 %v1170
        %v1531 = vpop.f32.mrf.mxu0
        %v1532 = vadd.f32 0.0, %v1531
        %v1533 = vpop.f32.mrf.mxu0
        %v1534 = vadd.f32 0.0, %v1533
        %1535 = vmatmul.bf16.gmra.mxu0 %v1171
        %v1536 = vpop.f32.mrf.mxu0
        %v1537 = vadd.f32 0.0, %v1536
        %v1538 = vpop.f32.mrf.mxu0
        %v1539 = vadd.f32 0.0, %v1538
        %1540 = vmatmul.bf16.gmra.mxu0 %v1172
        %v1541 = vpop.f32.mrf.mxu0
        %v1542 = vadd.f32 0.0, %v1541
        %v1543 = vpop.f32.mrf.mxu0
        %v1544 = vadd.f32 0.0, %v1543
        %1545 = vmatmul.bf16.gmra.mxu0 %v1173
        %v1546 = vpop.f32.mrf.mxu0
        %v1547 = vadd.f32 0.0, %v1546
        %v1548 = vpop.f32.mrf.mxu0
        %v1549 = vadd.f32 0.0, %v1548
        %1550 = vmatmul.bf16.gmra.mxu0 %v1174
        %v1551 = vpop.f32.mrf.mxu0
        %v1552 = vadd.f32 0.0, %v1551
        %v1553 = vpop.f32.mrf.mxu0
        %v1554 = vadd.f32 0.0, %v1553
        %1555 = vmatmul.bf16.gmra.mxu0 %v1175
        %v1556 = vpop.f32.mrf.mxu0
        %v1557 = vadd.f32 0.0, %v1556
        %v1558 = vpop.f32.mrf.mxu0
        %v1559 = vadd.f32 0.0, %v1558
        %1560 = vmatmul.bf16.gmra.mxu0 %v1176
        %v1561 = vpop.f32.mrf.mxu0
        %v1562 = vadd.f32 0.0, %v1561
        %v1563 = vpop.f32.mrf.mxu0
        %v1564 = vadd.f32 0.0, %v1563
        %1565 = vmatmul.bf16.gmra.mxu0 %v1177
        %v1566 = vpop.f32.mrf.mxu0
        %v1567 = vadd.f32 0.0, %v1566
        %v1568 = vpop.f32.mrf.mxu0
        %v1569 = vadd.f32 0.0, %v1568
        %1570 = vmatmul.bf16.gmra.mxu0 %v1178
        %v1571 = vpop.f32.mrf.mxu0
        %v1572 = vadd.f32 0.0, %v1571
        %v1573 = vpop.f32.mrf.mxu0
        %v1574 = vadd.f32 0.0, %v1573
        %1575 = vmatmul.bf16.gmra.mxu0 %v1179
        %v1576 = vpop.f32.mrf.mxu0
        %v1577 = vadd.f32 0.0, %v1576
        %v1578 = vpop.f32.mrf.mxu0
        %v1579 = vadd.f32 0.0, %v1578
        %1580 = vdwg.mxu0
        %1581 = vmatpush.bf16.msra.mxu0 %v1445
        %1582 = vmatpush.bf16.msra.mxu0 %v1444
        %1583 = vmatpush.bf16.msra.mxu0 %v1443
        %1584 = vmatpush.bf16.msra.mxu0 %v1442
        %1585 = vmatpush.bf16.msra.mxu0 %v1441
        %1586 = vmatpush.bf16.msra.mxu0 %v1440
        %1587 = vmatpush.bf16.msra.mxu0 %v1439
        %1588 = vmatpush.bf16.msra.mxu0 %v1438
        %1589 = vmatmul.bf16.gmra.mxu0 %v1290
        %v1590 = vpop.f32.mrf.mxu0
        %v1591 = vadd.f32 %v1472, %v1590
        %v1592 = vpop.f32.mrf.mxu0
        %v1593 = vadd.f32 %v1474, %v1592
        %1594 = vmatmul.bf16.gmra.mxu0 %v1291
        %v1595 = vpop.f32.mrf.mxu0
        %v1596 = vadd.f32 %v1477, %v1595
        %v1597 = vpop.f32.mrf.mxu0
        %v1598 = vadd.f32 %v1479, %v1597
        %1599 = vmatmul.bf16.gmra.mxu0 %v1292
        %v1600 = vpop.f32.mrf.mxu0
        %v1601 = vadd.f32 %v1482, %v1600
        %v1602 = vpop.f32.mrf.mxu0
        %v1603 = vadd.f32 %v1484, %v1602
        %1604 = vmatmul.bf16.gmra.mxu0 %v1293
        %v1605 = vpop.f32.mrf.mxu0
        %v1606 = vadd.f32 %v1487, %v1605
        %v1607 = vpop.f32.mrf.mxu0
        %v1608 = vadd.f32 %v1489, %v1607
        %1609 = vmatmul.bf16.gmra.mxu0 %v1294
        %v1610 = vpop.f32.mrf.mxu0
        %v1611 = vadd.f32 %v1492, %v1610
        %v1612 = vpop.f32.mrf.mxu0
        %v1613 = vadd.f32 %v1494, %v1612
        %1614 = vmatmul.bf16.gmra.mxu0 %v1295
        %v1615 = vpop.f32.mrf.mxu0
        %v1616 = vadd.f32 %v1497, %v1615
        %v1617 = vpop.f32.mrf.mxu0
        %v1618 = vadd.f32 %v1499, %v1617
        %1619 = vmatmul.bf16.gmra.mxu0 %v1296
        %v1620 = vpop.f32.mrf.mxu0
        %v1621 = vadd.f32 %v1502, %v1620
        %v1622 = vpop.f32.mrf.mxu0
        %v1623 = vadd.f32 %v1504, %v1622
        %1624 = vmatmul.bf16.gmra.mxu0 %v1297
        %v1625 = vpop.f32.mrf.mxu0
        %v1626 = vadd.f32 %v1507, %v1625
        %v1627 = vpop.f32.mrf.mxu0
        %v1628 = vadd.f32 %v1509, %v1627
        %1629 = vmatmul.bf16.gmra.mxu0 %v1298
        %v1630 = vpop.f32.mrf.mxu0
        %v1631 = vadd.f32 %v1512, %v1630
        %v1632 = vpop.f32.mrf.mxu0
        %v1633 = vadd.f32 %v1514, %v1632
        %1634 = vmatmul.bf16.gmra.mxu0 %v1299
        %v1635 = vpop.f32.mrf.mxu0
        %v1636 = vadd.f32 %v1517, %v1635
        %v1637 = vpop.f32.mrf.mxu0
        %v1638 = vadd.f32 %v1519, %v1637
        %1639 = vmatmul.bf16.gmra.mxu0 %v1300
        %v1640 = vpop.f32.mrf.mxu0
        %v1641 = vadd.f32 %v1522, %v1640
        %v1642 = vpop.f32.mrf.mxu0
        %v1643 = vadd.f32 %v1524, %v1642
        %1644 = vmatmul.bf16.gmra.mxu0 %v1301
        %v1645 = vpop.f32.mrf.mxu0
        %v1646 = vadd.f32 %v1527, %v1645
        %v1647 = vpop.f32.mrf.mxu0
        %v1648 = vadd.f32 %v1529, %v1647
        %1649 = vmatmul.bf16.gmra.mxu0 %v1302
        %v1650 = vpop.f32.mrf.mxu0
        %v1651 = vadd.f32 %v1532, %v1650
        %v1652 = vpop.f32.mrf.mxu0
        %v1653 = vadd.f32 %v1534, %v1652
        %1654 = vmatmul.bf16.gmra.mxu0 %v1303
        %v1655 = vpop.f32.mrf.mxu0
        %v1656 = vadd.f32 %v1537, %v1655
        %v1657 = vpop.f32.mrf.mxu0
        %v1658 = vadd.f32 %v1539, %v1657
        %1659 = vmatmul.bf16.gmra.mxu0 %v1304
        %v1660 = vpop.f32.mrf.mxu0
        %v1661 = vadd.f32 %v1542, %v1660
        %v1662 = vpop.f32.mrf.mxu0
        %v1663 = vadd.f32 %v1544, %v1662
        %1664 = vmatmul.bf16.gmra.mxu0 %v1305
        %v1665 = vpop.f32.mrf.mxu0
        %v1666 = vadd.f32 %v1547, %v1665
        %v1667 = vpop.f32.mrf.mxu0
        %v1668 = vadd.f32 %v1549, %v1667
        %1669 = vmatmul.bf16.gmra.mxu0 %v1306
        %v1670 = vpop.f32.mrf.mxu0
        %v1671 = vadd.f32 %v1552, %v1670
        %v1672 = vpop.f32.mrf.mxu0
        %v1673 = vadd.f32 %v1554, %v1672
        %1674 = vmatmul.bf16.gmra.mxu0 %v1307
        %v1675 = vpop.f32.mrf.mxu0
        %v1676 = vadd.f32 %v1557, %v1675
        %v1677 = vpop.f32.mrf.mxu0
        %v1678 = vadd.f32 %v1559, %v1677
        %1679 = vmatmul.bf16.gmra.mxu0 %v1308
        %v1680 = vpop.f32.mrf.mxu0
        %v1681 = vadd.f32 %v1562, %v1680
        %v1682 = vpop.f32.mrf.mxu0
        %v1683 = vadd.f32 %v1564, %v1682
        %1684 = vmatmul.bf16.gmra.mxu0 %v1309
        %v1685 = vpop.f32.mrf.mxu0
        %v1686 = vadd.f32 %v1567, %v1685
        %v1687 = vpop.f32.mrf.mxu0
        %v1688 = vadd.f32 %v1569, %v1687
        %1689 = vmatmul.bf16.gmra.mxu0 %v1310
        %v1690 = vpop.f32.mrf.mxu0
        %v1691 = vadd.f32 %v1572, %v1690
        %v1692 = vpop.f32.mrf.mxu0
        %v1693 = vadd.f32 %v1574, %v1692
        %1694 = vmatmul.bf16.gmra.mxu0 %v1311
        %v1695 = vpop.f32.mrf.mxu0
        %v1696 = vadd.f32 %v1577, %v1695
        %v1697 = vpop.f32.mrf.mxu0
        %v1698 = vadd.f32 %v1579, %v1697
        %1699 = vdwg.mxu0
        %v1716 = vunpack.c.l.b16 %v786
        %v1717 = vunpack.c.l.b16 %v787
        %v1718 = vunpack.c.l.b16 %v788
        %v1719 = vunpack.c.l.b16 %v789
        %v1720 = vunpack.c.l.b16 %v790
        %v1721 = vunpack.c.l.b16 %v791
        %v1722 = vunpack.c.l.b16 %v792
        %v1723 = vunpack.c.l.b16 %v793
        %v1724 = vunpack.c.l.b16 %v794
        %v1725 = vunpack.c.l.b16 %v795
        %v1726 = vunpack.c.l.b16 %v796
        %v1727 = vunpack.c.l.b16 %v797
        %v1728 = vunpack.c.l.b16 %v798
        %v1729 = vunpack.c.l.b16 %v799
        %v1730 = vunpack.c.l.b16 %v800
        %v1731 = vunpack.c.l.b16 %v801
        %v1732 = vpack.c.b16 %v1717, %v1716
        %v1733 = vpack.c.b16 %v1719, %v1718
        %v1734 = vpack.c.b16 %v1721, %v1720
        %v1735 = vpack.c.b16 %v1723, %v1722
        %v1736 = vpack.c.b16 %v1725, %v1724
        %v1737 = vpack.c.b16 %v1727, %v1726
        %v1738 = vpack.c.b16 %v1729, %v1728
        %v1739 = vpack.c.b16 %v1731, %v1730
        %1748 = vmatpush.bf16.msra.mxu0 %v1739
        %1749 = vmatpush.bf16.msra.mxu0 %v1738
        %1750 = vmatpush.bf16.msra.mxu0 %v1737
        %1751 = vmatpush.bf16.msra.mxu0 %v1736
        %1752 = vmatpush.bf16.msra.mxu0 %v1735
        %1753 = vmatpush.bf16.msra.mxu0 %v1734
        %1754 = vmatpush.bf16.msra.mxu0 %v1733
        %1755 = vmatpush.bf16.msra.mxu0 %v1732
        %1756 = vmatmul.bf16.gmra.mxu0 %v764
        %v1757 = vpop.f32.mrf.mxu0
        %v1758 = vadd.f32 %v1591, %v1757
        %v1759 = vpop.f32.mrf.mxu0
        %v1760 = vadd.f32 %v1593, %v1759
        %1761 = vmatmul.bf16.gmra.mxu0 %v765
        %v1762 = vpop.f32.mrf.mxu0
        %v1763 = vadd.f32 %v1596, %v1762
        %v1764 = vpop.f32.mrf.mxu0
        %v1765 = vadd.f32 %v1598, %v1764
        %1766 = vmatmul.bf16.gmra.mxu0 %v766
        %v1767 = vpop.f32.mrf.mxu0
        %v1768 = vadd.f32 %v1601, %v1767
        %v1769 = vpop.f32.mrf.mxu0
        %v1770 = vadd.f32 %v1603, %v1769
        %1771 = vmatmul.bf16.gmra.mxu0 %v767
        %v1772 = vpop.f32.mrf.mxu0
        %v1773 = vadd.f32 %v1606, %v1772
        %v1774 = vpop.f32.mrf.mxu0
        %v1775 = vadd.f32 %v1608, %v1774
        %1776 = vmatmul.bf16.gmra.mxu0 %v768
        %v1777 = vpop.f32.mrf.mxu0
        %v1778 = vadd.f32 %v1611, %v1777
        %v1779 = vpop.f32.mrf.mxu0
        %v1780 = vadd.f32 %v1613, %v1779
        %1781 = vmatmul.bf16.gmra.mxu0 %v769
        %v1782 = vpop.f32.mrf.mxu0
        %v1783 = vadd.f32 %v1616, %v1782
        %v1784 = vpop.f32.mrf.mxu0
        %v1785 = vadd.f32 %v1618, %v1784
        %1786 = vmatmul.bf16.gmra.mxu0 %v770
        %v1787 = vpop.f32.mrf.mxu0
        %v1788 = vadd.f32 %v1621, %v1787
        %v1789 = vpop.f32.mrf.mxu0
        %v1790 = vadd.f32 %v1623, %v1789
        %1791 = vmatmul.bf16.gmra.mxu0 %v771
        %v1792 = vpop.f32.mrf.mxu0
        %v1793 = vadd.f32 %v1626, %v1792
        %v1794 = vpop.f32.mrf.mxu0
        %v1795 = vadd.f32 %v1628, %v1794
        %1796 = vmatmul.bf16.gmra.mxu0 %v772
        %v1797 = vpop.f32.mrf.mxu0
        %v1798 = vadd.f32 %v1631, %v1797
        %v1799 = vpop.f32.mrf.mxu0
        %v1800 = vadd.f32 %v1633, %v1799
        %1801 = vmatmul.bf16.gmra.mxu0 %v773
        %v1802 = vpop.f32.mrf.mxu0
        %v1803 = vadd.f32 %v1636, %v1802
        %v1804 = vpop.f32.mrf.mxu0
        %v1805 = vadd.f32 %v1638, %v1804
        %1806 = vmatmul.bf16.gmra.mxu0 %v774
        %v1807 = vpop.f32.mrf.mxu0
        %v1808 = vadd.f32 %v1641, %v1807
        %v1809 = vpop.f32.mrf.mxu0
        %v1810 = vadd.f32 %v1643, %v1809
        %1811 = vmatmul.bf16.gmra.mxu0 %v775
        %v1812 = vpop.f32.mrf.mxu0
        %v1813 = vadd.f32 %v1646, %v1812
        %v1814 = vpop.f32.mrf.mxu0
        %v1815 = vadd.f32 %v1648, %v1814
        %1816 = vmatmul.bf16.gmra.mxu0 %v776
        %v1817 = vpop.f32.mrf.mxu0
        %v1818 = vadd.f32 %v1651, %v1817
        %v1819 = vpop.f32.mrf.mxu0
        %v1820 = vadd.f32 %v1653, %v1819
        %1821 = vmatmul.bf16.gmra.mxu0 %v777
        %v1822 = vpop.f32.mrf.mxu0
        %v1823 = vadd.f32 %v1656, %v1822
        %v1824 = vpop.f32.mrf.mxu0
        %v1825 = vadd.f32 %v1658, %v1824
        %1826 = vmatmul.bf16.gmra.mxu0 %v778
        %v1827 = vpop.f32.mrf.mxu0
        %v1828 = vadd.f32 %v1661, %v1827
        %v1829 = vpop.f32.mrf.mxu0
        %v1830 = vadd.f32 %v1663, %v1829
        %1831 = vmatmul.bf16.gmra.mxu0 %v779
        %v1832 = vpop.f32.mrf.mxu0
        %v1833 = vadd.f32 %v1666, %v1832
        %v1834 = vpop.f32.mrf.mxu0
        %v1835 = vadd.f32 %v1668, %v1834
        %1836 = vmatmul.bf16.gmra.mxu0 %v780
        %v1837 = vpop.f32.mrf.mxu0
        %v1838 = vadd.f32 %v1671, %v1837
        %v1839 = vpop.f32.mrf.mxu0
        %v1840 = vadd.f32 %v1673, %v1839
        %1841 = vmatmul.bf16.gmra.mxu0 %v781
        %v1842 = vpop.f32.mrf.mxu0
        %v1843 = vadd.f32 %v1676, %v1842
        %v1844 = vpop.f32.mrf.mxu0
        %v1845 = vadd.f32 %v1678, %v1844
        %1846 = vmatmul.bf16.gmra.mxu0 %v782
        %v1847 = vpop.f32.mrf.mxu0
        %v1848 = vadd.f32 %v1681, %v1847
        %v1849 = vpop.f32.mrf.mxu0
        %v1850 = vadd.f32 %v1683, %v1849
        %1851 = vmatmul.bf16.gmra.mxu0 %v783
        %v1852 = vpop.f32.mrf.mxu0
        %v1853 = vadd.f32 %v1686, %v1852
        %v1854 = vpop.f32.mrf.mxu0
        %v1855 = vadd.f32 %v1688, %v1854
        %1856 = vmatmul.bf16.gmra.mxu0 %v784
        %v1857 = vpop.f32.mrf.mxu0
        %v1858 = vadd.f32 %v1691, %v1857
        %v1859 = vpop.f32.mrf.mxu0
        %v1860 = vadd.f32 %v1693, %v1859
        %1861 = vmatmul.bf16.gmra.mxu0 %v785
        %v1862 = vpop.f32.mrf.mxu0
        %v1863 = vadd.f32 %v1696, %v1862
        %v1864 = vpop.f32.mrf.mxu0
        %v1865 = vadd.f32 %v1698, %v1864
        %1866 = vdwg.mxu0
        %v1867 = vrot.slane %v720, 7
        %v1868 = vrot.slane %v721, 7
        %v1869 = vrot.slane %v722, 7
        %v1870 = vrot.slane %v723, 7
        %v1871 = vrot.slane %v724, 7
        %v1872 = vrot.slane %v725, 7
        %v1873 = vrot.slane %v726, 7
        %v1874 = vrot.slane %v727, 7
        %v1875 = vrot.slane %v728, 7
        %v1876 = vrot.slane %v729, 7
        %v1877 = vrot.slane %v730, 7
        %v1878 = vrot.slane %v731, 7
        %v1879 = vrot.slane %v732, 7
        %v1880 = vrot.slane %v733, 7
        %v1881 = vrot.slane %v734, 7
        %v1882 = vrot.slane %v735, 7
        %v1883 = vrot.slane %v736, 7
        %v1884 = vrot.slane %v737, 7
        %v1885 = vrot.slane %v738, 7
        %v1886 = vrot.slane %v739, 7
        %v1887 = vrot.slane %v740, 7
        %v1888 = vrot.slane %v741, 7
        %v1889 = vrot.slane %v742, 7
        %v1890 = vrot.slane %v743, 7
        %v1891 = vrot.slane %v744, 7
        %v1892 = vrot.slane %v745, 7
        %v1893 = vrot.slane %v746, 7
        %v1894 = vrot.slane %v747, 7
        %v1895 = vrot.slane %v748, 7
        %v1896 = vrot.slane %v749, 7
        %v1897 = vrot.slane %v750, 7
        %v1898 = vrot.slane %v751, 7
        %v1899 = vrot.slane %v752, 7
        %v1900 = vrot.slane %v753, 7
        %v1901 = vrot.slane %v754, 7
        %v1902 = vrot.slane %v755, 7
        %v1903 = vrot.slane %v756, 7
        %v1904 = vrot.slane %v757, 7
        %v1905 = vrot.slane %v758, 7
        %v1906 = vrot.slane %v759, 7
        %v1907 = vrot.slane %v760, 7
        %v1908 = vrot.slane %v761, 7
        %v1909 = vrot.slane %v762, 7
        %v1910 = vrot.slane %v763, 7
        %vm1911 = vcmp.lt.s32.totalorder %v847, 1
        %v1912 = vsel %vm1911, %v1909, %v1910
        %v1913 = vsel %vm1911, %v1908, %v1909
        %v1914 = vsel %vm1911, %v1907, %v1908
        %v1915 = vsel %vm1911, %v1906, %v1907
        %v1916 = vsel %vm1911, %v1905, %v1906
        %v1917 = vsel %vm1911, %v1904, %v1905
        %v1918 = vsel %vm1911, %v1903, %v1904
        %v1919 = vsel %vm1911, %v1902, %v1903
        %v1920 = vsel %vm1911, %v1901, %v1902
        %v1921 = vsel %vm1911, %v1900, %v1901
        %v1922 = vsel %vm1911, %v1899, %v1900
        %v1923 = vsel %vm1911, %v1898, %v1899
        %v1924 = vsel %vm1911, %v1897, %v1898
        %v1925 = vsel %vm1911, %v1896, %v1897
        %v1926 = vsel %vm1911, %v1895, %v1896
        %v1927 = vsel %vm1911, %v1894, %v1895
        %v1928 = vsel %vm1911, %v1893, %v1894
        %v1929 = vsel %vm1911, %v1892, %v1893
        %v1930 = vsel %vm1911, %v1891, %v1892
        %v1931 = vsel %vm1911, %v1890, %v1891
        %v1932 = vsel %vm1911, %v1889, %v1890
        %v1933 = vsel %vm1911, %v1888, %v1889
        %v1934 = vsel %vm1911, %v1887, %v1888
        %v1935 = vsel %vm1911, %v1886, %v1887
        %v1936 = vsel %vm1911, %v1885, %v1886
        %v1937 = vsel %vm1911, %v1884, %v1885
        %v1938 = vsel %vm1911, %v1883, %v1884
        %v1939 = vsel %vm1911, %v1882, %v1883
        %v1940 = vsel %vm1911, %v1881, %v1882
        %v1941 = vsel %vm1911, %v1880, %v1881
        %v1942 = vsel %vm1911, %v1879, %v1880
        %v1943 = vsel %vm1911, %v1878, %v1879
        %v1944 = vsel %vm1911, %v1877, %v1878
        %v1945 = vsel %vm1911, %v1876, %v1877
        %v1946 = vsel %vm1911, %v1875, %v1876
        %v1947 = vsel %vm1911, %v1874, %v1875
        %v1948 = vsel %vm1911, %v1873, %v1874
        %v1949 = vsel %vm1911, %v1872, %v1873
        %v1950 = vsel %vm1911, %v1871, %v1872
        %v1951 = vsel %vm1911, %v1870, %v1871
        %v1952 = vsel %vm1911, %v1869, %v1870
        %v1953 = vsel %vm1911, %v1868, %v1869
        %v1954 = vsel %vm1911, %v1867, %v1868
        %v1955 = vsel %vm1911, %v1910, %v1867
        %v1956 = vpack.c.bf16 %v1913, %v1913
        %v1957 = vpack.c.bf16 %v1912, %v1912
        %v1958 = vpack.c.bf16 %v1955, %v1955
        %v1959 = vpack.c.bf16 %v1954, %v1954
        %v1960 = vpack.c.bf16 %v1953, %v1953
        %v1961 = vpack.c.bf16 %v1952, %v1952
        %v1962 = vpack.c.bf16 %v1951, %v1951
        %v1963 = vpack.c.bf16 %v1950, %v1950
        %v1964 = vpack.c.bf16 %v1949, %v1949
        %v1965 = vpack.c.bf16 %v1948, %v1948
        %v1966 = vpack.c.bf16 %v1947, %v1947
        %v1967 = vpack.c.bf16 %v1946, %v1946
        %v1968 = vpack.c.bf16 %v1945, %v1945
        %v1969 = vpack.c.bf16 %v1944, %v1944
        %v1970 = vpack.c.bf16 %v1943, %v1943
        %v1971 = vpack.c.bf16 %v1942, %v1942
        %v1972 = vpack.c.bf16 %v1941, %v1941
        %v1973 = vpack.c.bf16 %v1940, %v1940
        %v1974 = vpack.c.bf16 %v1939, %v1939
        %v1975 = vpack.c.bf16 %v1938, %v1938
        %v1976 = vpack.c.bf16 %v1937, %v1937
        %v1977 = vpack.c.bf16 %v1936, %v1936
        %v1978 = vpack.c.bf16 %v1935, %v1935
        %v1979 = vpack.c.bf16 %v1934, %v1934
        %v1980 = vpack.c.bf16 %v1933, %v1933
        %v1981 = vpack.c.bf16 %v1932, %v1932
        %v1982 = vpack.c.bf16 %v1931, %v1931
        %v1983 = vpack.c.bf16 %v1930, %v1930
        %v1984 = vpack.c.bf16 %v1929, %v1929
        %v1985 = vpack.c.bf16 %v1928, %v1928
        %v1986 = vpack.c.bf16 %v1927, %v1927
        %v1987 = vpack.c.bf16 %v1926, %v1926
        %v1988 = vpack.c.bf16 %v1925, %v1925
        %v1989 = vpack.c.bf16 %v1924, %v1924
        %v1990 = vpack.c.bf16 %v1923, %v1923
        %v1991 = vpack.c.bf16 %v1922, %v1922
        %v1992 = vpack.c.bf16 %v1921, %v1921
        %v1993 = vpack.c.bf16 %v1920, %v1920
        %v1994 = vpack.c.bf16 %v1919, %v1919
        %v1995 = vpack.c.bf16 %v1918, %v1918
        %v1996 = vpack.c.bf16 %v1917, %v1917
        %v1997 = vpack.c.bf16 %v1916, %v1916
        %v1998 = vpack.c.bf16 %v1915, %v1915
        %v1999 = vpack.c.bf16 %v1914, %v1914
        %v2044 = vunpack.c.l.b16 %v1956
        %v2045 = vunpack.c.l.b16 %v1957
        %v2046 = vunpack.c.l.b16 %v1958
        %v2047 = vunpack.c.l.b16 %v1959
        %v2048 = vunpack.c.l.b16 %v1960
        %v2049 = vunpack.c.l.b16 %v1961
        %v2050 = vunpack.c.l.b16 %v1962
        %v2051 = vunpack.c.l.b16 %v1963
        %v2052 = vunpack.c.l.b16 %v1964
        %v2053 = vunpack.c.l.b16 %v1965
        %v2054 = vunpack.c.l.b16 %v1966
        %v2055 = vunpack.c.l.b16 %v1967
        %v2056 = vunpack.c.l.b16 %v1968
        %v2057 = vunpack.c.l.b16 %v1969
        %v2058 = vunpack.c.l.b16 %v1970
        %v2059 = vunpack.c.l.b16 %v1971
        %v2060 = vunpack.c.l.b16 %v1972
        %v2061 = vunpack.c.l.b16 %v1973
        %v2062 = vunpack.c.l.b16 %v1974
        %v2063 = vunpack.c.l.b16 %v1975
        %v2064 = vunpack.c.l.b16 %v1976
        %v2065 = vunpack.c.l.b16 %v1977
        %v2066 = vunpack.c.l.b16 %v1978
        %v2067 = vunpack.c.l.b16 %v1979
        %v2068 = vunpack.c.l.b16 %v1980
        %v2069 = vunpack.c.l.b16 %v1981
        %v2070 = vunpack.c.l.b16 %v1982
        %v2071 = vunpack.c.l.b16 %v1983
        %v2072 = vunpack.c.l.b16 %v1984
        %v2073 = vunpack.c.l.b16 %v1985
        %v2074 = vunpack.c.l.b16 %v1986
        %v2075 = vunpack.c.l.b16 %v1987
        %v2076 = vunpack.c.l.b16 %v1988
        %v2077 = vunpack.c.l.b16 %v1989
        %v2078 = vunpack.c.l.b16 %v1990
        %v2079 = vunpack.c.l.b16 %v1991
        %v2080 = vunpack.c.l.b16 %v1992
        %v2081 = vunpack.c.l.b16 %v1993
        %v2082 = vunpack.c.l.b16 %v1994
        %v2083 = vunpack.c.l.b16 %v1995
        %v2084 = vunpack.c.l.b16 %v1996
        %v2085 = vunpack.c.l.b16 %v1997
        %v2086 = vunpack.c.l.b16 %v1998
        %v2087 = vunpack.c.l.b16 %v1999
        %v2088 = vpack.c.b16 %v2045, %v2044
        %v2089 = vpack.c.b16 %v2047, %v2046
        %v2090 = vpack.c.b16 %v2049, %v2048
        %v2091 = vpack.c.b16 %v2051, %v2050
        %v2092 = vpack.c.b16 %v2053, %v2052
        %v2093 = vpack.c.b16 %v2055, %v2054
        %v2094 = vpack.c.b16 %v2057, %v2056
        %v2095 = vpack.c.b16 %v2059, %v2058
        %v2096 = vpack.c.b16 %v2061, %v2060
        %v2097 = vpack.c.b16 %v2063, %v2062
        %v2098 = vpack.c.b16 %v2065, %v2064
        %v2099 = vpack.c.b16 %v2067, %v2066
        %v2100 = vpack.c.b16 %v2069, %v2068
        %v2101 = vpack.c.b16 %v2071, %v2070
        %v2102 = vpack.c.b16 %v2073, %v2072
        %v2103 = vpack.c.b16 %v2075, %v2074
        %v2104 = vpack.c.b16 %v2077, %v2076
        %v2105 = vpack.c.b16 %v2079, %v2078
        %v2106 = vpack.c.b16 %v2081, %v2080
        %v2107 = vpack.c.b16 %v2083, %v2082
        %v2108 = vpack.c.b16 %v2085, %v2084
        %v2109 = vpack.c.b16 %v2087, %v2086
        %s2132 = scalar_lea.vmem [#allocation7], 128
        %v2133 = vld [vmem:[%s2132] sm:$0xf]
        %v2134 = vld [vmem:[%s2132 + $0x4] sm:$0xf]
        %v2135 = vld [vmem:[%s2132 + $0x8] sm:$0xf]
        %v2136 = vld [vmem:[%s2132 + $0xc] sm:$0xf]
        %v2137 = vld [vmem:[%s2132 + $0x10] sm:$0xf]
        %v2138 = vld [vmem:[%s2132 + $0x14] sm:$0xf]
        %v2139 = vld [vmem:[%s2132 + $0x18] sm:$0xf]
        %v2140 = vld [vmem:[%s2132 + $0x1c] sm:$0xf]
        %v2141 = vld [vmem:[%s2132 + $0x20] sm:$0xf]
        %v2142 = vld [vmem:[%s2132 + $0x24] sm:$0xf]
        %v2143 = vld [vmem:[%s2132 + $0x28] sm:$0xf]
        %v2144 = vld [vmem:[%s2132 + $0x2c] sm:$0xf]
        %v2145 = vld [vmem:[%s2132 + $0x30] sm:$0xf]
        %v2146 = vld [vmem:[%s2132 + $0x34] sm:$0xf]
        %v2147 = vld [vmem:[%s2132 + $0x38] sm:$0xf]
        %v2148 = vld [vmem:[%s2132 + $0x3c] sm:$0xf]
        %v2149 = vld [vmem:[%s2132 + $0x40] sm:$0xf]
        %v2150 = vld [vmem:[%s2132 + $0x44] sm:$0xf]
        %v2151 = vld [vmem:[%s2132 + $0x48] sm:$0xf]
        %v2152 = vld [vmem:[%s2132 + $0x4c] sm:$0xf]
        %v2153 = vld [vmem:[%s2132 + $0x50] sm:$0xf]
        %v2154 = vld [vmem:[%s2132 + $0x54] sm:$0xf]
        %v2155 = vld [vmem:[%s2132 + $0x58] sm:$0xf]
        %v2156 = vld [vmem:[%s2132 + $0x5c] sm:$0xf]
        %v2157 = vld [vmem:[%s2132 + $0x60] sm:$0xf]
        %v2158 = vld [vmem:[%s2132 + $0x64] sm:$0xf]
        %v2159 = vld [vmem:[%s2132 + $0x68] sm:$0xf]
        %v2160 = vld [vmem:[%s2132 + $0x6c] sm:$0xf]
        %v2161 = vld [vmem:[%s2132 + $0x70] sm:$0xf]
        %v2162 = vld [vmem:[%s2132 + $0x74] sm:$0xf]
        %v2163 = vld [vmem:[%s2132 + $0x78] sm:$0xf]
        %v2164 = vld [vmem:[%s2132 + $0x7c] sm:$0xf]
        %v2197 = vunpack.c.l.b16 %v2133
        %v2198 = vunpack.c.l.b16 %v2134
        %v2199 = vunpack.c.l.b16 %v2135
        %v2200 = vunpack.c.l.b16 %v2136
        %v2201 = vunpack.c.l.b16 %v2137
        %v2202 = vunpack.c.l.b16 %v2138
        %v2203 = vunpack.c.l.b16 %v2139
        %v2204 = vunpack.c.l.b16 %v2140
        %v2205 = vunpack.c.l.b16 %v2141
        %v2206 = vunpack.c.l.b16 %v2142
        %v2207 = vunpack.c.l.b16 %v2143
        %v2208 = vunpack.c.l.b16 %v2144
        %v2209 = vunpack.c.l.b16 %v2145
        %v2210 = vunpack.c.l.b16 %v2146
        %v2211 = vunpack.c.l.b16 %v2147
        %v2212 = vunpack.c.l.b16 %v2148
        %v2213 = vunpack.c.l.b16 %v2149
        %v2214 = vunpack.c.l.b16 %v2150
        %v2215 = vunpack.c.l.b16 %v2151
        %v2216 = vunpack.c.l.b16 %v2152
        %v2217 = vunpack.c.l.b16 %v2153
        %v2218 = vunpack.c.l.b16 %v2154
        %v2219 = vunpack.c.l.b16 %v2155
        %v2220 = vunpack.c.l.b16 %v2156
        %v2221 = vunpack.c.l.b16 %v2157
        %v2222 = vunpack.c.l.b16 %v2158
        %v2223 = vunpack.c.l.b16 %v2159
        %v2224 = vunpack.c.l.b16 %v2160
        %v2225 = vunpack.c.l.b16 %v2161
        %v2226 = vunpack.c.l.b16 %v2162
        %v2227 = vunpack.c.l.b16 %v2163
        %v2228 = vunpack.c.l.b16 %v2164
        %v2229 = vpack.c.b16 %v2198, %v2197
        %v2230 = vpack.c.b16 %v2200, %v2199
        %v2231 = vpack.c.b16 %v2202, %v2201
        %v2232 = vpack.c.b16 %v2204, %v2203
        %v2233 = vpack.c.b16 %v2206, %v2205
        %v2234 = vpack.c.b16 %v2208, %v2207
        %v2235 = vpack.c.b16 %v2210, %v2209
        %v2236 = vpack.c.b16 %v2212, %v2211
        %v2237 = vpack.c.b16 %v2214, %v2213
        %v2238 = vpack.c.b16 %v2216, %v2215
        %v2239 = vpack.c.b16 %v2218, %v2217
        %v2240 = vpack.c.b16 %v2220, %v2219
        %v2241 = vpack.c.b16 %v2222, %v2221
        %v2242 = vpack.c.b16 %v2224, %v2223
        %v2243 = vpack.c.b16 %v2226, %v2225
        %v2244 = vpack.c.b16 %v2228, %v2227
        %2261 = vmatpush.bf16.msra.mxu0 %v2236
        %2262 = vmatpush.bf16.msra.mxu0 %v2235
        %2263 = vmatpush.bf16.msra.mxu0 %v2234
        %2264 = vmatpush.bf16.msra.mxu0 %v2233
        %2265 = vmatpush.bf16.msra.mxu0 %v2232
        %2266 = vmatpush.bf16.msra.mxu0 %v2231
        %2267 = vmatpush.bf16.msra.mxu0 %v2230
        %2268 = vmatpush.bf16.msra.mxu0 %v2229
        %2269 = vmatmul.bf16.gmra.mxu0 %v2088
        %v2270 = vpop.f32.mrf.mxu0
        %v2271 = vadd.f32 0.0, %v2270
        %v2272 = vpop.f32.mrf.mxu0
        %v2273 = vadd.f32 0.0, %v2272
        %2274 = vmatmul.bf16.gmra.mxu0 %v2089
        %v2275 = vpop.f32.mrf.mxu0
        %v2276 = vadd.f32 0.0, %v2275
        %v2277 = vpop.f32.mrf.mxu0
        %v2278 = vadd.f32 0.0, %v2277
        %2279 = vmatmul.bf16.gmra.mxu0 %v2090
        %v2280 = vpop.f32.mrf.mxu0
        %v2281 = vadd.f32 0.0, %v2280
        %v2282 = vpop.f32.mrf.mxu0
        %v2283 = vadd.f32 0.0, %v2282
        %2284 = vmatmul.bf16.gmra.mxu0 %v2091
        %v2285 = vpop.f32.mrf.mxu0
        %v2286 = vadd.f32 0.0, %v2285
        %v2287 = vpop.f32.mrf.mxu0
        %v2288 = vadd.f32 0.0, %v2287
        %2289 = vmatmul.bf16.gmra.mxu0 %v2092
        %v2290 = vpop.f32.mrf.mxu0
        %v2291 = vadd.f32 0.0, %v2290
        %v2292 = vpop.f32.mrf.mxu0
        %v2293 = vadd.f32 0.0, %v2292
        %2294 = vmatmul.bf16.gmra.mxu0 %v2093
        %v2295 = vpop.f32.mrf.mxu0
        %v2296 = vadd.f32 0.0, %v2295
        %v2297 = vpop.f32.mrf.mxu0
        %v2298 = vadd.f32 0.0, %v2297
        %2299 = vmatmul.bf16.gmra.mxu0 %v2094
        %v2300 = vpop.f32.mrf.mxu0
        %v2301 = vadd.f32 0.0, %v2300
        %v2302 = vpop.f32.mrf.mxu0
        %v2303 = vadd.f32 0.0, %v2302
        %2304 = vmatmul.bf16.gmra.mxu0 %v2095
        %v2305 = vpop.f32.mrf.mxu0
        %v2306 = vadd.f32 0.0, %v2305
        %v2307 = vpop.f32.mrf.mxu0
        %v2308 = vadd.f32 0.0, %v2307
        %2309 = vmatmul.bf16.gmra.mxu0 %v2096
        %v2310 = vpop.f32.mrf.mxu0
        %v2311 = vadd.f32 0.0, %v2310
        %v2312 = vpop.f32.mrf.mxu0
        %v2313 = vadd.f32 0.0, %v2312
        %2314 = vmatmul.bf16.gmra.mxu0 %v2097
        %v2315 = vpop.f32.mrf.mxu0
        %v2316 = vadd.f32 0.0, %v2315
        %v2317 = vpop.f32.mrf.mxu0
        %v2318 = vadd.f32 0.0, %v2317
        %2319 = vmatmul.bf16.gmra.mxu0 %v2098
        %v2320 = vpop.f32.mrf.mxu0
        %v2321 = vadd.f32 0.0, %v2320
        %v2322 = vpop.f32.mrf.mxu0
        %v2323 = vadd.f32 0.0, %v2322
        %2324 = vmatmul.bf16.gmra.mxu0 %v2099
        %v2325 = vpop.f32.mrf.mxu0
        %v2326 = vadd.f32 0.0, %v2325
        %v2327 = vpop.f32.mrf.mxu0
        %v2328 = vadd.f32 0.0, %v2327
        %2329 = vmatmul.bf16.gmra.mxu0 %v2100
        %v2330 = vpop.f32.mrf.mxu0
        %v2331 = vadd.f32 0.0, %v2330
        %v2332 = vpop.f32.mrf.mxu0
        %v2333 = vadd.f32 0.0, %v2332
        %2334 = vmatmul.bf16.gmra.mxu0 %v2101
        %v2335 = vpop.f32.mrf.mxu0
        %v2336 = vadd.f32 0.0, %v2335
        %v2337 = vpop.f32.mrf.mxu0
        %v2338 = vadd.f32 0.0, %v2337
        %2339 = vmatmul.bf16.gmra.mxu0 %v2102
        %v2340 = vpop.f32.mrf.mxu0
        %v2341 = vadd.f32 0.0, %v2340
        %v2342 = vpop.f32.mrf.mxu0
        %v2343 = vadd.f32 0.0, %v2342
        %2344 = vmatmul.bf16.gmra.mxu0 %v2103
        %v2345 = vpop.f32.mrf.mxu0
        %v2346 = vadd.f32 0.0, %v2345
        %v2347 = vpop.f32.mrf.mxu0
        %v2348 = vadd.f32 0.0, %v2347
        %2349 = vmatmul.bf16.gmra.mxu0 %v2104
        %v2350 = vpop.f32.mrf.mxu0
        %v2351 = vadd.f32 0.0, %v2350
        %v2352 = vpop.f32.mrf.mxu0
        %v2353 = vadd.f32 0.0, %v2352
        %2354 = vmatmul.bf16.gmra.mxu0 %v2105
        %v2355 = vpop.f32.mrf.mxu0
        %v2356 = vadd.f32 0.0, %v2355
        %v2357 = vpop.f32.mrf.mxu0
        %v2358 = vadd.f32 0.0, %v2357
        %2359 = vmatmul.bf16.gmra.mxu0 %v2106
        %v2360 = vpop.f32.mrf.mxu0
        %v2361 = vadd.f32 0.0, %v2360
        %v2362 = vpop.f32.mrf.mxu0
        %v2363 = vadd.f32 0.0, %v2362
        %2364 = vmatmul.bf16.gmra.mxu0 %v2107
        %v2365 = vpop.f32.mrf.mxu0
        %v2366 = vadd.f32 0.0, %v2365
        %v2367 = vpop.f32.mrf.mxu0
        %v2368 = vadd.f32 0.0, %v2367
        %2369 = vmatmul.bf16.gmra.mxu0 %v2108
        %v2370 = vpop.f32.mrf.mxu0
        %v2371 = vadd.f32 0.0, %v2370
        %v2372 = vpop.f32.mrf.mxu0
        %v2373 = vadd.f32 0.0, %v2372
        %2374 = vmatmul.bf16.gmra.mxu0 %v2109
        %v2375 = vpop.f32.mrf.mxu0
        %v2376 = vadd.f32 0.0, %v2375
        %v2377 = vpop.f32.mrf.mxu0
        %v2378 = vadd.f32 0.0, %v2377
        %2379 = vdwg.mxu0
        %2380 = vmatpush.bf16.msra.mxu0 %v2244
        %2381 = vmatpush.bf16.msra.mxu0 %v2243
        %2382 = vmatpush.bf16.msra.mxu0 %v2242
        %2383 = vmatpush.bf16.msra.mxu0 %v2241
        %2384 = vmatpush.bf16.msra.mxu0 %v2240
        %2385 = vmatpush.bf16.msra.mxu0 %v2239
        %2386 = vmatpush.bf16.msra.mxu0 %v2238
        %2387 = vmatpush.bf16.msra.mxu0 %v2237
        %2388 = vmatmul.bf16.gmra.mxu0 %v2089
        %v2389 = vpop.f32.mrf.mxu0
        %v2390 = vadd.f32 %v2271, %v2389
        %v2391 = vpop.f32.mrf.mxu0
        %v2392 = vadd.f32 %v2273, %v2391
        %2393 = vmatmul.bf16.gmra.mxu0 %v2090
        %v2394 = vpop.f32.mrf.mxu0
        %v2395 = vadd.f32 %v2276, %v2394
        %v2396 = vpop.f32.mrf.mxu0
        %v2397 = vadd.f32 %v2278, %v2396
        %2398 = vmatmul.bf16.gmra.mxu0 %v2091
        %v2399 = vpop.f32.mrf.mxu0
        %v2400 = vadd.f32 %v2281, %v2399
        %v2401 = vpop.f32.mrf.mxu0
        %v2402 = vadd.f32 %v2283, %v2401
        %2403 = vmatmul.bf16.gmra.mxu0 %v2092
        %v2404 = vpop.f32.mrf.mxu0
        %v2405 = vadd.f32 %v2286, %v2404
        %v2406 = vpop.f32.mrf.mxu0
        %v2407 = vadd.f32 %v2288, %v2406
        %2408 = vmatmul.bf16.gmra.mxu0 %v2093
        %v2409 = vpop.f32.mrf.mxu0
        %v2410 = vadd.f32 %v2291, %v2409
        %v2411 = vpop.f32.mrf.mxu0
        %v2412 = vadd.f32 %v2293, %v2411
        %2413 = vmatmul.bf16.gmra.mxu0 %v2094
        %v2414 = vpop.f32.mrf.mxu0
        %v2415 = vadd.f32 %v2296, %v2414
        %v2416 = vpop.f32.mrf.mxu0
        %v2417 = vadd.f32 %v2298, %v2416
        %2418 = vmatmul.bf16.gmra.mxu0 %v2095
        %v2419 = vpop.f32.mrf.mxu0
        %v2420 = vadd.f32 %v2301, %v2419
        %v2421 = vpop.f32.mrf.mxu0
        %v2422 = vadd.f32 %v2303, %v2421
        %2423 = vmatmul.bf16.gmra.mxu0 %v2096
        %v2424 = vpop.f32.mrf.mxu0
        %v2425 = vadd.f32 %v2306, %v2424
        %v2426 = vpop.f32.mrf.mxu0
        %v2427 = vadd.f32 %v2308, %v2426
        %2428 = vmatmul.bf16.gmra.mxu0 %v2097
        %v2429 = vpop.f32.mrf.mxu0
        %v2430 = vadd.f32 %v2311, %v2429
        %v2431 = vpop.f32.mrf.mxu0
        %v2432 = vadd.f32 %v2313, %v2431
        %2433 = vmatmul.bf16.gmra.mxu0 %v2098
        %v2434 = vpop.f32.mrf.mxu0
        %v2435 = vadd.f32 %v2316, %v2434
        %v2436 = vpop.f32.mrf.mxu0
        %v2437 = vadd.f32 %v2318, %v2436
        %2438 = vmatmul.bf16.gmra.mxu0 %v2099
        %v2439 = vpop.f32.mrf.mxu0
        %v2440 = vadd.f32 %v2321, %v2439
        %v2441 = vpop.f32.mrf.mxu0
        %v2442 = vadd.f32 %v2323, %v2441
        %2443 = vmatmul.bf16.gmra.mxu0 %v2100
        %v2444 = vpop.f32.mrf.mxu0
        %v2445 = vadd.f32 %v2326, %v2444
        %v2446 = vpop.f32.mrf.mxu0
        %v2447 = vadd.f32 %v2328, %v2446
        %2448 = vmatmul.bf16.gmra.mxu0 %v2101
        %v2449 = vpop.f32.mrf.mxu0
        %v2450 = vadd.f32 %v2331, %v2449
        %v2451 = vpop.f32.mrf.mxu0
        %v2452 = vadd.f32 %v2333, %v2451
        %2453 = vmatmul.bf16.gmra.mxu0 %v2102
        %v2454 = vpop.f32.mrf.mxu0
        %v2455 = vadd.f32 %v2336, %v2454
        %v2456 = vpop.f32.mrf.mxu0
        %v2457 = vadd.f32 %v2338, %v2456
        %2458 = vmatmul.bf16.gmra.mxu0 %v2103
        %v2459 = vpop.f32.mrf.mxu0
        %v2460 = vadd.f32 %v2341, %v2459
        %v2461 = vpop.f32.mrf.mxu0
        %v2462 = vadd.f32 %v2343, %v2461
        %2463 = vmatmul.bf16.gmra.mxu0 %v2104
        %v2464 = vpop.f32.mrf.mxu0
        %v2465 = vadd.f32 %v2346, %v2464
        %v2466 = vpop.f32.mrf.mxu0
        %v2467 = vadd.f32 %v2348, %v2466
        %2468 = vmatmul.bf16.gmra.mxu0 %v2105
        %v2469 = vpop.f32.mrf.mxu0
        %v2470 = vadd.f32 %v2351, %v2469
        %v2471 = vpop.f32.mrf.mxu0
        %v2472 = vadd.f32 %v2353, %v2471
        %2473 = vmatmul.bf16.gmra.mxu0 %v2106
        %v2474 = vpop.f32.mrf.mxu0
        %v2475 = vadd.f32 %v2356, %v2474
        %v2476 = vpop.f32.mrf.mxu0
        %v2477 = vadd.f32 %v2358, %v2476
        %2478 = vmatmul.bf16.gmra.mxu0 %v2107
        %v2479 = vpop.f32.mrf.mxu0
        %v2480 = vadd.f32 %v2361, %v2479
        %v2481 = vpop.f32.mrf.mxu0
        %v2482 = vadd.f32 %v2363, %v2481
        %2483 = vmatmul.bf16.gmra.mxu0 %v2108
        %v2484 = vpop.f32.mrf.mxu0
        %v2485 = vadd.f32 %v2366, %v2484
        %v2486 = vpop.f32.mrf.mxu0
        %v2487 = vadd.f32 %v2368, %v2486
        %2488 = vmatmul.bf16.gmra.mxu0 %v2109
        %v2489 = vpop.f32.mrf.mxu0
        %v2490 = vadd.f32 %v2371, %v2489
        %v2491 = vpop.f32.mrf.mxu0
        %v2492 = vadd.f32 %v2373, %v2491
        %2493 = vmatmul.bf16.gmra.mxu0 %v2088
        %v2494 = vpop.f32.mrf.mxu0
        %v2495 = vadd.f32 %v2376, %v2494
        %v2496 = vpop.f32.mrf.mxu0
        %v2497 = vadd.f32 %v2378, %v2496
        %2498 = vdwg.mxu0
        %v2499 = vadd.f32 %v1758, %v2390
        %v2500 = vadd.f32 %v1760, %v2392
        %v2501 = vadd.f32 %v1763, %v2395
        %v2502 = vadd.f32 %v1765, %v2397
        %v2503 = vadd.f32 %v1768, %v2400
        %v2504 = vadd.f32 %v1770, %v2402
        %v2505 = vadd.f32 %v1773, %v2405
        %v2506 = vadd.f32 %v1775, %v2407
        %v2507 = vadd.f32 %v1778, %v2410
        %v2508 = vadd.f32 %v1780, %v2412
        %v2509 = vadd.f32 %v1783, %v2415
        %v2510 = vadd.f32 %v1785, %v2417
        %v2511 = vadd.f32 %v1788, %v2420
        %v2512 = vadd.f32 %v1790, %v2422
        %v2513 = vadd.f32 %v1793, %v2425
        %v2514 = vadd.f32 %v1795, %v2427
        %v2515 = vadd.f32 %v1798, %v2430
        %v2516 = vadd.f32 %v1800, %v2432
        %v2517 = vadd.f32 %v1803, %v2435
        %v2518 = vadd.f32 %v1805, %v2437
        %v2519 = vadd.f32 %v1808, %v2440
        %v2520 = vadd.f32 %v1810, %v2442
        %v2521 = vadd.f32 %v1813, %v2445
        %v2522 = vadd.f32 %v1815, %v2447
        %v2523 = vadd.f32 %v1818, %v2450
        %v2524 = vadd.f32 %v1820, %v2452
        %v2525 = vadd.f32 %v1823, %v2455
        %v2526 = vadd.f32 %v1825, %v2457
        %v2527 = vadd.f32 %v1828, %v2460
        %v2528 = vadd.f32 %v1830, %v2462
        %v2529 = vadd.f32 %v1833, %v2465
        %v2530 = vadd.f32 %v1835, %v2467
        %v2531 = vadd.f32 %v1838, %v2470
        %v2532 = vadd.f32 %v1840, %v2472
        %v2533 = vadd.f32 %v1843, %v2475
        %v2534 = vadd.f32 %v1845, %v2477
        %v2535 = vadd.f32 %v1848, %v2480
        %v2536 = vadd.f32 %v1850, %v2482
        %v2537 = vadd.f32 %v1853, %v2485
        %v2538 = vadd.f32 %v1855, %v2487
        %v2539 = vadd.f32 %v1858, %v2490
        %v2540 = vadd.f32 %v1860, %v2492
        %v2541 = vadd.f32 %v1863, %v2495
        %v2542 = vadd.f32 %v1865, %v2497
        %v2543 = vrot.slane %v720, 1
        %v2544 = vrot.slane %v721, 1
        %v2545 = vrot.slane %v722, 1
        %v2546 = vrot.slane %v723, 1
        %v2547 = vrot.slane %v724, 1
        %v2548 = vrot.slane %v725, 1
        %v2549 = vrot.slane %v726, 1
        %v2550 = vrot.slane %v727, 1
        %v2551 = vrot.slane %v728, 1
        %v2552 = vrot.slane %v729, 1
        %v2553 = vrot.slane %v730, 1
        %v2554 = vrot.slane %v731, 1
        %v2555 = vrot.slane %v732, 1
        %v2556 = vrot.slane %v733, 1
        %v2557 = vrot.slane %v734, 1
        %v2558 = vrot.slane %v735, 1
        %v2559 = vrot.slane %v736, 1
        %v2560 = vrot.slane %v737, 1
        %v2561 = vrot.slane %v738, 1
        %v2562 = vrot.slane %v739, 1
        %v2563 = vrot.slane %v740, 1
        %v2564 = vrot.slane %v741, 1
        %v2565 = vrot.slane %v742, 1
        %v2566 = vrot.slane %v743, 1
        %v2567 = vrot.slane %v744, 1
        %v2568 = vrot.slane %v745, 1
        %v2569 = vrot.slane %v746, 1
        %v2570 = vrot.slane %v747, 1
        %v2571 = vrot.slane %v748, 1
        %v2572 = vrot.slane %v749, 1
        %v2573 = vrot.slane %v750, 1
        %v2574 = vrot.slane %v751, 1
        %v2575 = vrot.slane %v752, 1
        %v2576 = vrot.slane %v753, 1
        %v2577 = vrot.slane %v754, 1
        %v2578 = vrot.slane %v755, 1
        %v2579 = vrot.slane %v756, 1
        %v2580 = vrot.slane %v757, 1
        %v2581 = vrot.slane %v758, 1
        %v2582 = vrot.slane %v759, 1
        %v2583 = vrot.slane %v760, 1
        %v2584 = vrot.slane %v761, 1
        %v2585 = vrot.slane %v762, 1
        %v2586 = vrot.slane %v763, 1
        %vm2587 = vcmp.lt.s32.totalorder %v847, 7
        %v2588 = vsel %vm2587, %v2585, %v2586
        %v2589 = vsel %vm2587, %v2584, %v2585
        %v2590 = vsel %vm2587, %v2583, %v2584
        %v2591 = vsel %vm2587, %v2582, %v2583
        %v2592 = vsel %vm2587, %v2581, %v2582
        %v2593 = vsel %vm2587, %v2580, %v2581
        %v2594 = vsel %vm2587, %v2579, %v2580
        %v2595 = vsel %vm2587, %v2578, %v2579
        %v2596 = vsel %vm2587, %v2577, %v2578
        %v2597 = vsel %vm2587, %v2576, %v2577
        %v2598 = vsel %vm2587, %v2575, %v2576
        %v2599 = vsel %vm2587, %v2574, %v2575
        %v2600 = vsel %vm2587, %v2573, %v2574
        %v2601 = vsel %vm2587, %v2572, %v2573
        %v2602 = vsel %vm2587, %v2571, %v2572
        %v2603 = vsel %vm2587, %v2570, %v2571
        %v2604 = vsel %vm2587, %v2569, %v2570
        %v2605 = vsel %vm2587, %v2568, %v2569
        %v2606 = vsel %vm2587, %v2567, %v2568
        %v2607 = vsel %vm2587, %v2566, %v2567
        %v2608 = vsel %vm2587, %v2565, %v2566
        %v2609 = vsel %vm2587, %v2564, %v2565
        %v2610 = vsel %vm2587, %v2563, %v2564
        %v2611 = vsel %vm2587, %v2562, %v2563
        %v2612 = vsel %vm2587, %v2561, %v2562
        %v2613 = vsel %vm2587, %v2560, %v2561
        %v2614 = vsel %vm2587, %v2559, %v2560
        %v2615 = vsel %vm2587, %v2558, %v2559
        %v2616 = vsel %vm2587, %v2557, %v2558
        %v2617 = vsel %vm2587, %v2556, %v2557
        %v2618 = vsel %vm2587, %v2555, %v2556
        %v2619 = vsel %vm2587, %v2554, %v2555
        %v2620 = vsel %vm2587, %v2553, %v2554
        %v2621 = vsel %vm2587, %v2552, %v2553
        %v2622 = vsel %vm2587, %v2551, %v2552
        %v2623 = vsel %vm2587, %v2550, %v2551
        %v2624 = vsel %vm2587, %v2549, %v2550
        %v2625 = vsel %vm2587, %v2548, %v2549
        %v2626 = vsel %vm2587, %v2547, %v2548
        %v2627 = vsel %vm2587, %v2546, %v2547
        %v2628 = vsel %vm2587, %v2545, %v2546
        %v2629 = vsel %vm2587, %v2544, %v2545
        %v2630 = vsel %vm2587, %v2543, %v2544
        %v2631 = vsel %vm2587, %v2586, %v2543
        %v2632 = vpack.c.bf16 %v2630, %v2630
        %v2633 = vpack.c.bf16 %v2629, %v2629
        %v2634 = vpack.c.bf16 %v2628, %v2628
        %v2635 = vpack.c.bf16 %v2627, %v2627
        %v2636 = vpack.c.bf16 %v2626, %v2626
        %v2637 = vpack.c.bf16 %v2625, %v2625
        %v2638 = vpack.c.bf16 %v2624, %v2624
        %v2639 = vpack.c.bf16 %v2623, %v2623
        %v2640 = vpack.c.bf16 %v2622, %v2622
        %v2641 = vpack.c.bf16 %v2621, %v2621
        %v2642 = vpack.c.bf16 %v2620, %v2620
        %v2643 = vpack.c.bf16 %v2619, %v2619
        %v2644 = vpack.c.bf16 %v2618, %v2618
        %v2645 = vpack.c.bf16 %v2617, %v2617
        %v2646 = vpack.c.bf16 %v2616, %v2616
        %v2647 = vpack.c.bf16 %v2615, %v2615
        %v2648 = vpack.c.bf16 %v2614, %v2614
        %v2649 = vpack.c.bf16 %v2613, %v2613
        %v2650 = vpack.c.bf16 %v2612, %v2612
        %v2651 = vpack.c.bf16 %v2611, %v2611
        %v2652 = vpack.c.bf16 %v2610, %v2610
        %v2653 = vpack.c.bf16 %v2609, %v2609
        %v2654 = vpack.c.bf16 %v2608, %v2608
        %v2655 = vpack.c.bf16 %v2607, %v2607
        %v2656 = vpack.c.bf16 %v2606, %v2606
        %v2657 = vpack.c.bf16 %v2605, %v2605
        %v2658 = vpack.c.bf16 %v2604, %v2604
        %v2659 = vpack.c.bf16 %v2603, %v2603
        %v2660 = vpack.c.bf16 %v2602, %v2602
        %v2661 = vpack.c.bf16 %v2601, %v2601
        %v2662 = vpack.c.bf16 %v2600, %v2600
        %v2663 = vpack.c.bf16 %v2599, %v2599
        %v2664 = vpack.c.bf16 %v2598, %v2598
        %v2665 = vpack.c.bf16 %v2597, %v2597
        %v2666 = vpack.c.bf16 %v2596, %v2596
        %v2667 = vpack.c.bf16 %v2595, %v2595
        %v2668 = vpack.c.bf16 %v2594, %v2594
        %v2669 = vpack.c.bf16 %v2593, %v2593
        %v2670 = vpack.c.bf16 %v2592, %v2592
        %v2671 = vpack.c.bf16 %v2591, %v2591
        %v2672 = vpack.c.bf16 %v2590, %v2590
        %v2673 = vpack.c.bf16 %v2589, %v2589
        %v2674 = vpack.c.bf16 %v2588, %v2588
        %v2675 = vpack.c.bf16 %v2631, %v2631
        %v2720 = vunpack.c.l.b16 %v2632
        %v2721 = vunpack.c.l.b16 %v2633
        %v2722 = vunpack.c.l.b16 %v2634
        %v2723 = vunpack.c.l.b16 %v2635
        %v2724 = vunpack.c.l.b16 %v2636
        %v2725 = vunpack.c.l.b16 %v2637
        %v2726 = vunpack.c.l.b16 %v2638
        %v2727 = vunpack.c.l.b16 %v2639
        %v2728 = vunpack.c.l.b16 %v2640
        %v2729 = vunpack.c.l.b16 %v2641
        %v2730 = vunpack.c.l.b16 %v2642
        %v2731 = vunpack.c.l.b16 %v2643
        %v2732 = vunpack.c.l.b16 %v2644
        %v2733 = vunpack.c.l.b16 %v2645
        %v2734 = vunpack.c.l.b16 %v2646
        %v2735 = vunpack.c.l.b16 %v2647
        %v2736 = vunpack.c.l.b16 %v2648
        %v2737 = vunpack.c.l.b16 %v2649
        %v2738 = vunpack.c.l.b16 %v2650
        %v2739 = vunpack.c.l.b16 %v2651
        %v2740 = vunpack.c.l.b16 %v2652
        %v2741 = vunpack.c.l.b16 %v2653
        %v2742 = vunpack.c.l.b16 %v2654
        %v2743 = vunpack.c.l.b16 %v2655
        %v2744 = vunpack.c.l.b16 %v2656
        %v2745 = vunpack.c.l.b16 %v2657
        %v2746 = vunpack.c.l.b16 %v2658
        %v2747 = vunpack.c.l.b16 %v2659
        %v2748 = vunpack.c.l.b16 %v2660
        %v2749 = vunpack.c.l.b16 %v2661
        %v2750 = vunpack.c.l.b16 %v2662
        %v2751 = vunpack.c.l.b16 %v2663
        %v2752 = vunpack.c.l.b16 %v2664
        %v2753 = vunpack.c.l.b16 %v2665
        %v2754 = vunpack.c.l.b16 %v2666
        %v2755 = vunpack.c.l.b16 %v2667
        %v2756 = vunpack.c.l.b16 %v2668
        %v2757 = vunpack.c.l.b16 %v2669
        %v2758 = vunpack.c.l.b16 %v2670
        %v2759 = vunpack.c.l.b16 %v2671
        %v2760 = vunpack.c.l.b16 %v2672
        %v2761 = vunpack.c.l.b16 %v2673
        %v2762 = vunpack.c.l.b16 %v2674
        %v2763 = vunpack.c.l.b16 %v2675
        %v2764 = vpack.c.b16 %v2721, %v2720
        %v2765 = vpack.c.b16 %v2723, %v2722
        %v2766 = vpack.c.b16 %v2725, %v2724
        %v2767 = vpack.c.b16 %v2727, %v2726
        %v2768 = vpack.c.b16 %v2729, %v2728
        %v2769 = vpack.c.b16 %v2731, %v2730
        %v2770 = vpack.c.b16 %v2733, %v2732
        %v2771 = vpack.c.b16 %v2735, %v2734
        %v2772 = vpack.c.b16 %v2737, %v2736
        %v2773 = vpack.c.b16 %v2739, %v2738
        %v2774 = vpack.c.b16 %v2741, %v2740
        %v2775 = vpack.c.b16 %v2743, %v2742
        %v2776 = vpack.c.b16 %v2745, %v2744
        %v2777 = vpack.c.b16 %v2747, %v2746
        %v2778 = vpack.c.b16 %v2749, %v2748
        %v2779 = vpack.c.b16 %v2751, %v2750
        %v2780 = vpack.c.b16 %v2753, %v2752
        %v2781 = vpack.c.b16 %v2755, %v2754
        %v2782 = vpack.c.b16 %v2757, %v2756
        %v2783 = vpack.c.b16 %v2759, %v2758
        %v2784 = vpack.c.b16 %v2761, %v2760
        %v2785 = vpack.c.b16 %v2763, %v2762
        %s2808 = scalar_lea.vmem [#allocation7], 256
        %v2809 = vld [vmem:[%s2808] sm:$0xf]
        %v2810 = vld [vmem:[%s2808 + $0x4] sm:$0xf]
        %v2811 = vld [vmem:[%s2808 + $0x8] sm:$0xf]
        %v2812 = vld [vmem:[%s2808 + $0xc] sm:$0xf]
        %v2813 = vld [vmem:[%s2808 + $0x10] sm:$0xf]
        %v2814 = vld [vmem:[%s2808 + $0x14] sm:$0xf]
        %v2815 = vld [vmem:[%s2808 + $0x18] sm:$0xf]
        %v2816 = vld [vmem:[%s2808 + $0x1c] sm:$0xf]
        %v2817 = vld [vmem:[%s2808 + $0x20] sm:$0xf]
        %v2818 = vld [vmem:[%s2808 + $0x24] sm:$0xf]
        %v2819 = vld [vmem:[%s2808 + $0x28] sm:$0xf]
        %v2820 = vld [vmem:[%s2808 + $0x2c] sm:$0xf]
        %v2821 = vld [vmem:[%s2808 + $0x30] sm:$0xf]
        %v2822 = vld [vmem:[%s2808 + $0x34] sm:$0xf]
        %v2823 = vld [vmem:[%s2808 + $0x38] sm:$0xf]
        %v2824 = vld [vmem:[%s2808 + $0x3c] sm:$0xf]
        %v2825 = vld [vmem:[%s2808 + $0x40] sm:$0xf]
        %v2826 = vld [vmem:[%s2808 + $0x44] sm:$0xf]
        %v2827 = vld [vmem:[%s2808 + $0x48] sm:$0xf]
        %v2828 = vld [vmem:[%s2808 + $0x4c] sm:$0xf]
        %v2829 = vld [vmem:[%s2808 + $0x50] sm:$0xf]
        %v2830 = vld [vmem:[%s2808 + $0x54] sm:$0xf]
        %v2831 = vld [vmem:[%s2808 + $0x58] sm:$0xf]
        %v2832 = vld [vmem:[%s2808 + $0x5c] sm:$0xf]
        %v2833 = vld [vmem:[%s2808 + $0x60] sm:$0xf]
        %v2834 = vld [vmem:[%s2808 + $0x64] sm:$0xf]
        %v2835 = vld [vmem:[%s2808 + $0x68] sm:$0xf]
        %v2836 = vld [vmem:[%s2808 + $0x6c] sm:$0xf]
        %v2837 = vld [vmem:[%s2808 + $0x70] sm:$0xf]
        %v2838 = vld [vmem:[%s2808 + $0x74] sm:$0xf]
        %v2839 = vld [vmem:[%s2808 + $0x78] sm:$0xf]
        %v2840 = vld [vmem:[%s2808 + $0x7c] sm:$0xf]
        %v2873 = vunpack.c.l.b16 %v2809
        %v2874 = vunpack.c.l.b16 %v2810
        %v2875 = vunpack.c.l.b16 %v2811
        %v2876 = vunpack.c.l.b16 %v2812
        %v2877 = vunpack.c.l.b16 %v2813
        %v2878 = vunpack.c.l.b16 %v2814
        %v2879 = vunpack.c.l.b16 %v2815
        %v2880 = vunpack.c.l.b16 %v2816
        %v2881 = vunpack.c.l.b16 %v2817
        %v2882 = vunpack.c.l.b16 %v2818
        %v2883 = vunpack.c.l.b16 %v2819
        %v2884 = vunpack.c.l.b16 %v2820
        %v2885 = vunpack.c.l.b16 %v2821
        %v2886 = vunpack.c.l.b16 %v2822
        %v2887 = vunpack.c.l.b16 %v2823
        %v2888 = vunpack.c.l.b16 %v2824
        %v2889 = vunpack.c.l.b16 %v2825
        %v2890 = vunpack.c.l.b16 %v2826
        %v2891 = vunpack.c.l.b16 %v2827
        %v2892 = vunpack.c.l.b16 %v2828
        %v2893 = vunpack.c.l.b16 %v2829
        %v2894 = vunpack.c.l.b16 %v2830
        %v2895 = vunpack.c.l.b16 %v2831
        %v2896 = vunpack.c.l.b16 %v2832
        %v2897 = vunpack.c.l.b16 %v2833
        %v2898 = vunpack.c.l.b16 %v2834
        %v2899 = vunpack.c.l.b16 %v2835
        %v2900 = vunpack.c.l.b16 %v2836
        %v2901 = vunpack.c.l.b16 %v2837
        %v2902 = vunpack.c.l.b16 %v2838
        %v2903 = vunpack.c.l.b16 %v2839
        %v2904 = vunpack.c.l.b16 %v2840
        %v2905 = vpack.c.b16 %v2874, %v2873
        %v2906 = vpack.c.b16 %v2876, %v2875
        %v2907 = vpack.c.b16 %v2878, %v2877
        %v2908 = vpack.c.b16 %v2880, %v2879
        %v2909 = vpack.c.b16 %v2882, %v2881
        %v2910 = vpack.c.b16 %v2884, %v2883
        %v2911 = vpack.c.b16 %v2886, %v2885
        %v2912 = vpack.c.b16 %v2888, %v2887
        %v2913 = vpack.c.b16 %v2890, %v2889
        %v2914 = vpack.c.b16 %v2892, %v2891
        %v2915 = vpack.c.b16 %v2894, %v2893
        %v2916 = vpack.c.b16 %v2896, %v2895
        %v2917 = vpack.c.b16 %v2898, %v2897
        %v2918 = vpack.c.b16 %v2900, %v2899
        %v2919 = vpack.c.b16 %v2902, %v2901
        %v2920 = vpack.c.b16 %v2904, %v2903
        %2937 = vmatpush.bf16.msra.mxu0 %v2912
        %2938 = vmatpush.bf16.msra.mxu0 %v2911
        %2939 = vmatpush.bf16.msra.mxu0 %v2910
        %2940 = vmatpush.bf16.msra.mxu0 %v2909
        %2941 = vmatpush.bf16.msra.mxu0 %v2908
        %2942 = vmatpush.bf16.msra.mxu0 %v2907
        %2943 = vmatpush.bf16.msra.mxu0 %v2906
        %2944 = vmatpush.bf16.msra.mxu0 %v2905
        %2945 = vmatmul.bf16.gmra.mxu0 %v2764
        %v2946 = vpop.f32.mrf.mxu0
        %v2947 = vadd.f32 0.0, %v2946
        %v2948 = vpop.f32.mrf.mxu0
        %v2949 = vadd.f32 0.0, %v2948
        %2950 = vmatmul.bf16.gmra.mxu0 %v2765
        %v2951 = vpop.f32.mrf.mxu0
        %v2952 = vadd.f32 0.0, %v2951
        %v2953 = vpop.f32.mrf.mxu0
        %v2954 = vadd.f32 0.0, %v2953
        %2955 = vmatmul.bf16.gmra.mxu0 %v2766
        %v2956 = vpop.f32.mrf.mxu0
        %v2957 = vadd.f32 0.0, %v2956
        %v2958 = vpop.f32.mrf.mxu0
        %v2959 = vadd.f32 0.0, %v2958
        %2960 = vmatmul.bf16.gmra.mxu0 %v2767
        %v2961 = vpop.f32.mrf.mxu0
        %v2962 = vadd.f32 0.0, %v2961
        %v2963 = vpop.f32.mrf.mxu0
        %v2964 = vadd.f32 0.0, %v2963
        %2965 = vmatmul.bf16.gmra.mxu0 %v2768
        %v2966 = vpop.f32.mrf.mxu0
        %v2967 = vadd.f32 0.0, %v2966
        %v2968 = vpop.f32.mrf.mxu0
        %v2969 = vadd.f32 0.0, %v2968
        %2970 = vmatmul.bf16.gmra.mxu0 %v2769
        %v2971 = vpop.f32.mrf.mxu0
        %v2972 = vadd.f32 0.0, %v2971
        %v2973 = vpop.f32.mrf.mxu0
        %v2974 = vadd.f32 0.0, %v2973
        %2975 = vmatmul.bf16.gmra.mxu0 %v2770
        %v2976 = vpop.f32.mrf.mxu0
        %v2977 = vadd.f32 0.0, %v2976
        %v2978 = vpop.f32.mrf.mxu0
        %v2979 = vadd.f32 0.0, %v2978
        %2980 = vmatmul.bf16.gmra.mxu0 %v2771
        %v2981 = vpop.f32.mrf.mxu0
        %v2982 = vadd.f32 0.0, %v2981
        %v2983 = vpop.f32.mrf.mxu0
        %v2984 = vadd.f32 0.0, %v2983
        %2985 = vmatmul.bf16.gmra.mxu0 %v2772
        %v2986 = vpop.f32.mrf.mxu0
        %v2987 = vadd.f32 0.0, %v2986
        %v2988 = vpop.f32.mrf.mxu0
        %v2989 = vadd.f32 0.0, %v2988
        %2990 = vmatmul.bf16.gmra.mxu0 %v2773
        %v2991 = vpop.f32.mrf.mxu0
        %v2992 = vadd.f32 0.0, %v2991
        %v2993 = vpop.f32.mrf.mxu0
        %v2994 = vadd.f32 0.0, %v2993
        %2995 = vmatmul.bf16.gmra.mxu0 %v2774
        %v2996 = vpop.f32.mrf.mxu0
        %v2997 = vadd.f32 0.0, %v2996
        %v2998 = vpop.f32.mrf.mxu0
        %v2999 = vadd.f32 0.0, %v2998
        %3000 = vmatmul.bf16.gmra.mxu0 %v2775
        %v3001 = vpop.f32.mrf.mxu0
        %v3002 = vadd.f32 0.0, %v3001
        %v3003 = vpop.f32.mrf.mxu0
        %v3004 = vadd.f32 0.0, %v3003
        %3005 = vmatmul.bf16.gmra.mxu0 %v2776
        %v3006 = vpop.f32.mrf.mxu0
        %v3007 = vadd.f32 0.0, %v3006
        %v3008 = vpop.f32.mrf.mxu0
        %v3009 = vadd.f32 0.0, %v3008
        %3010 = vmatmul.bf16.gmra.mxu0 %v2777
        %v3011 = vpop.f32.mrf.mxu0
        %v3012 = vadd.f32 0.0, %v3011
        %v3013 = vpop.f32.mrf.mxu0
        %v3014 = vadd.f32 0.0, %v3013
        %3015 = vmatmul.bf16.gmra.mxu0 %v2778
        %v3016 = vpop.f32.mrf.mxu0
        %v3017 = vadd.f32 0.0, %v3016
        %v3018 = vpop.f32.mrf.mxu0
        %v3019 = vadd.f32 0.0, %v3018
        %3020 = vmatmul.bf16.gmra.mxu0 %v2779
        %v3021 = vpop.f32.mrf.mxu0
        %v3022 = vadd.f32 0.0, %v3021
        %v3023 = vpop.f32.mrf.mxu0
        %v3024 = vadd.f32 0.0, %v3023
        %3025 = vmatmul.bf16.gmra.mxu0 %v2780
        %v3026 = vpop.f32.mrf.mxu0
        %v3027 = vadd.f32 0.0, %v3026
        %v3028 = vpop.f32.mrf.mxu0
        %v3029 = vadd.f32 0.0, %v3028
        %3030 = vmatmul.bf16.gmra.mxu0 %v2781
        %v3031 = vpop.f32.mrf.mxu0
        %v3032 = vadd.f32 0.0, %v3031
        %v3033 = vpop.f32.mrf.mxu0
        %v3034 = vadd.f32 0.0, %v3033
        %3035 = vmatmul.bf16.gmra.mxu0 %v2782
        %v3036 = vpop.f32.mrf.mxu0
        %v3037 = vadd.f32 0.0, %v3036
        %v3038 = vpop.f32.mrf.mxu0
        %v3039 = vadd.f32 0.0, %v3038
        %3040 = vmatmul.bf16.gmra.mxu0 %v2783
        %v3041 = vpop.f32.mrf.mxu0
        %v3042 = vadd.f32 0.0, %v3041
        %v3043 = vpop.f32.mrf.mxu0
        %v3044 = vadd.f32 0.0, %v3043
        %3045 = vmatmul.bf16.gmra.mxu0 %v2784
        %v3046 = vpop.f32.mrf.mxu0
        %v3047 = vadd.f32 0.0, %v3046
        %v3048 = vpop.f32.mrf.mxu0
        %v3049 = vadd.f32 0.0, %v3048
        %3050 = vmatmul.bf16.gmra.mxu0 %v2785
        %v3051 = vpop.f32.mrf.mxu0
        %v3052 = vadd.f32 0.0, %v3051
        %v3053 = vpop.f32.mrf.mxu0
        %v3054 = vadd.f32 0.0, %v3053
        %3055 = vdwg.mxu0
        %3056 = vmatpush.bf16.msra.mxu0 %v2920
        %3057 = vmatpush.bf16.msra.mxu0 %v2919
        %3058 = vmatpush.bf16.msra.mxu0 %v2918
        %3059 = vmatpush.bf16.msra.mxu0 %v2917
        %3060 = vmatpush.bf16.msra.mxu0 %v2916
        %3061 = vmatpush.bf16.msra.mxu0 %v2915
        %3062 = vmatpush.bf16.msra.mxu0 %v2914
        %3063 = vmatpush.bf16.msra.mxu0 %v2913
        %3064 = vmatmul.bf16.gmra.mxu0 %v2765
        %v3065 = vpop.f32.mrf.mxu0
        %v3066 = vadd.f32 %v2947, %v3065
        %v3067 = vpop.f32.mrf.mxu0
        %v3068 = vadd.f32 %v2949, %v3067
        %3069 = vmatmul.bf16.gmra.mxu0 %v2766
        %v3070 = vpop.f32.mrf.mxu0
        %v3071 = vadd.f32 %v2952, %v3070
        %v3072 = vpop.f32.mrf.mxu0
        %v3073 = vadd.f32 %v2954, %v3072
        %3074 = vmatmul.bf16.gmra.mxu0 %v2767
        %v3075 = vpop.f32.mrf.mxu0
        %v3076 = vadd.f32 %v2957, %v3075
        %v3077 = vpop.f32.mrf.mxu0
        %v3078 = vadd.f32 %v2959, %v3077
        %3079 = vmatmul.bf16.gmra.mxu0 %v2768
        %v3080 = vpop.f32.mrf.mxu0
        %v3081 = vadd.f32 %v2962, %v3080
        %v3082 = vpop.f32.mrf.mxu0
        %v3083 = vadd.f32 %v2964, %v3082
        %3084 = vmatmul.bf16.gmra.mxu0 %v2769
        %v3085 = vpop.f32.mrf.mxu0
        %v3086 = vadd.f32 %v2967, %v3085
        %v3087 = vpop.f32.mrf.mxu0
        %v3088 = vadd.f32 %v2969, %v3087
        %3089 = vmatmul.bf16.gmra.mxu0 %v2770
        %v3090 = vpop.f32.mrf.mxu0
        %v3091 = vadd.f32 %v2972, %v3090
        %v3092 = vpop.f32.mrf.mxu0
        %v3093 = vadd.f32 %v2974, %v3092
        %3094 = vmatmul.bf16.gmra.mxu0 %v2771
        %v3095 = vpop.f32.mrf.mxu0
        %v3096 = vadd.f32 %v2977, %v3095
        %v3097 = vpop.f32.mrf.mxu0
        %v3098 = vadd.f32 %v2979, %v3097
        %3099 = vmatmul.bf16.gmra.mxu0 %v2772
        %v3100 = vpop.f32.mrf.mxu0
        %v3101 = vadd.f32 %v2982, %v3100
        %v3102 = vpop.f32.mrf.mxu0
        %v3103 = vadd.f32 %v2984, %v3102
        %3104 = vmatmul.bf16.gmra.mxu0 %v2773
        %v3105 = vpop.f32.mrf.mxu0
        %v3106 = vadd.f32 %v2987, %v3105
        %v3107 = vpop.f32.mrf.mxu0
        %v3108 = vadd.f32 %v2989, %v3107
        %3109 = vmatmul.bf16.gmra.mxu0 %v2774
        %v3110 = vpop.f32.mrf.mxu0
        %v3111 = vadd.f32 %v2992, %v3110
        %v3112 = vpop.f32.mrf.mxu0
        %v3113 = vadd.f32 %v2994, %v3112
        %3114 = vmatmul.bf16.gmra.mxu0 %v2775
        %v3115 = vpop.f32.mrf.mxu0
        %v3116 = vadd.f32 %v2997, %v3115
        %v3117 = vpop.f32.mrf.mxu0
        %v3118 = vadd.f32 %v2999, %v3117
        %3119 = vmatmul.bf16.gmra.mxu0 %v2776
        %v3120 = vpop.f32.mrf.mxu0
        %v3121 = vadd.f32 %v3002, %v3120
        %v3122 = vpop.f32.mrf.mxu0
        %v3123 = vadd.f32 %v3004, %v3122
        %3124 = vmatmul.bf16.gmra.mxu0 %v2777
        %v3125 = vpop.f32.mrf.mxu0
        %v3126 = vadd.f32 %v3007, %v3125
        %v3127 = vpop.f32.mrf.mxu0
        %v3128 = vadd.f32 %v3009, %v3127
        %3129 = vmatmul.bf16.gmra.mxu0 %v2778
        %v3130 = vpop.f32.mrf.mxu0
        %v3131 = vadd.f32 %v3012, %v3130
        %v3132 = vpop.f32.mrf.mxu0
        %v3133 = vadd.f32 %v3014, %v3132
        %3134 = vmatmul.bf16.gmra.mxu0 %v2779
        %v3135 = vpop.f32.mrf.mxu0
        %v3136 = vadd.f32 %v3017, %v3135
        %v3137 = vpop.f32.mrf.mxu0
        %v3138 = vadd.f32 %v3019, %v3137
        %3139 = vmatmul.bf16.gmra.mxu0 %v2780
        %v3140 = vpop.f32.mrf.mxu0
        %v3141 = vadd.f32 %v3022, %v3140
        %v3142 = vpop.f32.mrf.mxu0
        %v3143 = vadd.f32 %v3024, %v3142
        %3144 = vmatmul.bf16.gmra.mxu0 %v2781
        %v3145 = vpop.f32.mrf.mxu0
        %v3146 = vadd.f32 %v3027, %v3145
        %v3147 = vpop.f32.mrf.mxu0
        %v3148 = vadd.f32 %v3029, %v3147
        %3149 = vmatmul.bf16.gmra.mxu0 %v2782
        %v3150 = vpop.f32.mrf.mxu0
        %v3151 = vadd.f32 %v3032, %v3150
        %v3152 = vpop.f32.mrf.mxu0
        %v3153 = vadd.f32 %v3034, %v3152
        %3154 = vmatmul.bf16.gmra.mxu0 %v2783
        %v3155 = vpop.f32.mrf.mxu0
        %v3156 = vadd.f32 %v3037, %v3155
        %v3157 = vpop.f32.mrf.mxu0
        %v3158 = vadd.f32 %v3039, %v3157
        %3159 = vmatmul.bf16.gmra.mxu0 %v2784
        %v3160 = vpop.f32.mrf.mxu0
        %v3161 = vadd.f32 %v3042, %v3160
        %v3162 = vpop.f32.mrf.mxu0
        %v3163 = vadd.f32 %v3044, %v3162
        %3164 = vmatmul.bf16.gmra.mxu0 %v2785
        %v3165 = vpop.f32.mrf.mxu0
        %v3166 = vadd.f32 %v3047, %v3165
        %v3167 = vpop.f32.mrf.mxu0
        %v3168 = vadd.f32 %v3049, %v3167
        %3169 = vmatmul.bf16.gmra.mxu0 %v2764
        %v3170 = vpop.f32.mrf.mxu0
        %v3171 = vadd.f32 %v3052, %v3170
        %v3172 = vpop.f32.mrf.mxu0
        %v3173 = vadd.f32 %v3054, %v3172
        %3174 = vdwg.mxu0
        %v3175 = vadd.f32 %v2499, %v3066
        %v3176 = vadd.f32 %v2500, %v3068
        %v3177 = vadd.f32 %v2501, %v3071
        %v3178 = vadd.f32 %v2502, %v3073
        %v3179 = vadd.f32 %v2503, %v3076
        %v3180 = vadd.f32 %v2504, %v3078
        %v3181 = vadd.f32 %v2505, %v3081
        %v3182 = vadd.f32 %v2506, %v3083
        %v3183 = vadd.f32 %v2507, %v3086
        %v3184 = vadd.f32 %v2508, %v3088
        %v3185 = vadd.f32 %v2509, %v3091
        %v3186 = vadd.f32 %v2510, %v3093
        %v3187 = vadd.f32 %v2511, %v3096
        %v3188 = vadd.f32 %v2512, %v3098
        %v3189 = vadd.f32 %v2513, %v3101
        %v3190 = vadd.f32 %v2514, %v3103
        %v3191 = vadd.f32 %v2515, %v3106
        %v3192 = vadd.f32 %v2516, %v3108
        %v3193 = vadd.f32 %v2517, %v3111
        %v3194 = vadd.f32 %v2518, %v3113
        %v3195 = vadd.f32 %v2519, %v3116
        %v3196 = vadd.f32 %v2520, %v3118
        %v3197 = vadd.f32 %v2521, %v3121
        %v3198 = vadd.f32 %v2522, %v3123
        %v3199 = vadd.f32 %v2523, %v3126
        %v3200 = vadd.f32 %v2524, %v3128
        %v3201 = vadd.f32 %v2525, %v3131
        %v3202 = vadd.f32 %v2526, %v3133
        %v3203 = vadd.f32 %v2527, %v3136
        %v3204 = vadd.f32 %v2528, %v3138
        %v3205 = vadd.f32 %v2529, %v3141
        %v3206 = vadd.f32 %v2530, %v3143
        %v3207 = vadd.f32 %v2531, %v3146
        %v3208 = vadd.f32 %v2532, %v3148
        %v3209 = vadd.f32 %v2533, %v3151
        %v3210 = vadd.f32 %v2534, %v3153
        %v3211 = vadd.f32 %v2535, %v3156
        %v3212 = vadd.f32 %v2536, %v3158
        %v3213 = vadd.f32 %v2537, %v3161
        %v3214 = vadd.f32 %v2538, %v3163
        %v3215 = vadd.f32 %v2539, %v3166
        %v3216 = vadd.f32 %v2540, %v3168
        %v3217 = vadd.f32 %v2541, %v3171
        %v3218 = vadd.f32 %v2542, %v3173
        %v3219 = vrot.slane %v720, 2
        %v3220 = vrot.slane %v721, 2
        %v3221 = vrot.slane %v722, 2
        %v3222 = vrot.slane %v723, 2
        %v3223 = vrot.slane %v724, 2
        %v3224 = vrot.slane %v725, 2
        %v3225 = vrot.slane %v726, 2
        %v3226 = vrot.slane %v727, 2
        %v3227 = vrot.slane %v728, 2
        %v3228 = vrot.slane %v729, 2
        %v3229 = vrot.slane %v730, 2
        %v3230 = vrot.slane %v731, 2
        %v3231 = vrot.slane %v732, 2
        %v3232 = vrot.slane %v733, 2
        %v3233 = vrot.slane %v734, 2
        %v3234 = vrot.slane %v735, 2
        %v3235 = vrot.slane %v736, 2
        %v3236 = vrot.slane %v737, 2
        %v3237 = vrot.slane %v738, 2
        %v3238 = vrot.slane %v739, 2
        %v3239 = vrot.slane %v740, 2
        %v3240 = vrot.slane %v741, 2
        %v3241 = vrot.slane %v742, 2
        %v3242 = vrot.slane %v743, 2
        %v3243 = vrot.slane %v744, 2
        %v3244 = vrot.slane %v745, 2
        %v3245 = vrot.slane %v746, 2
        %v3246 = vrot.slane %v747, 2
        %v3247 = vrot.slane %v748, 2
        %v3248 = vrot.slane %v749, 2
        %v3249 = vrot.slane %v750, 2
        %v3250 = vrot.slane %v751, 2
        %v3251 = vrot.slane %v752, 2
        %v3252 = vrot.slane %v753, 2
        %v3253 = vrot.slane %v754, 2
        %v3254 = vrot.slane %v755, 2
        %v3255 = vrot.slane %v756, 2
        %v3256 = vrot.slane %v757, 2
        %v3257 = vrot.slane %v758, 2
        %v3258 = vrot.slane %v759, 2
        %v3259 = vrot.slane %v760, 2
        %v3260 = vrot.slane %v761, 2
        %v3261 = vrot.slane %v762, 2
        %v3262 = vrot.slane %v763, 2
        %vm3263 = vcmp.lt.s32.totalorder %v847, 6
        %v3264 = vsel %vm3263, %v3261, %v3262
        %v3265 = vsel %vm3263, %v3260, %v3261
        %v3266 = vsel %vm3263, %v3259, %v3260
        %v3267 = vsel %vm3263, %v3258, %v3259
        %v3268 = vsel %vm3263, %v3257, %v3258
        %v3269 = vsel %vm3263, %v3256, %v3257
        %v3270 = vsel %vm3263, %v3255, %v3256
        %v3271 = vsel %vm3263, %v3254, %v3255
        %v3272 = vsel %vm3263, %v3253, %v3254
        %v3273 = vsel %vm3263, %v3252, %v3253
        %v3274 = vsel %vm3263, %v3251, %v3252
        %v3275 = vsel %vm3263, %v3250, %v3251
        %v3276 = vsel %vm3263, %v3249, %v3250
        %v3277 = vsel %vm3263, %v3248, %v3249
        %v3278 = vsel %vm3263, %v3247, %v3248
        %v3279 = vsel %vm3263, %v3246, %v3247
        %v3280 = vsel %vm3263, %v3245, %v3246
        %v3281 = vsel %vm3263, %v3244, %v3245
        %v3282 = vsel %vm3263, %v3243, %v3244
        %v3283 = vsel %vm3263, %v3242, %v3243
        %v3284 = vsel %vm3263, %v3241, %v3242
        %v3285 = vsel %vm3263, %v3240, %v3241
        %v3286 = vsel %vm3263, %v3239, %v3240
        %v3287 = vsel %vm3263, %v3238, %v3239
        %v3288 = vsel %vm3263, %v3237, %v3238
        %v3289 = vsel %vm3263, %v3236, %v3237
        %v3290 = vsel %vm3263, %v3235, %v3236
        %v3291 = vsel %vm3263, %v3234, %v3235
        %v3292 = vsel %vm3263, %v3233, %v3234
        %v3293 = vsel %vm3263, %v3232, %v3233
        %v3294 = vsel %vm3263, %v3231, %v3232
        %v3295 = vsel %vm3263, %v3230, %v3231
        %v3296 = vsel %vm3263, %v3229, %v3230
        %v3297 = vsel %vm3263, %v3228, %v3229
        %v3298 = vsel %vm3263, %v3227, %v3228
        %v3299 = vsel %vm3263, %v3226, %v3227
        %v3300 = vsel %vm3263, %v3225, %v3226
        %v3301 = vsel %vm3263, %v3224, %v3225
        %v3302 = vsel %vm3263, %v3223, %v3224
        %v3303 = vsel %vm3263, %v3222, %v3223
        %v3304 = vsel %vm3263, %v3221, %v3222
        %v3305 = vsel %vm3263, %v3220, %v3221
        %v3306 = vsel %vm3263, %v3219, %v3220
        %v3307 = vsel %vm3263, %v3262, %v3219
        %v3308 = vpack.c.bf16 %v3304, %v3304
        %v3309 = vpack.c.bf16 %v3303, %v3303
        %v3310 = vpack.c.bf16 %v3302, %v3302
        %v3311 = vpack.c.bf16 %v3301, %v3301
        %v3312 = vpack.c.bf16 %v3300, %v3300
        %v3313 = vpack.c.bf16 %v3299, %v3299
        %v3314 = vpack.c.bf16 %v3298, %v3298
        %v3315 = vpack.c.bf16 %v3297, %v3297
        %v3316 = vpack.c.bf16 %v3296, %v3296
        %v3317 = vpack.c.bf16 %v3295, %v3295
        %v3318 = vpack.c.bf16 %v3294, %v3294
        %v3319 = vpack.c.bf16 %v3293, %v3293
        %v3320 = vpack.c.bf16 %v3292, %v3292
        %v3321 = vpack.c.bf16 %v3291, %v3291
        %v3322 = vpack.c.bf16 %v3290, %v3290
        %v3323 = vpack.c.bf16 %v3289, %v3289
        %v3324 = vpack.c.bf16 %v3288, %v3288
        %v3325 = vpack.c.bf16 %v3287, %v3287
        %v3326 = vpack.c.bf16 %v3286, %v3286
        %v3327 = vpack.c.bf16 %v3285, %v3285
        %v3328 = vpack.c.bf16 %v3284, %v3284
        %v3329 = vpack.c.bf16 %v3283, %v3283
        %v3330 = vpack.c.bf16 %v3282, %v3282
        %v3331 = vpack.c.bf16 %v3281, %v3281
        %v3332 = vpack.c.bf16 %v3280, %v3280
        %v3333 = vpack.c.bf16 %v3279, %v3279
        %v3334 = vpack.c.bf16 %v3278, %v3278
        %v3335 = vpack.c.bf16 %v3277, %v3277
        %v3336 = vpack.c.bf16 %v3276, %v3276
        %v3337 = vpack.c.bf16 %v3275, %v3275
        %v3338 = vpack.c.bf16 %v3274, %v3274
        %v3339 = vpack.c.bf16 %v3273, %v3273
        %v3340 = vpack.c.bf16 %v3272, %v3272
        %v3341 = vpack.c.bf16 %v3271, %v3271
        %v3342 = vpack.c.bf16 %v3270, %v3270
        %v3343 = vpack.c.bf16 %v3269, %v3269
        %v3344 = vpack.c.bf16 %v3268, %v3268
        %v3345 = vpack.c.bf16 %v3267, %v3267
        %v3346 = vpack.c.bf16 %v3266, %v3266
        %v3347 = vpack.c.bf16 %v3265, %v3265
        %v3348 = vpack.c.bf16 %v3264, %v3264
        %v3349 = vpack.c.bf16 %v3307, %v3307
        %v3350 = vpack.c.bf16 %v3306, %v3306
        %v3351 = vpack.c.bf16 %v3305, %v3305
        %v3352 = vrot.slane %v720, 3
        %v3353 = vrot.slane %v721, 3
        %v3354 = vrot.slane %v722, 3
        %v3355 = vrot.slane %v723, 3
        %v3356 = vrot.slane %v724, 3
        %v3357 = vrot.slane %v725, 3
        %v3358 = vrot.slane %v726, 3
        %v3359 = vrot.slane %v727, 3
        %v3360 = vrot.slane %v728, 3
        %v3361 = vrot.slane %v729, 3
        %v3362 = vrot.slane %v730, 3
        %v3363 = vrot.slane %v731, 3
        %v3364 = vrot.slane %v732, 3
        %v3365 = vrot.slane %v733, 3
        %v3366 = vrot.slane %v734, 3
        %v3367 = vrot.slane %v735, 3
        %v3368 = vrot.slane %v736, 3
        %v3369 = vrot.slane %v737, 3
        %v3370 = vrot.slane %v738, 3
        %v3371 = vrot.slane %v739, 3
        %v3372 = vrot.slane %v740, 3
        %v3373 = vrot.slane %v741, 3
        %v3374 = vrot.slane %v742, 3
        %v3375 = vrot.slane %v743, 3
        %v3376 = vrot.slane %v744, 3
        %v3377 = vrot.slane %v745, 3
        %v3378 = vrot.slane %v746, 3
        %v3379 = vrot.slane %v747, 3
        %v3380 = vrot.slane %v748, 3
        %v3381 = vrot.slane %v749, 3
        %v3382 = vrot.slane %v750, 3
        %v3383 = vrot.slane %v751, 3
        %v3384 = vrot.slane %v752, 3
        %v3385 = vrot.slane %v753, 3
        %v3386 = vrot.slane %v754, 3
        %v3387 = vrot.slane %v755, 3
        %v3388 = vrot.slane %v756, 3
        %v3389 = vrot.slane %v757, 3
        %v3390 = vrot.slane %v758, 3
        %v3391 = vrot.slane %v759, 3
        %v3392 = vrot.slane %v760, 3
        %v3393 = vrot.slane %v761, 3
        %v3394 = vrot.slane %v762, 3
        %v3395 = vrot.slane %v763, 3
        %vm3396 = vcmp.lt.s32.totalorder %v847, 5
        %v3397 = vsel %vm3396, %v3394, %v3395
        %v3398 = vsel %vm3396, %v3393, %v3394
        %v3399 = vsel %vm3396, %v3392, %v3393
        %v3400 = vsel %vm3396, %v3391, %v3392
        %v3401 = vsel %vm3396, %v3390, %v3391
        %v3402 = vsel %vm3396, %v3389, %v3390
        %v3403 = vsel %vm3396, %v3388, %v3389
        %v3404 = vsel %vm3396, %v3387, %v3388
        %v3405 = vsel %vm3396, %v3386, %v3387
        %v3406 = vsel %vm3396, %v3385, %v3386
        %v3407 = vsel %vm3396, %v3384, %v3385
        %v3408 = vsel %vm3396, %v3383, %v3384
        %v3409 = vsel %vm3396, %v3382, %v3383
        %v3410 = vsel %vm3396, %v3381, %v3382
        %v3411 = vsel %vm3396, %v3380, %v3381
        %v3412 = vsel %vm3396, %v3379, %v3380
        %v3413 = vsel %vm3396, %v3378, %v3379
        %v3414 = vsel %vm3396, %v3377, %v3378
        %v3415 = vsel %vm3396, %v3376, %v3377
        %v3416 = vsel %vm3396, %v3375, %v3376
        %v3417 = vsel %vm3396, %v3374, %v3375
        %v3418 = vsel %vm3396, %v3373, %v3374
        %v3419 = vsel %vm3396, %v3372, %v3373
        %v3420 = vsel %vm3396, %v3371, %v3372
        %v3421 = vsel %vm3396, %v3370, %v3371
        %v3422 = vsel %vm3396, %v3369, %v3370
        %v3423 = vsel %vm3396, %v3368, %v3369
        %v3424 = vsel %vm3396, %v3367, %v3368
        %v3425 = vsel %vm3396, %v3366, %v3367
        %v3426 = vsel %vm3396, %v3365, %v3366
        %v3427 = vsel %vm3396, %v3364, %v3365
        %v3428 = vsel %vm3396, %v3363, %v3364
        %v3429 = vsel %vm3396, %v3362, %v3363
        %v3430 = vsel %vm3396, %v3361, %v3362
        %v3431 = vsel %vm3396, %v3360, %v3361
        %v3432 = vsel %vm3396, %v3359, %v3360
        %v3433 = vsel %vm3396, %v3358, %v3359
        %v3434 = vsel %vm3396, %v3357, %v3358
        %v3435 = vsel %vm3396, %v3356, %v3357
        %v3436 = vsel %vm3396, %v3355, %v3356
        %v3437 = vsel %vm3396, %v3354, %v3355
        %v3438 = vsel %vm3396, %v3353, %v3354
        %v3439 = vsel %vm3396, %v3352, %v3353
        %v3440 = vsel %vm3396, %v3395, %v3352
        %v3441 = vpack.c.bf16 %v3437, %v3437
        %v3442 = vpack.c.bf16 %v3436, %v3436
        %v3443 = vpack.c.bf16 %v3435, %v3435
        %v3444 = vpack.c.bf16 %v3434, %v3434
        %v3445 = vpack.c.bf16 %v3433, %v3433
        %v3446 = vpack.c.bf16 %v3432, %v3432
        %v3447 = vpack.c.bf16 %v3431, %v3431
        %v3448 = vpack.c.bf16 %v3430, %v3430
        %v3449 = vpack.c.bf16 %v3429, %v3429
        %v3450 = vpack.c.bf16 %v3428, %v3428
        %v3451 = vpack.c.bf16 %v3427, %v3427
        %v3452 = vpack.c.bf16 %v3426, %v3426
        %v3453 = vpack.c.bf16 %v3425, %v3425
        %v3454 = vpack.c.bf16 %v3424, %v3424
        %v3455 = vpack.c.bf16 %v3423, %v3423
        %v3456 = vpack.c.bf16 %v3422, %v3422
        %v3457 = vpack.c.bf16 %v3421, %v3421
        %v3458 = vpack.c.bf16 %v3420, %v3420
        %v3459 = vpack.c.bf16 %v3419, %v3419
        %v3460 = vpack.c.bf16 %v3418, %v3418
        %v3461 = vpack.c.bf16 %v3417, %v3417
        %v3462 = vpack.c.bf16 %v3416, %v3416
        %v3463 = vpack.c.bf16 %v3415, %v3415
        %v3464 = vpack.c.bf16 %v3414, %v3414
        %v3465 = vpack.c.bf16 %v3413, %v3413
        %v3466 = vpack.c.bf16 %v3412, %v3412
        %v3467 = vpack.c.bf16 %v3411, %v3411
        %v3468 = vpack.c.bf16 %v3410, %v3410
        %v3469 = vpack.c.bf16 %v3409, %v3409
        %v3470 = vpack.c.bf16 %v3408, %v3408
        %v3471 = vpack.c.bf16 %v3407, %v3407
        %v3472 = vpack.c.bf16 %v3406, %v3406
        %v3473 = vpack.c.bf16 %v3405, %v3405
        %v3474 = vpack.c.bf16 %v3404, %v3404
        %v3475 = vpack.c.bf16 %v3403, %v3403
        %v3476 = vpack.c.bf16 %v3402, %v3402
        %v3477 = vpack.c.bf16 %v3401, %v3401
        %v3478 = vpack.c.bf16 %v3400, %v3400
        %v3479 = vpack.c.bf16 %v3399, %v3399
        %v3480 = vpack.c.bf16 %v3398, %v3398
        %v3481 = vpack.c.bf16 %v3397, %v3397
        %v3482 = vpack.c.bf16 %v3440, %v3440
        %v3483 = vpack.c.bf16 %v3439, %v3439
        %v3484 = vpack.c.bf16 %v3438, %v3438
        %v3529 = vunpack.c.l.b16 %v3308
        %v3530 = vunpack.c.l.b16 %v3309
        %v3531 = vunpack.c.l.b16 %v3310
        %v3532 = vunpack.c.l.b16 %v3311
        %v3533 = vunpack.c.l.b16 %v3312
        %v3534 = vunpack.c.l.b16 %v3313
        %v3535 = vunpack.c.l.b16 %v3314
        %v3536 = vunpack.c.l.b16 %v3315
        %v3537 = vunpack.c.l.b16 %v3316
        %v3538 = vunpack.c.l.b16 %v3317
        %v3539 = vunpack.c.l.b16 %v3318
        %v3540 = vunpack.c.l.b16 %v3319
        %v3541 = vunpack.c.l.b16 %v3320
        %v3542 = vunpack.c.l.b16 %v3321
        %v3543 = vunpack.c.l.b16 %v3322
        %v3544 = vunpack.c.l.b16 %v3323
        %v3545 = vunpack.c.l.b16 %v3324
        %v3546 = vunpack.c.l.b16 %v3325
        %v3547 = vunpack.c.l.b16 %v3326
        %v3548 = vunpack.c.l.b16 %v3327
        %v3549 = vunpack.c.l.b16 %v3328
        %v3550 = vunpack.c.l.b16 %v3329
        %v3551 = vunpack.c.l.b16 %v3330
        %v3552 = vunpack.c.l.b16 %v3331
        %v3553 = vunpack.c.l.b16 %v3332
        %v3554 = vunpack.c.l.b16 %v3333
        %v3555 = vunpack.c.l.b16 %v3334
        %v3556 = vunpack.c.l.b16 %v3335
        %v3557 = vunpack.c.l.b16 %v3336
        %v3558 = vunpack.c.l.b16 %v3337
        %v3559 = vunpack.c.l.b16 %v3338
        %v3560 = vunpack.c.l.b16 %v3339
        %v3561 = vunpack.c.l.b16 %v3340
        %v3562 = vunpack.c.l.b16 %v3341
        %v3563 = vunpack.c.l.b16 %v3342
        %v3564 = vunpack.c.l.b16 %v3343
        %v3565 = vunpack.c.l.b16 %v3344
        %v3566 = vunpack.c.l.b16 %v3345
        %v3567 = vunpack.c.l.b16 %v3346
        %v3568 = vunpack.c.l.b16 %v3347
        %v3569 = vunpack.c.l.b16 %v3348
        %v3570 = vunpack.c.l.b16 %v3349
        %v3571 = vunpack.c.l.b16 %v3350
        %v3572 = vunpack.c.l.b16 %v3351
        %v3573 = vpack.c.b16 %v3530, %v3529
        %v3574 = vpack.c.b16 %v3532, %v3531
        %v3575 = vpack.c.b16 %v3534, %v3533
        %v3576 = vpack.c.b16 %v3536, %v3535
        %v3577 = vpack.c.b16 %v3538, %v3537
        %v3578 = vpack.c.b16 %v3540, %v3539
        %v3579 = vpack.c.b16 %v3542, %v3541
        %v3580 = vpack.c.b16 %v3544, %v3543
        %v3581 = vpack.c.b16 %v3546, %v3545
        %v3582 = vpack.c.b16 %v3548, %v3547
        %v3583 = vpack.c.b16 %v3550, %v3549
        %v3584 = vpack.c.b16 %v3552, %v3551
        %v3585 = vpack.c.b16 %v3554, %v3553
        %v3586 = vpack.c.b16 %v3556, %v3555
        %v3587 = vpack.c.b16 %v3558, %v3557
        %v3588 = vpack.c.b16 %v3560, %v3559
        %v3589 = vpack.c.b16 %v3562, %v3561
        %v3590 = vpack.c.b16 %v3564, %v3563
        %v3591 = vpack.c.b16 %v3566, %v3565
        %v3592 = vpack.c.b16 %v3568, %v3567
        %v3593 = vpack.c.b16 %v3570, %v3569
        %v3594 = vpack.c.b16 %v3572, %v3571
        %v3661 = vunpack.c.l.b16 %v3441
        %v3662 = vunpack.c.l.b16 %v3442
        %v3663 = vunpack.c.l.b16 %v3443
        %v3664 = vunpack.c.l.b16 %v3444
        %v3665 = vunpack.c.l.b16 %v3445
        %v3666 = vunpack.c.l.b16 %v3446
        %v3667 = vunpack.c.l.b16 %v3447
        %v3668 = vunpack.c.l.b16 %v3448
        %v3669 = vunpack.c.l.b16 %v3449
        %v3670 = vunpack.c.l.b16 %v3450
        %v3671 = vunpack.c.l.b16 %v3451
        %v3672 = vunpack.c.l.b16 %v3452
        %v3673 = vunpack.c.l.b16 %v3453
        %v3674 = vunpack.c.l.b16 %v3454
        %v3675 = vunpack.c.l.b16 %v3455
        %v3676 = vunpack.c.l.b16 %v3456
        %v3677 = vunpack.c.l.b16 %v3457
        %v3678 = vunpack.c.l.b16 %v3458
        %v3679 = vunpack.c.l.b16 %v3459
        %v3680 = vunpack.c.l.b16 %v3460
        %v3681 = vunpack.c.l.b16 %v3461
        %v3682 = vunpack.c.l.b16 %v3462
        %v3683 = vunpack.c.l.b16 %v3463
        %v3684 = vunpack.c.l.b16 %v3464
        %v3685 = vunpack.c.l.b16 %v3465
        %v3686 = vunpack.c.l.b16 %v3466
        %v3687 = vunpack.c.l.b16 %v3467
        %v3688 = vunpack.c.l.b16 %v3468
        %v3689 = vunpack.c.l.b16 %v3469
        %v3690 = vunpack.c.l.b16 %v3470
        %v3691 = vunpack.c.l.b16 %v3471
        %v3692 = vunpack.c.l.b16 %v3472
        %v3693 = vunpack.c.l.b16 %v3473
        %v3694 = vunpack.c.l.b16 %v3474
        %v3695 = vunpack.c.l.b16 %v3475
        %v3696 = vunpack.c.l.b16 %v3476
        %v3697 = vunpack.c.l.b16 %v3477
        %v3698 = vunpack.c.l.b16 %v3478
        %v3699 = vunpack.c.l.b16 %v3479
        %v3700 = vunpack.c.l.b16 %v3480
        %v3701 = vunpack.c.l.b16 %v3481
        %v3702 = vunpack.c.l.b16 %v3482
        %v3703 = vunpack.c.l.b16 %v3483
        %v3704 = vunpack.c.l.b16 %v3484
        %v3705 = vpack.c.b16 %v3662, %v3661
        %v3706 = vpack.c.b16 %v3664, %v3663
        %v3707 = vpack.c.b16 %v3666, %v3665
        %v3708 = vpack.c.b16 %v3668, %v3667
        %v3709 = vpack.c.b16 %v3670, %v3669
        %v3710 = vpack.c.b16 %v3672, %v3671
        %v3711 = vpack.c.b16 %v3674, %v3673
        %v3712 = vpack.c.b16 %v3676, %v3675
        %v3713 = vpack.c.b16 %v3678, %v3677
        %v3714 = vpack.c.b16 %v3680, %v3679
        %v3715 = vpack.c.b16 %v3682, %v3681
        %v3716 = vpack.c.b16 %v3684, %v3683
        %v3717 = vpack.c.b16 %v3686, %v3685
        %v3718 = vpack.c.b16 %v3688, %v3687
        %v3719 = vpack.c.b16 %v3690, %v3689
        %v3720 = vpack.c.b16 %v3692, %v3691
        %v3721 = vpack.c.b16 %v3694, %v3693
        %v3722 = vpack.c.b16 %v3696, %v3695
        %v3723 = vpack.c.b16 %v3698, %v3697
        %v3724 = vpack.c.b16 %v3700, %v3699
        %v3725 = vpack.c.b16 %v3702, %v3701
        %v3726 = vpack.c.b16 %v3704, %v3703
        %s3749 = scalar_lea.vmem [#allocation7], 384
        %v3750 = vld [vmem:[%s3749] sm:$0xf]
        %v3751 = vld [vmem:[%s3749 + $0x4] sm:$0xf]
        %v3752 = vld [vmem:[%s3749 + $0x8] sm:$0xf]
        %v3753 = vld [vmem:[%s3749 + $0xc] sm:$0xf]
        %v3754 = vld [vmem:[%s3749 + $0x10] sm:$0xf]
        %v3755 = vld [vmem:[%s3749 + $0x14] sm:$0xf]
        %v3756 = vld [vmem:[%s3749 + $0x18] sm:$0xf]
        %v3757 = vld [vmem:[%s3749 + $0x1c] sm:$0xf]
        %v3758 = vld [vmem:[%s3749 + $0x20] sm:$0xf]
        %v3759 = vld [vmem:[%s3749 + $0x24] sm:$0xf]
        %v3760 = vld [vmem:[%s3749 + $0x28] sm:$0xf]
        %v3761 = vld [vmem:[%s3749 + $0x2c] sm:$0xf]
        %v3762 = vld [vmem:[%s3749 + $0x30] sm:$0xf]
        %v3763 = vld [vmem:[%s3749 + $0x34] sm:$0xf]
        %v3764 = vld [vmem:[%s3749 + $0x38] sm:$0xf]
        %v3765 = vld [vmem:[%s3749 + $0x3c] sm:$0xf]
        %v3766 = vld [vmem:[%s3749 + $0x40] sm:$0xf]
        %v3767 = vld [vmem:[%s3749 + $0x44] sm:$0xf]
        %v3768 = vld [vmem:[%s3749 + $0x48] sm:$0xf]
        %v3769 = vld [vmem:[%s3749 + $0x4c] sm:$0xf]
        %v3770 = vld [vmem:[%s3749 + $0x50] sm:$0xf]
        %v3771 = vld [vmem:[%s3749 + $0x54] sm:$0xf]
        %v3772 = vld [vmem:[%s3749 + $0x58] sm:$0xf]
        %v3773 = vld [vmem:[%s3749 + $0x5c] sm:$0xf]
        %v3774 = vld [vmem:[%s3749 + $0x60] sm:$0xf]
        %v3775 = vld [vmem:[%s3749 + $0x64] sm:$0xf]
        %v3776 = vld [vmem:[%s3749 + $0x68] sm:$0xf]
        %v3777 = vld [vmem:[%s3749 + $0x6c] sm:$0xf]
        %v3778 = vld [vmem:[%s3749 + $0x70] sm:$0xf]
        %v3779 = vld [vmem:[%s3749 + $0x74] sm:$0xf]
        %v3780 = vld [vmem:[%s3749 + $0x78] sm:$0xf]
        %v3781 = vld [vmem:[%s3749 + $0x7c] sm:$0xf]
        %v3814 = vunpack.c.l.b16 %v3750
        %v3815 = vunpack.c.l.b16 %v3751
        %v3816 = vunpack.c.l.b16 %v3752
        %v3817 = vunpack.c.l.b16 %v3753
        %v3818 = vunpack.c.l.b16 %v3754
        %v3819 = vunpack.c.l.b16 %v3755
        %v3820 = vunpack.c.l.b16 %v3756
        %v3821 = vunpack.c.l.b16 %v3757
        %v3822 = vunpack.c.l.b16 %v3758
        %v3823 = vunpack.c.l.b16 %v3759
        %v3824 = vunpack.c.l.b16 %v3760
        %v3825 = vunpack.c.l.b16 %v3761
        %v3826 = vunpack.c.l.b16 %v3762
        %v3827 = vunpack.c.l.b16 %v3763
        %v3828 = vunpack.c.l.b16 %v3764
        %v3829 = vunpack.c.l.b16 %v3765
        %v3830 = vunpack.c.l.b16 %v3766
        %v3831 = vunpack.c.l.b16 %v3767
        %v3832 = vunpack.c.l.b16 %v3768
        %v3833 = vunpack.c.l.b16 %v3769
        %v3834 = vunpack.c.l.b16 %v3770
        %v3835 = vunpack.c.l.b16 %v3771
        %v3836 = vunpack.c.l.b16 %v3772
        %v3837 = vunpack.c.l.b16 %v3773
        %v3838 = vunpack.c.l.b16 %v3774
        %v3839 = vunpack.c.l.b16 %v3775
        %v3840 = vunpack.c.l.b16 %v3776
        %v3841 = vunpack.c.l.b16 %v3777
        %v3842 = vunpack.c.l.b16 %v3778
        %v3843 = vunpack.c.l.b16 %v3779
        %v3844 = vunpack.c.l.b16 %v3780
        %v3845 = vunpack.c.l.b16 %v3781
        %v3846 = vpack.c.b16 %v3815, %v3814
        %v3847 = vpack.c.b16 %v3817, %v3816
        %v3848 = vpack.c.b16 %v3819, %v3818
        %v3849 = vpack.c.b16 %v3821, %v3820
        %v3850 = vpack.c.b16 %v3823, %v3822
        %v3851 = vpack.c.b16 %v3825, %v3824
        %v3852 = vpack.c.b16 %v3827, %v3826
        %v3853 = vpack.c.b16 %v3829, %v3828
        %v3854 = vpack.c.b16 %v3831, %v3830
        %v3855 = vpack.c.b16 %v3833, %v3832
        %v3856 = vpack.c.b16 %v3835, %v3834
        %v3857 = vpack.c.b16 %v3837, %v3836
        %v3858 = vpack.c.b16 %v3839, %v3838
        %v3859 = vpack.c.b16 %v3841, %v3840
        %v3860 = vpack.c.b16 %v3843, %v3842
        %v3861 = vpack.c.b16 %v3845, %v3844
        %3878 = vmatpush.bf16.msra.mxu0 %v3853
        %3879 = vmatpush.bf16.msra.mxu0 %v3852
        %3880 = vmatpush.bf16.msra.mxu0 %v3851
        %3881 = vmatpush.bf16.msra.mxu0 %v3850
        %3882 = vmatpush.bf16.msra.mxu0 %v3849
        %3883 = vmatpush.bf16.msra.mxu0 %v3848
        %3884 = vmatpush.bf16.msra.mxu0 %v3847
        %3885 = vmatpush.bf16.msra.mxu0 %v3846
        %3886 = vmatmul.bf16.gmra.mxu0 %v3573
        %v3887 = vpop.f32.mrf.mxu0
        %v3888 = vadd.f32 0.0, %v3887
        %v3889 = vpop.f32.mrf.mxu0
        %v3890 = vadd.f32 0.0, %v3889
        %3891 = vmatmul.bf16.gmra.mxu0 %v3574
        %v3892 = vpop.f32.mrf.mxu0
        %v3893 = vadd.f32 0.0, %v3892
        %v3894 = vpop.f32.mrf.mxu0
        %v3895 = vadd.f32 0.0, %v3894
        %3896 = vmatmul.bf16.gmra.mxu0 %v3575
        %v3897 = vpop.f32.mrf.mxu0
        %v3898 = vadd.f32 0.0, %v3897
        %v3899 = vpop.f32.mrf.mxu0
        %v3900 = vadd.f32 0.0, %v3899
        %3901 = vmatmul.bf16.gmra.mxu0 %v3576
        %v3902 = vpop.f32.mrf.mxu0
        %v3903 = vadd.f32 0.0, %v3902
        %v3904 = vpop.f32.mrf.mxu0
        %v3905 = vadd.f32 0.0, %v3904
        %3906 = vmatmul.bf16.gmra.mxu0 %v3577
        %v3907 = vpop.f32.mrf.mxu0
        %v3908 = vadd.f32 0.0, %v3907
        %v3909 = vpop.f32.mrf.mxu0
        %v3910 = vadd.f32 0.0, %v3909
        %3911 = vmatmul.bf16.gmra.mxu0 %v3578
        %v3912 = vpop.f32.mrf.mxu0
        %v3913 = vadd.f32 0.0, %v3912
        %v3914 = vpop.f32.mrf.mxu0
        %v3915 = vadd.f32 0.0, %v3914
        %3916 = vmatmul.bf16.gmra.mxu0 %v3579
        %v3917 = vpop.f32.mrf.mxu0
        %v3918 = vadd.f32 0.0, %v3917
        %v3919 = vpop.f32.mrf.mxu0
        %v3920 = vadd.f32 0.0, %v3919
        %3921 = vmatmul.bf16.gmra.mxu0 %v3580
        %v3922 = vpop.f32.mrf.mxu0
        %v3923 = vadd.f32 0.0, %v3922
        %v3924 = vpop.f32.mrf.mxu0
        %v3925 = vadd.f32 0.0, %v3924
        %3926 = vmatmul.bf16.gmra.mxu0 %v3581
        %v3927 = vpop.f32.mrf.mxu0
        %v3928 = vadd.f32 0.0, %v3927
        %v3929 = vpop.f32.mrf.mxu0
        %v3930 = vadd.f32 0.0, %v3929
        %3931 = vmatmul.bf16.gmra.mxu0 %v3582
        %v3932 = vpop.f32.mrf.mxu0
        %v3933 = vadd.f32 0.0, %v3932
        %v3934 = vpop.f32.mrf.mxu0
        %v3935 = vadd.f32 0.0, %v3934
        %3936 = vmatmul.bf16.gmra.mxu0 %v3583
        %v3937 = vpop.f32.mrf.mxu0
        %v3938 = vadd.f32 0.0, %v3937
        %v3939 = vpop.f32.mrf.mxu0
        %v3940 = vadd.f32 0.0, %v3939
        %3941 = vmatmul.bf16.gmra.mxu0 %v3584
        %v3942 = vpop.f32.mrf.mxu0
        %v3943 = vadd.f32 0.0, %v3942
        %v3944 = vpop.f32.mrf.mxu0
        %v3945 = vadd.f32 0.0, %v3944
        %3946 = vmatmul.bf16.gmra.mxu0 %v3585
        %v3947 = vpop.f32.mrf.mxu0
        %v3948 = vadd.f32 0.0, %v3947
        %v3949 = vpop.f32.mrf.mxu0
        %v3950 = vadd.f32 0.0, %v3949
        %3951 = vmatmul.bf16.gmra.mxu0 %v3586
        %v3952 = vpop.f32.mrf.mxu0
        %v3953 = vadd.f32 0.0, %v3952
        %v3954 = vpop.f32.mrf.mxu0
        %v3955 = vadd.f32 0.0, %v3954
        %3956 = vmatmul.bf16.gmra.mxu0 %v3587
        %v3957 = vpop.f32.mrf.mxu0
        %v3958 = vadd.f32 0.0, %v3957
        %v3959 = vpop.f32.mrf.mxu0
        %v3960 = vadd.f32 0.0, %v3959
        %3961 = vmatmul.bf16.gmra.mxu0 %v3588
        %v3962 = vpop.f32.mrf.mxu0
        %v3963 = vadd.f32 0.0, %v3962
        %v3964 = vpop.f32.mrf.mxu0
        %v3965 = vadd.f32 0.0, %v3964
        %3966 = vmatmul.bf16.gmra.mxu0 %v3589
        %v3967 = vpop.f32.mrf.mxu0
        %v3968 = vadd.f32 0.0, %v3967
        %v3969 = vpop.f32.mrf.mxu0
        %v3970 = vadd.f32 0.0, %v3969
        %3971 = vmatmul.bf16.gmra.mxu0 %v3590
        %v3972 = vpop.f32.mrf.mxu0
        %v3973 = vadd.f32 0.0, %v3972
        %v3974 = vpop.f32.mrf.mxu0
        %v3975 = vadd.f32 0.0, %v3974
        %3976 = vmatmul.bf16.gmra.mxu0 %v3591
        %v3977 = vpop.f32.mrf.mxu0
        %v3978 = vadd.f32 0.0, %v3977
        %v3979 = vpop.f32.mrf.mxu0
        %v3980 = vadd.f32 0.0, %v3979
        %3981 = vmatmul.bf16.gmra.mxu0 %v3592
        %v3982 = vpop.f32.mrf.mxu0
        %v3983 = vadd.f32 0.0, %v3982
        %v3984 = vpop.f32.mrf.mxu0
        %v3985 = vadd.f32 0.0, %v3984
        %3986 = vmatmul.bf16.gmra.mxu0 %v3593
        %v3987 = vpop.f32.mrf.mxu0
        %v3988 = vadd.f32 0.0, %v3987
        %v3989 = vpop.f32.mrf.mxu0
        %v3990 = vadd.f32 0.0, %v3989
        %3991 = vmatmul.bf16.gmra.mxu0 %v3594
        %v3992 = vpop.f32.mrf.mxu0
        %v3993 = vadd.f32 0.0, %v3992
        %v3994 = vpop.f32.mrf.mxu0
        %v3995 = vadd.f32 0.0, %v3994
        %3996 = vdwg.mxu0
        %3997 = vmatpush.bf16.msra.mxu0 %v3861
        %3998 = vmatpush.bf16.msra.mxu0 %v3860
        %3999 = vmatpush.bf16.msra.mxu0 %v3859
        %4000 = vmatpush.bf16.msra.mxu0 %v3858
        %4001 = vmatpush.bf16.msra.mxu0 %v3857
        %4002 = vmatpush.bf16.msra.mxu0 %v3856
        %4003 = vmatpush.bf16.msra.mxu0 %v3855
        %4004 = vmatpush.bf16.msra.mxu0 %v3854
        %4005 = vmatmul.bf16.gmra.mxu0 %v3705
        %v4006 = vpop.f32.mrf.mxu0
        %v4007 = vadd.f32 %v3888, %v4006
        %v4008 = vpop.f32.mrf.mxu0
        %v4009 = vadd.f32 %v3890, %v4008
        %4010 = vmatmul.bf16.gmra.mxu0 %v3706
        %v4011 = vpop.f32.mrf.mxu0
        %v4012 = vadd.f32 %v3893, %v4011
        %v4013 = vpop.f32.mrf.mxu0
        %v4014 = vadd.f32 %v3895, %v4013
        %4015 = vmatmul.bf16.gmra.mxu0 %v3707
        %v4016 = vpop.f32.mrf.mxu0
        %v4017 = vadd.f32 %v3898, %v4016
        %v4018 = vpop.f32.mrf.mxu0
        %v4019 = vadd.f32 %v3900, %v4018
        %4020 = vmatmul.bf16.gmra.mxu0 %v3708
        %v4021 = vpop.f32.mrf.mxu0
        %v4022 = vadd.f32 %v3903, %v4021
        %v4023 = vpop.f32.mrf.mxu0
        %v4024 = vadd.f32 %v3905, %v4023
        %4025 = vmatmul.bf16.gmra.mxu0 %v3709
        %v4026 = vpop.f32.mrf.mxu0
        %v4027 = vadd.f32 %v3908, %v4026
        %v4028 = vpop.f32.mrf.mxu0
        %v4029 = vadd.f32 %v3910, %v4028
        %4030 = vmatmul.bf16.gmra.mxu0 %v3710
        %v4031 = vpop.f32.mrf.mxu0
        %v4032 = vadd.f32 %v3913, %v4031
        %v4033 = vpop.f32.mrf.mxu0
        %v4034 = vadd.f32 %v3915, %v4033
        %4035 = vmatmul.bf16.gmra.mxu0 %v3711
        %v4036 = vpop.f32.mrf.mxu0
        %v4037 = vadd.f32 %v3918, %v4036
        %v4038 = vpop.f32.mrf.mxu0
        %v4039 = vadd.f32 %v3920, %v4038
        %4040 = vmatmul.bf16.gmra.mxu0 %v3712
        %v4041 = vpop.f32.mrf.mxu0
        %v4042 = vadd.f32 %v3923, %v4041
        %v4043 = vpop.f32.mrf.mxu0
        %v4044 = vadd.f32 %v3925, %v4043
        %4045 = vmatmul.bf16.gmra.mxu0 %v3713
        %v4046 = vpop.f32.mrf.mxu0
        %v4047 = vadd.f32 %v3928, %v4046
        %v4048 = vpop.f32.mrf.mxu0
        %v4049 = vadd.f32 %v3930, %v4048
        %4050 = vmatmul.bf16.gmra.mxu0 %v3714
        %v4051 = vpop.f32.mrf.mxu0
        %v4052 = vadd.f32 %v3933, %v4051
        %v4053 = vpop.f32.mrf.mxu0
        %v4054 = vadd.f32 %v3935, %v4053
        %4055 = vmatmul.bf16.gmra.mxu0 %v3715
        %v4056 = vpop.f32.mrf.mxu0
        %v4057 = vadd.f32 %v3938, %v4056
        %v4058 = vpop.f32.mrf.mxu0
        %v4059 = vadd.f32 %v3940, %v4058
        %4060 = vmatmul.bf16.gmra.mxu0 %v3716
        %v4061 = vpop.f32.mrf.mxu0
        %v4062 = vadd.f32 %v3943, %v4061
        %v4063 = vpop.f32.mrf.mxu0
        %v4064 = vadd.f32 %v3945, %v4063
        %4065 = vmatmul.bf16.gmra.mxu0 %v3717
        %v4066 = vpop.f32.mrf.mxu0
        %v4067 = vadd.f32 %v3948, %v4066
        %v4068 = vpop.f32.mrf.mxu0
        %v4069 = vadd.f32 %v3950, %v4068
        %4070 = vmatmul.bf16.gmra.mxu0 %v3718
        %v4071 = vpop.f32.mrf.mxu0
        %v4072 = vadd.f32 %v3953, %v4071
        %v4073 = vpop.f32.mrf.mxu0
        %v4074 = vadd.f32 %v3955, %v4073
        %4075 = vmatmul.bf16.gmra.mxu0 %v3719
        %v4076 = vpop.f32.mrf.mxu0
        %v4077 = vadd.f32 %v3958, %v4076
        %v4078 = vpop.f32.mrf.mxu0
        %v4079 = vadd.f32 %v3960, %v4078
        %4080 = vmatmul.bf16.gmra.mxu0 %v3720
        %v4081 = vpop.f32.mrf.mxu0
        %v4082 = vadd.f32 %v3963, %v4081
        %v4083 = vpop.f32.mrf.mxu0
        %v4084 = vadd.f32 %v3965, %v4083
        %4085 = vmatmul.bf16.gmra.mxu0 %v3721
        %v4086 = vpop.f32.mrf.mxu0
        %v4087 = vadd.f32 %v3968, %v4086
        %v4088 = vpop.f32.mrf.mxu0
        %v4089 = vadd.f32 %v3970, %v4088
        %4090 = vmatmul.bf16.gmra.mxu0 %v3722
        %v4091 = vpop.f32.mrf.mxu0
        %v4092 = vadd.f32 %v3973, %v4091
        %v4093 = vpop.f32.mrf.mxu0
        %v4094 = vadd.f32 %v3975, %v4093
        %4095 = vmatmul.bf16.gmra.mxu0 %v3723
        %v4096 = vpop.f32.mrf.mxu0
        %v4097 = vadd.f32 %v3978, %v4096
        %v4098 = vpop.f32.mrf.mxu0
        %v4099 = vadd.f32 %v3980, %v4098
        %4100 = vmatmul.bf16.gmra.mxu0 %v3724
        %v4101 = vpop.f32.mrf.mxu0
        %v4102 = vadd.f32 %v3983, %v4101
        %v4103 = vpop.f32.mrf.mxu0
        %v4104 = vadd.f32 %v3985, %v4103
        %4105 = vmatmul.bf16.gmra.mxu0 %v3725
        %v4106 = vpop.f32.mrf.mxu0
        %v4107 = vadd.f32 %v3988, %v4106
        %v4108 = vpop.f32.mrf.mxu0
        %v4109 = vadd.f32 %v3990, %v4108
        %4110 = vmatmul.bf16.gmra.mxu0 %v3726
        %v4111 = vpop.f32.mrf.mxu0
        %v4112 = vadd.f32 %v3993, %v4111
        %v4113 = vpop.f32.mrf.mxu0
        %v4114 = vadd.f32 %v3995, %v4113
        %4115 = vdwg.mxu0
        %v4116 = vadd.f32 %v3175, %v4007
        %v4117 = vadd.f32 %v3176, %v4009
        %v4118 = vadd.f32 %v3177, %v4012
        %v4119 = vadd.f32 %v3178, %v4014
        %v4120 = vadd.f32 %v3179, %v4017
        %v4121 = vadd.f32 %v3180, %v4019
        %v4122 = vadd.f32 %v3181, %v4022
        %v4123 = vadd.f32 %v3182, %v4024
        %v4124 = vadd.f32 %v3183, %v4027
        %v4125 = vadd.f32 %v3184, %v4029
        %v4126 = vadd.f32 %v3185, %v4032
        %v4127 = vadd.f32 %v3186, %v4034
        %v4128 = vadd.f32 %v3187, %v4037
        %v4129 = vadd.f32 %v3188, %v4039
        %v4130 = vadd.f32 %v3189, %v4042
        %v4131 = vadd.f32 %v3190, %v4044
        %v4132 = vadd.f32 %v3191, %v4047
        %v4133 = vadd.f32 %v3192, %v4049
        %v4134 = vadd.f32 %v3193, %v4052
        %v4135 = vadd.f32 %v3194, %v4054
        %v4136 = vadd.f32 %v3195, %v4057
        %v4137 = vadd.f32 %v3196, %v4059
        %v4138 = vadd.f32 %v3197, %v4062
        %v4139 = vadd.f32 %v3198, %v4064
        %v4140 = vadd.f32 %v3199, %v4067
        %v4141 = vadd.f32 %v3200, %v4069
        %v4142 = vadd.f32 %v3201, %v4072
        %v4143 = vadd.f32 %v3202, %v4074
        %v4144 = vadd.f32 %v3203, %v4077
        %v4145 = vadd.f32 %v3204, %v4079
        %v4146 = vadd.f32 %v3205, %v4082
        %v4147 = vadd.f32 %v3206, %v4084
        %v4148 = vadd.f32 %v3207, %v4087
        %v4149 = vadd.f32 %v3208, %v4089
        %v4150 = vadd.f32 %v3209, %v4092
        %v4151 = vadd.f32 %v3210, %v4094
        %v4152 = vadd.f32 %v3211, %v4097
        %v4153 = vadd.f32 %v3212, %v4099
        %v4154 = vadd.f32 %v3213, %v4102
        %v4155 = vadd.f32 %v3214, %v4104
        %v4156 = vadd.f32 %v3215, %v4107
        %v4157 = vadd.f32 %v3216, %v4109
        %v4158 = vadd.f32 %v3217, %v4112
        %v4159 = vadd.f32 %v3218, %v4114
        %v4160 = vld [vmem:[%s4] sm:$0x1]
        %v4162 = vperm.slane %v4160, 0
        %v4164 = vadd.f32 %v4116, %v4162
        %v4165 = vadd.f32 %v4117, %v4162
        %v4166 = vadd.f32 %v4118, %v4162
        %v4167 = vadd.f32 %v4119, %v4162
        %v4168 = vadd.f32 %v4120, %v4162
        %v4169 = vadd.f32 %v4121, %v4162
        %v4170 = vadd.f32 %v4122, %v4162
        %v4171 = vadd.f32 %v4123, %v4162
        %v4172 = vadd.f32 %v4124, %v4162
        %v4173 = vadd.f32 %v4125, %v4162
        %v4174 = vadd.f32 %v4126, %v4162
        %v4175 = vadd.f32 %v4127, %v4162
        %v4176 = vadd.f32 %v4128, %v4162
        %v4177 = vadd.f32 %v4129, %v4162
        %v4178 = vadd.f32 %v4130, %v4162
        %v4179 = vadd.f32 %v4131, %v4162
        %v4180 = vadd.f32 %v4132, %v4162
        %v4181 = vadd.f32 %v4133, %v4162
        %v4182 = vadd.f32 %v4134, %v4162
        %v4183 = vadd.f32 %v4135, %v4162
        %v4184 = vadd.f32 %v4136, %v4162
        %v4185 = vadd.f32 %v4137, %v4162
        %v4186 = vadd.f32 %v4138, %v4162
        %v4187 = vadd.f32 %v4139, %v4162
        %v4188 = vadd.f32 %v4140, %v4162
        %v4189 = vadd.f32 %v4141, %v4162
        %v4190 = vadd.f32 %v4142, %v4162
        %v4191 = vadd.f32 %v4143, %v4162
        %v4192 = vadd.f32 %v4144, %v4162
        %v4193 = vadd.f32 %v4145, %v4162
        %v4194 = vadd.f32 %v4146, %v4162
        %v4195 = vadd.f32 %v4147, %v4162
        %v4196 = vadd.f32 %v4148, %v4162
        %v4197 = vadd.f32 %v4149, %v4162
        %v4198 = vadd.f32 %v4150, %v4162
        %v4199 = vadd.f32 %v4151, %v4162
        %v4200 = vadd.f32 %v4152, %v4162
        %v4201 = vadd.f32 %v4153, %v4162
        %v4202 = vadd.f32 %v4154, %v4162
        %v4203 = vadd.f32 %v4155, %v4162
        %v4204 = vadd.f32 %v4156, %v4162
        %v4205 = vadd.f32 %v4157, %v4162
        %v4206 = vadd.f32 %v4158, %v4162
        %v4207 = vadd.f32 %v4159, %v4162
        %v4208 = vld [vmem:[%s326] sm:$0xff]
        %v4209 = vld [vmem:[%s326 + $0x8] sm:$0xff]
        %v4210 = vld [vmem:[%s326 + $0x10] sm:$0xff]
        %v4211 = vld [vmem:[%s326 + $0x18] sm:$0xff]
        %v4212 = vld [vmem:[%s326 + $0x20] sm:$0xff]
        %v4213 = vld [vmem:[%s326 + $0x28] sm:$0xff]
        %v4214 = vld [vmem:[%s326 + $0x30] sm:$0xff]
        %v4215 = vld [vmem:[%s326 + $0x38] sm:$0xff]
        %v4216 = vld [vmem:[%s326 + $0x40] sm:$0xff]
        %v4217 = vld [vmem:[%s326 + $0x48] sm:$0xff]
        %v4218 = vld [vmem:[%s326 + $0x50] sm:$0xff]
        %v4219 = vld [vmem:[%s326 + $0x58] sm:$0xff]
        %v4220 = vld [vmem:[%s326 + $0x60] sm:$0xff]
        %v4221 = vld [vmem:[%s326 + $0x68] sm:$0xff]
        %v4222 = vld [vmem:[%s326 + $0x70] sm:$0xff]
        %v4223 = vld [vmem:[%s326 + $0x78] sm:$0xff]
        %v4224 = vld [vmem:[%s326 + $0x80] sm:$0xff]
        %v4225 = vld [vmem:[%s326 + $0x88] sm:$0xff]
        %v4226 = vld [vmem:[%s326 + $0x90] sm:$0xff]
        %v4227 = vld [vmem:[%s326 + $0x98] sm:$0xff]
        %v4228 = vld [vmem:[%s326 + $0xa0] sm:$0xff]
        %v4229 = vld [vmem:[%s326 + $0xa8] sm:$0xff]
        %v4230 = vld [vmem:[%s326 + $0xb0] sm:$0xff]
        %v4231 = vld [vmem:[%s326 + $0xb8] sm:$0xff]
        %v4232 = vld [vmem:[%s326 + $0xc0] sm:$0xff]
        %v4233 = vld [vmem:[%s326 + $0xc8] sm:$0xff]
        %v4234 = vld [vmem:[%s326 + $0xd0] sm:$0xff]
        %v4235 = vld [vmem:[%s326 + $0xd8] sm:$0xff]
        %v4236 = vld [vmem:[%s326 + $0xe0] sm:$0xff]
        %v4237 = vld [vmem:[%s326 + $0xe8] sm:$0xff]
        %v4238 = vld [vmem:[%s326 + $0xf0] sm:$0xff]
        %v4239 = vld [vmem:[%s326 + $0xf8] sm:$0xff]
        %v4240 = vld [vmem:[%s326 + $0x100] sm:$0xff]
        %v4241 = vld [vmem:[%s326 + $0x108] sm:$0xff]
        %v4242 = vld [vmem:[%s326 + $0x110] sm:$0xff]
        %v4243 = vld [vmem:[%s326 + $0x118] sm:$0xff]
        %v4244 = vld [vmem:[%s326 + $0x120] sm:$0xff]
        %v4245 = vld [vmem:[%s326 + $0x128] sm:$0xff]
        %v4246 = vld [vmem:[%s326 + $0x130] sm:$0xff]
        %v4247 = vld [vmem:[%s326 + $0x138] sm:$0xff]
        %v4248 = vld [vmem:[%s326 + $0x140] sm:$0xff]
        %v4249 = vld [vmem:[%s326 + $0x148] sm:$0xff]
        %v4250 = vld [vmem:[%s326 + $0x150] sm:$0xff]
        %v4251 = vld [vmem:[%s326 + $0x158] sm:$0xff]
        %v4252 = vadd.f32 %v4164, %v4208
        %v4253 = vadd.f32 %v4165, %v4209
        %v4254 = vadd.f32 %v4166, %v4210
        %v4255 = vadd.f32 %v4167, %v4211
        %v4256 = vadd.f32 %v4168, %v4212
        %v4257 = vadd.f32 %v4169, %v4213
        %v4258 = vadd.f32 %v4170, %v4214
        %v4259 = vadd.f32 %v4171, %v4215
        %v4260 = vadd.f32 %v4172, %v4216
        %v4261 = vadd.f32 %v4173, %v4217
        %v4262 = vadd.f32 %v4174, %v4218
        %v4263 = vadd.f32 %v4175, %v4219
        %v4264 = vadd.f32 %v4176, %v4220
        %v4265 = vadd.f32 %v4177, %v4221
        %v4266 = vadd.f32 %v4178, %v4222
        %v4267 = vadd.f32 %v4179, %v4223
        %v4268 = vadd.f32 %v4180, %v4224
        %v4269 = vadd.f32 %v4181, %v4225
        %v4270 = vadd.f32 %v4182, %v4226
        %v4271 = vadd.f32 %v4183, %v4227
        %v4272 = vadd.f32 %v4184, %v4228
        %v4273 = vadd.f32 %v4185, %v4229
        %v4274 = vadd.f32 %v4186, %v4230
        %v4275 = vadd.f32 %v4187, %v4231
        %v4276 = vadd.f32 %v4188, %v4232
        %v4277 = vadd.f32 %v4189, %v4233
        %v4278 = vadd.f32 %v4190, %v4234
        %v4279 = vadd.f32 %v4191, %v4235
        %v4280 = vadd.f32 %v4192, %v4236
        %v4281 = vadd.f32 %v4193, %v4237
        %v4282 = vadd.f32 %v4194, %v4238
        %v4283 = vadd.f32 %v4195, %v4239
        %v4284 = vadd.f32 %v4196, %v4240
        %v4285 = vadd.f32 %v4197, %v4241
        %v4286 = vadd.f32 %v4198, %v4242
        %v4287 = vadd.f32 %v4199, %v4243
        %v4288 = vadd.f32 %v4200, %v4244
        %v4289 = vadd.f32 %v4201, %v4245
        %v4290 = vadd.f32 %v4202, %v4246
        %v4291 = vadd.f32 %v4203, %v4247
        %v4292 = vadd.f32 %v4204, %v4248
        %v4293 = vadd.f32 %v4205, %v4249
        %v4294 = vadd.f32 %v4206, %v4250
        %v4295 = vadd.f32 %v4207, %v4251
        %4296 = vst [vmem:[%s360] sm:$0xff] %v4252
        %4297 = vst [vmem:[%s360 + $0x8] sm:$0xff] %v4253
        %4298 = vst [vmem:[%s360 + $0x10] sm:$0xff] %v4254
        %4299 = vst [vmem:[%s360 + $0x18] sm:$0xff] %v4255
        %4300 = vst [vmem:[%s360 + $0x20] sm:$0xff] %v4256
        %4301 = vst [vmem:[%s360 + $0x28] sm:$0xff] %v4257
        %4302 = vst [vmem:[%s360 + $0x30] sm:$0xff] %v4258
        %4303 = vst [vmem:[%s360 + $0x38] sm:$0xff] %v4259
        %4304 = vst [vmem:[%s360 + $0x40] sm:$0xff] %v4260
        %4305 = vst [vmem:[%s360 + $0x48] sm:$0xff] %v4261
        %4306 = vst [vmem:[%s360 + $0x50] sm:$0xff] %v4262
        %4307 = vst [vmem:[%s360 + $0x58] sm:$0xff] %v4263
        %4308 = vst [vmem:[%s360 + $0x60] sm:$0xff] %v4264
        %4309 = vst [vmem:[%s360 + $0x68] sm:$0xff] %v4265
        %4310 = vst [vmem:[%s360 + $0x70] sm:$0xff] %v4266
        %4311 = vst [vmem:[%s360 + $0x78] sm:$0xff] %v4267
        %4312 = vst [vmem:[%s360 + $0x80] sm:$0xff] %v4268
        %4313 = vst [vmem:[%s360 + $0x88] sm:$0xff] %v4269
        %4314 = vst [vmem:[%s360 + $0x90] sm:$0xff] %v4270
        %4315 = vst [vmem:[%s360 + $0x98] sm:$0xff] %v4271
        %4316 = vst [vmem:[%s360 + $0xa0] sm:$0xff] %v4272
        %4317 = vst [vmem:[%s360 + $0xa8] sm:$0xff] %v4273
        %4318 = vst [vmem:[%s360 + $0xb0] sm:$0xff] %v4274
        %4319 = vst [vmem:[%s360 + $0xb8] sm:$0xff] %v4275
        %4320 = vst [vmem:[%s360 + $0xc0] sm:$0xff] %v4276
        %4321 = vst [vmem:[%s360 + $0xc8] sm:$0xff] %v4277
        %4322 = vst [vmem:[%s360 + $0xd0] sm:$0xff] %v4278
        %4323 = vst [vmem:[%s360 + $0xd8] sm:$0xff] %v4279
        %4324 = vst [vmem:[%s360 + $0xe0] sm:$0xff] %v4280
        %4325 = vst [vmem:[%s360 + $0xe8] sm:$0xff] %v4281
        %4326 = vst [vmem:[%s360 + $0xf0] sm:$0xff] %v4282
        %4327 = vst [vmem:[%s360 + $0xf8] sm:$0xff] %v4283
        %4328 = vst [vmem:[%s360 + $0x100] sm:$0xff] %v4284
        %4329 = vst [vmem:[%s360 + $0x108] sm:$0xff] %v4285
        %4330 = vst [vmem:[%s360 + $0x110] sm:$0xff] %v4286
        %4331 = vst [vmem:[%s360 + $0x118] sm:$0xff] %v4287
        %4332 = vst [vmem:[%s360 + $0x120] sm:$0xff] %v4288
        %4333 = vst [vmem:[%s360 + $0x128] sm:$0xff] %v4289
        %4334 = vst [vmem:[%s360 + $0x130] sm:$0xff] %v4290
        %4335 = vst [vmem:[%s360 + $0x138] sm:$0xff] %v4291
        %4336 = vst [vmem:[%s360 + $0x140] sm:$0xff] %v4292
        %4337 = vst [vmem:[%s360 + $0x148] sm:$0xff] %v4293
        %4338 = vst [vmem:[%s360 + $0x150] sm:$0xff] %v4294
        %4339 = vst [vmem:[%s360 + $0x158] sm:$0xff] %v4295
        %s4340 = sand.u32 %s169, 1
        %s4341 = scalar_lea.sflag [#allocation4], %s4340
        %s4342 = sand.u32 %s169, 1
        %s4343 = smul.addr %s4342, 352
        %s4344 = scalar_lea.vmem [#allocation11], %s4343
        // Predicated region
        $region65: #{tpu_custom_call.1} parent=43 // pred_check
          %p4345 = pneg %p179
        $region66: #{tpu_custom_call.1} parent=43 // pred_check_branch
          %4347 = sbr.rel (%p4345) target = $region68
        $region67: #{tpu_custom_call.1} parent=43 // pred_region
          %4349 = vsyncadd %s4341, 0
          %s4350 = smul.addr %s25, 44
          %s4351 = smul.addr %s4350, 8
          %s4352 = scalar_lea.hbm %s6, %s4351
          %s4353 = sshll.u32 %s4344, 4
          %s4354 = int_to_ptr.vmem [resolvable:$true] %s4353
          %s4355 = sshll.u32 %s4352, 4
          %s4356 = int_to_ptr.hbm [resolvable:$true] %s4355
          %4361 = dma.vmem_to_hbm [thread:$0]  %s4354, 5632, %s4356, %s4341, 128, 128, 8
        $region68: #{tpu_custom_call.1} parent=43 // pred_fallthru
          _
      $region44: #{tpu_custom_call.1} parent=5 // pred_fallthru
        _
      %p4362 = scmp.le.s32.totalorder 2, %s20
      // Predicated region
      $region69: #{tpu_custom_call.1} parent=5 // pred_check
        %p4363 = pneg %p4362
      $region70: #{tpu_custom_call.1} parent=5 // pred_check_branch
        %4365 = sbr.rel (%p4363) target = $region72
      $region71: #{tpu_custom_call.1} parent=5 // pred_region
        %s4366 = ssub.s32 %s20, 2
        // Predicated region
        $region73: #{tpu_custom_call.1} parent=71 // pred_check
          %p4367 = pneg %p185
        $region74: #{tpu_custom_call.1} parent=71 // pred_check_branch
          %4369 = sbr.rel (%p4367) target = $region76
        $region75: #{tpu_custom_call.1} parent=71 // pred_region
          %s4370 = sand.u32 %s170, 1
          %s4371 = scalar_lea.sflag [#allocation4], %s4370
          %s4372 = sand.u32 %s170, 1
          %s4373 = smul.addr %s4372, 352
          %s4374 = scalar_lea.vmem [#allocation11], %s4373
          %4376 = dma.done %s4371, 5632
        $region76: #{tpu_custom_call.1} parent=71 // pred_fallthru
          _
      $region72: #{tpu_custom_call.1} parent=5 // pred_fallthru
        _
    $region6: #{tpu_custom_call.1} parent=1 // loop_footer
      %s24 = sadd.s32 1, %s20
    $region7: #{tpu_custom_call.1} parent=1 // loop_footer_branch
      %19 = sbr.rel target = $region3
    $region8: #{tpu_custom_call.1} parent=1 // loop_exit
      _
    %4377 = vsyncpa [#allocation3], 1
    %s4378 = scalar_lea.sflag [#allocation3], 1
    %4379 = vsyncpa %s4378, 1
    %4380 = vsyncpa [#allocation6], 1
    %4381 = vsyncpa [#allocation9], 1
    %4382 = vsyncpa [#allocation4], 1
    %s4383 = scalar_lea.sflag [#allocation4], 1
    %4384 = vsyncpa %s4383, 1

</llo_original>
